<compile_context>
chip_gen: v7x
topology: tpu7x:2x2x1
jax: 0.10.0
libtpu: 0.0.40
codegen_flags: <defaults>
</compile_context>

<pallas_src>
import functools
import math

import jax
import jax.numpy as jnp
from jax.experimental import pallas as pl
from jax.experimental.pallas import tpu as pltpu

LN_EPS = 1e-12  # matches the repo's custom LayerNorm default (not nn.LayerNorm's 1e-5)


# ----------------------------------------------------------------------------
# Fused encoder-layer kernel (attention + FFN, one grid step = one batch elem)
# ----------------------------------------------------------------------------
def _encoder_layer_kernel(x_ref, bias_ref, wqkv_ref, bqkv_ref, wo_ref, bo_ref,
                          g1_ref, be1_ref, w1_ref, b1_ref, w2_ref, b2_ref,
                          g2_ref, be2_ref, o_ref, *, n_head, eps):
    """Block shapes (one grid step = one batch element):
      x:    (1, S, D)  bf16          bias: (1, 1, S) f32 (0 / -1e4 additive mask)
      wqkv: (D, 3D)    bf16          bqkv: (1, 3D)   f32 (scale folded into Q part)
      wo:   (D, D)     bf16          bo/g1/be1/b2/g2/be2: (1, D) f32
      w1:   (D, Hf)    bf16          b1:   (1, Hf)   f32
      w2:   (Hf, D)    bf16          out:  (1, S, D) out dtype
    """
    xb = x_ref[0].astype(jnp.bfloat16)                    # (S, D) bf16 (MXU operand)
    x = x_ref[0].astype(jnp.float32)                      # f32 copy for residual / LN
    S, D = x.shape
    H = n_head
    dh = D // H

    # ---- Multi-head self-attention --------------------------------------
    # Single lane-dense projection (S, D) @ (D, 3D); 1/sqrt(dh) pre-folded
    # into the Q columns of wqkv / bqkv at init time.
    qkv = jnp.dot(xb, wqkv_ref[...], preferred_element_type=jnp.float32)
    qkv = qkv + bqkv_ref[...]                             # (S, 3D) f32

    bias = bias_ref[0]                                    # (1, S) additive key-pad mask

    # TODO(synk): for long sequences switch to an online (flash-style) softmax
    # with an Sk grid axis instead of materializing (Sq, Sk) scores per head.
    ctx_parts = []
    for h in range(H):                                    # static loop, H small
        q_h = qkv[:, h * dh:(h + 1) * dh].astype(jnp.bfloat16)            # (S, dh)
        k_h = qkv[:, D + h * dh:D + (h + 1) * dh].astype(jnp.bfloat16)    # (S, dh)
        v_h = qkv[:, 2 * D + h * dh:2 * D + (h + 1) * dh].astype(jnp.bfloat16)
        # scores: contract dh directly (no explicit k.T); f32 accumulation.
        s = jax.lax.dot_general(q_h, k_h, (((1,), (1,)), ((), ())),
                                preferred_element_type=jnp.float32)       # (Sq, Sk)
        s = s + bias                                      # padding mask (single vadd)
        # softmax (f32), reciprocal on the EUP.
        s = s - jnp.max(s, axis=-1, keepdims=True)
        p = jnp.exp(s)
        p = p * pl.reciprocal(jnp.sum(p, axis=-1, keepdims=True), approx=True)
        ctx_parts.append(jnp.dot(p.astype(jnp.bfloat16), v_h,
                                 preferred_element_type=jnp.float32))     # (S, dh)
    ctx = jnp.concatenate(ctx_parts, axis=-1)             # (S, D) heads along lanes

    # Output projection: one K=D matmul (no per-head partial sums).
    y = jnp.dot(ctx.astype(jnp.bfloat16), wo_ref[...],
                preferred_element_type=jnp.float32) + bo_ref[...]
    y = y + x                                             # residual 1

    # LayerNorm 1 (unbiased variance), f32 elementwise.
    mean = jnp.mean(y, axis=-1, keepdims=True)
    var = jnp.mean((y - mean) ** 2, axis=-1, keepdims=True)
    y1 = g1_ref[...] * (y - mean) * jax.lax.rsqrt(var + eps) + be1_ref[...]

    # ---- Position-wise FFN (reuses y1 while it is still in VMEM) --------
    hdn = jnp.dot(y1.astype(jnp.bfloat16), w1_ref[...],
                  preferred_element_type=jnp.float32) + b1_ref[...]
    hdn = jnp.maximum(hdn, 0.0)                           # ReLU (f32)
    y2 = jnp.dot(hdn.astype(jnp.bfloat16), w2_ref[...],
                 preferred_element_type=jnp.float32) + b2_ref[...]
    y2 = y2 + y1                                          # residual 2

    mean2 = jnp.mean(y2, axis=-1, keepdims=True)
    var2 = jnp.mean((y2 - mean2) ** 2, axis=-1, keepdims=True)
    out = g2_ref[...] * (y2 - mean2) * jax.lax.rsqrt(var2 + eps) + be2_ref[...]
    o_ref[0] = out.astype(o_ref.dtype)                    # bf16 between layers, f32 last


# ----------------------------------------------------------------------------
# Wrapper (pallas_call plumbing)
# ----------------------------------------------------------------------------
def encoder_layer(x, bias, lp, *, n_head, out_dtype, eps=LN_EPS):
    """x: (B, S, D) bf16; bias: (B, 1, S) f32 additive mask; returns (B, S, D)."""
    B, S, D = x.shape
    Hf = lp['w1'].shape[1]
    kern = functools.partial(_encoder_layer_kernel, n_head=n_head, eps=eps)
    # TODO(synk): at production sizes mark the constant-index weight specs with
    # pipeline_mode=pl.Buffered(1) / tile Hf so whole panels aren't double-buffered.
    return pl.pallas_call(
        kern,
        out_shape=jax.ShapeDtypeStruct((B, S, D), out_dtype),
        grid=(B,),
        in_specs=[
            pl.BlockSpec((1, S, D), lambda b: (b, 0, 0)),      # x (bf16)
            pl.BlockSpec((1, 1, S), lambda b: (b, 0, 0)),      # additive mask bias (f32)
            pl.BlockSpec((D, 3 * D), lambda b: (0, 0)),        # wqkv (bf16, scale folded)
            pl.BlockSpec((1, 3 * D), lambda b: (0, 0)),        # bqkv (f32)
            pl.BlockSpec((D, D), lambda b: (0, 0)),            # wo (bf16)
            pl.BlockSpec((1, D), lambda b: (0, 0)),            # bo
            pl.BlockSpec((1, D), lambda b: (0, 0)),            # ln1 gamma
            pl.BlockSpec((1, D), lambda b: (0, 0)),            # ln1 beta
            pl.BlockSpec((D, Hf), lambda b: (0, 0)),           # w1 (bf16)
            pl.BlockSpec((1, Hf), lambda b: (0, 0)),           # b1
            pl.BlockSpec((Hf, D), lambda b: (0, 0)),           # w2 (bf16)
            pl.BlockSpec((1, D), lambda b: (0, 0)),            # b2
            pl.BlockSpec((1, D), lambda b: (0, 0)),            # ln2 gamma
            pl.BlockSpec((1, D), lambda b: (0, 0)),            # ln2 beta
        ],
        out_specs=pl.BlockSpec((1, S, D), lambda b: (b, 0, 0)),
        compiler_params=pltpu.CompilerParams(dimension_semantics=("parallel",)),
    )(x, bias, lp['wqkv'], lp['bqkv'], lp['wo'], lp['bo'], lp['ln1_g'], lp['ln1_b'],
      lp['w1'], lp['b1'], lp['w2'], lp['b2'], lp['ln2_g'], lp['ln2_b'])


# ----------------------------------------------------------------------------
# Parameters / embedding / forward (plain JAX glue)
# ----------------------------------------------------------------------------
def positional_encoding(max_len, d_model):
    pos = jnp.arange(max_len, dtype=jnp.float32)[:, None]
    i2 = jnp.arange(0, d_model, 2, dtype=jnp.float32)
    angle = pos / (10000.0 ** (i2 / d_model))
    pe = jnp.zeros((max_len, d_model), jnp.float32)
    pe = pe.at[:, 0::2].set(jnp.sin(angle))
    pe = pe.at[:, 1::2].set(jnp.cos(angle))
    return pe


def init_params(key, *, d_model, n_head, ffn_hidden, n_layers, vocab_size, max_len):
    dh = d_model // n_head
    scale = 1.0 / math.sqrt(dh)
    keys = iter(jax.random.split(key, 2 + n_layers * 8))

    def dense(din, dout):
        w = jax.random.normal(next(keys), (din, dout), jnp.float32) * 0.02
        return w, jnp.zeros((dout,), jnp.float32)

    layers = []
    for _ in range(n_layers):
        wq, bq = dense(d_model, d_model)
        wk, bk = dense(d_model, d_model)
        wv, bv = dense(d_model, d_model)
        wo, bo = dense(d_model, d_model)
        w1, b1 = dense(d_model, ffn_hidden)
        w2, b2 = dense(ffn_hidden, d_model)
        layers.append({
            # single lane-dense (D, 3D) QKV panel, head h = output cols h*dh:(h+1)*dh
            # of each D-wide slice; 1/sqrt(dh) folded into the Q slice.
            'wqkv': jnp.concatenate([wq * scale, wk, wv], axis=1).astype(jnp.bfloat16),
            'bqkv': jnp.concatenate([bq * scale, bk, bv]).reshape(1, 3 * d_model),
            'wo': wo.astype(jnp.bfloat16),                     # (D, D)
            'bo': bo.reshape(1, d_model),
            'ln1_g': jnp.ones((1, d_model), jnp.float32),
            'ln1_b': jnp.zeros((1, d_model), jnp.float32),
            'w1': w1.astype(jnp.bfloat16), 'b1': b1.reshape(1, ffn_hidden),
            'w2': w2.astype(jnp.bfloat16), 'b2': b2.reshape(1, d_model),
            'ln2_g': jnp.ones((1, d_model), jnp.float32),
            'ln2_b': jnp.zeros((1, d_model), jnp.float32),
        })

    emb = jax.random.normal(next(keys), (vocab_size, d_model), jnp.float32) * 0.02
    emb = emb.at[1].set(0.0)   # nn.Embedding(padding_idx=1)
    return {'emb': emb, 'pe': positional_encoding(max_len, d_model), 'layers': layers}


def encoder_forward(params, tokens, src_mask, *, n_head):
    """tokens: (B, S) int32; src_mask: (B, 1, 1, S) bool/int key-padding mask."""
    B, S = tokens.shape
    D = params['emb'].shape[1]
    # TODO(synk): embedding gather + positional add + dropout(identity) stay in XLA
    # (a Pallas gather kernel is not worthwhile at this size).
    x = jnp.take(params['emb'], tokens, axis=0) + params['pe'][:S][None, :, :]
    x = x.astype(jnp.bfloat16)   # bf16 inter-layer activations (halved DMA)

    # Padding mask as a compact f32 additive bias (0 / -1e4), built once.
    key_mask = src_mask.reshape(B, S)
    bias = jnp.where(key_mask != 0, 0.0, -10000.0).astype(jnp.float32).reshape(B, 1, S)

    n_layers = len(params['layers'])
    for li, lp in enumerate(params['layers']):
        out_dtype = jnp.float32 if li == n_layers - 1 else jnp.bfloat16
        x = encoder_layer(x, bias, lp, n_head=n_head, out_dtype=out_dtype)
    return x


# ----------------------------------------------------------------------------
# Main
# ----------------------------------------------------------------------------
if __name__ == "__main__":
    B, S = 2, 16
    D_MODEL = 128      # lane-dense (multiple of 128)
    N_HEAD = 4         # dh = 32
    FFN_HIDDEN = 256
    N_LAYERS = 2
    ENC_VOC = 64
    MAX_LEN = 32
    PAD_IDX = 1        # matches TokenEmbedding(padding_idx=1)
    # drop_prob unused: dropout is identity (eval/inference semantics).

    key = jax.random.PRNGKey(0)
    k_param, k_tok = jax.random.split(key)

    params = init_params(k_param, d_model=D_MODEL, n_head=N_HEAD,
                         ffn_hidden=FFN_HIDDEN, n_layers=N_LAYERS,
                         vocab_size=ENC_VOC, max_len=MAX_LEN)

    tokens = jax.random.randint(k_tok, (B, S), 2, ENC_VOC, dtype=jnp.int32)
    tokens = tokens.at[0, -3:].set(PAD_IDX)   # exercise the pad mask
    src_mask = (tokens != PAD_IDX)[:, None, None, :]   # (B, 1, 1, S), like make_src_mask

    fwd = jax.jit(functools.partial(encoder_forward, n_head=N_HEAD))
    out = fwd(params, tokens, src_mask)
    jax.block_until_ready(out)

    assert out.shape == (B, S, D_MODEL)
    assert bool(jnp.all(jnp.isfinite(out)))
    print("KERNEL_OK")
</pallas_src>

<mosaic_0001>
module attributes {stable_mosaic.version = 11 : i64} {
  func.func @_encoder_layer_kernel(%arg0: i32, %arg1: memref<1x16x128xbf16, #tpu.memory_space<vmem>>, %arg2: memref<1x1x16xf32, #tpu.memory_space<vmem>>, %arg3: memref<128x384xbf16, #tpu.memory_space<vmem>>, %arg4: memref<1x384xf32, #tpu.memory_space<vmem>>, %arg5: memref<128x128xbf16, #tpu.memory_space<vmem>>, %arg6: memref<1x128xf32, #tpu.memory_space<vmem>>, %arg7: memref<1x128xf32, #tpu.memory_space<vmem>>, %arg8: memref<1x128xf32, #tpu.memory_space<vmem>>, %arg9: memref<128x256xbf16, #tpu.memory_space<vmem>>, %arg10: memref<1x256xf32, #tpu.memory_space<vmem>>, %arg11: memref<256x128xbf16, #tpu.memory_space<vmem>>, %arg12: memref<1x128xf32, #tpu.memory_space<vmem>>, %arg13: memref<1x128xf32, #tpu.memory_space<vmem>>, %arg14: memref<1x128xf32, #tpu.memory_space<vmem>>, %arg15: memref<1x16x128xbf16, #tpu.memory_space<vmem>>) attributes {dimension_semantics = [#tpu.dimension_semantics<parallel>], iteration_bounds = array<i64: 2>, scalar_prefetch = 0 : i64, scratch_operands = 0 : i64, tpu.core_type = #tpu.core_type<tc>, window_params = [{transform_indices = @transform_0, window_bounds = array<i64: 1, 16, 128>}, {transform_indices = @transform_1, window_bounds = array<i64: 1, 1, 16>}, {pipeline_mode = #tpu.pipeline_mode<synchronous>, transform_indices = @transform_2, window_bounds = array<i64: 128, 384>}, {pipeline_mode = #tpu.pipeline_mode<synchronous>, transform_indices = @transform_3, window_bounds = array<i64: 1, 384>}, {pipeline_mode = #tpu.pipeline_mode<synchronous>, transform_indices = @transform_4, window_bounds = array<i64: 128, 128>}, {pipeline_mode = #tpu.pipeline_mode<synchronous>, transform_indices = @transform_5, window_bounds = array<i64: 1, 128>}, {pipeline_mode = #tpu.pipeline_mode<synchronous>, transform_indices = @transform_6, window_bounds = array<i64: 1, 128>}, {pipeline_mode = #tpu.pipeline_mode<synchronous>, transform_indices = @transform_7, window_bounds = array<i64: 1, 128>}, {pipeline_mode = #tpu.pipeline_mode<synchronous>, transform_indices = @transform_8, window_bounds = array<i64: 128, 256>}, {pipeline_mode = #tpu.pipeline_mode<synchronous>, transform_indices = @transform_9, window_bounds = array<i64: 1, 256>}, {pipeline_mode = #tpu.pipeline_mode<synchronous>, transform_indices = @transform_10, window_bounds = array<i64: 256, 128>}, {pipeline_mode = #tpu.pipeline_mode<synchronous>, transform_indices = @transform_11, window_bounds = array<i64: 1, 128>}, {pipeline_mode = #tpu.pipeline_mode<synchronous>, transform_indices = @transform_12, window_bounds = array<i64: 1, 128>}, {pipeline_mode = #tpu.pipeline_mode<synchronous>, transform_indices = @transform_13, window_bounds = array<i64: 1, 128>}, {transform_indices = @transform_14, window_bounds = array<i64: 1, 16, 128>}]} {
    %c0 = arith.constant 0 : index
    %c0_0 = arith.constant 0 : index
    %c0_1 = arith.constant 0 : index
    %0 = vector.load %arg1[%c0, %c0_0, %c0_1] : memref<1x16x128xbf16, #tpu.memory_space<vmem>>, vector<1x16x128xbf16>
    %1 = vector.shape_cast %0 : vector<1x16x128xbf16> to vector<16x128xbf16>
    %c0_2 = arith.constant 0 : index
    %c0_3 = arith.constant 0 : index
    %c0_4 = arith.constant 0 : index
    %2 = vector.load %arg1[%c0_2, %c0_3, %c0_4] : memref<1x16x128xbf16, #tpu.memory_space<vmem>>, vector<1x16x128xbf16>
    %3 = vector.shape_cast %2 : vector<1x16x128xbf16> to vector<16x128xbf16>
    %4 = arith.extf %3 : vector<16x128xbf16> to vector<16x128xf32>
    %c0_5 = arith.constant 0 : index
    %c0_6 = arith.constant 0 : index
    %5 = vector.load %arg3[%c0_5, %c0_6] : memref<128x384xbf16, #tpu.memory_space<vmem>>, vector<128x384xbf16>
    %cst = arith.constant dense<0.000000e+00> : vector<16x384xf32>
    %6 = tpu.matmul %1, %5, %cst {dimension_numbers = #tpu.dot_dimension_numbers<[1], [0], [0], [1], [0, 0, 1, 1], [], []>} : vector<16x128xbf16>, vector<128x384xbf16>, vector<16x384xf32> -> vector<16x384xf32>
    %c0_7 = arith.constant 0 : index
    %c0_8 = arith.constant 0 : index
    %7 = vector.load %arg4[%c0_7, %c0_8] : memref<1x384xf32, #tpu.memory_space<vmem>>, vector<1x384xf32>
    %8 = vector.broadcast %7 : vector<1x384xf32> to vector<16x384xf32>
    %9 = arith.addf %6, %8 : vector<16x384xf32>
    %c0_9 = arith.constant 0 : index
    %c0_10 = arith.constant 0 : index
    %c0_11 = arith.constant 0 : index
    %10 = vector.load %arg2[%c0_9, %c0_10, %c0_11] : memref<1x1x16xf32, #tpu.memory_space<vmem>>, vector<1x1x16xf32>
    %11 = vector.shape_cast %10 : vector<1x1x16xf32> to vector<1x16xf32>
    %12 = vector.extract_strided_slice %9 {offsets = [0, 0], sizes = [16, 32], strides = [1, 1]} : vector<16x384xf32> to vector<16x32xf32>
    %13 = arith.truncf %12 : vector<16x32xf32> to vector<16x32xbf16>
    %14 = vector.extract_strided_slice %9 {offsets = [0, 128], sizes = [16, 32], strides = [1, 1]} : vector<16x384xf32> to vector<16x32xf32>
    %15 = arith.truncf %14 : vector<16x32xf32> to vector<16x32xbf16>
    %16 = vector.extract_strided_slice %9 {offsets = [0, 256], sizes = [16, 32], strides = [1, 1]} : vector<16x384xf32> to vector<16x32xf32>
    %17 = arith.truncf %16 : vector<16x32xf32> to vector<16x32xbf16>
    %cst_12 = arith.constant dense<0.000000e+00> : vector<16x16xf32>
    %18 = tpu.matmul %13, %15, %cst_12 {dimension_numbers = #tpu.dot_dimension_numbers<[1], [1], [0], [0], [0, 0, 1, 0], [], []>} : vector<16x32xbf16>, vector<16x32xbf16>, vector<16x16xf32> -> vector<16x16xf32>
    %19 = vector.broadcast %11 : vector<1x16xf32> to vector<16x16xf32>
    %20 = arith.addf %18, %19 : vector<16x16xf32>
    %cst_13 = arith.constant dense<0xFF800000> : vector<16xf32>
    %21 = vector.multi_reduction <maximumf>, %20, %cst_13 [1] : vector<16x16xf32> to vector<16xf32>
    %22 = vector.shape_cast %21 : vector<16xf32> to vector<16x1xf32>
    %23 = vector.broadcast %22 : vector<16x1xf32> to vector<16x16xf32>
    %24 = arith.subf %20, %23 : vector<16x16xf32>
    %25 = math.exp %24 : vector<16x16xf32>
    %cst_14 = arith.constant dense<0.000000e+00> : vector<16xf32>
    %26 = vector.multi_reduction <add>, %25, %cst_14 [1] : vector<16x16xf32> to vector<16xf32>
    %27 = vector.shape_cast %26 : vector<16xf32> to vector<16x1xf32>
    %28 = tpu.reciprocal %27 {approx = true} : vector<16x1xf32> -> vector<16x1xf32>
    %29 = vector.broadcast %28 : vector<16x1xf32> to vector<16x16xf32>
    %30 = arith.mulf %25, %29 : vector<16x16xf32>
    %31 = arith.truncf %30 : vector<16x16xf32> to vector<16x16xbf16>
    %cst_15 = arith.constant dense<0.000000e+00> : vector<16x32xf32>
    %32 = tpu.matmul %31, %17, %cst_15 {dimension_numbers = #tpu.dot_dimension_numbers<[1], [0], [0], [1], [0, 0, 1, 1], [], []>} : vector<16x16xbf16>, vector<16x32xbf16>, vector<16x32xf32> -> vector<16x32xf32>
    %33 = vector.extract_strided_slice %9 {offsets = [0, 32], sizes = [16, 32], strides = [1, 1]} : vector<16x384xf32> to vector<16x32xf32>
    %34 = arith.truncf %33 : vector<16x32xf32> to vector<16x32xbf16>
    %35 = vector.extract_strided_slice %9 {offsets = [0, 160], sizes = [16, 32], strides = [1, 1]} : vector<16x384xf32> to vector<16x32xf32>
    %36 = arith.truncf %35 : vector<16x32xf32> to vector<16x32xbf16>
    %37 = vector.extract_strided_slice %9 {offsets = [0, 288], sizes = [16, 32], strides = [1, 1]} : vector<16x384xf32> to vector<16x32xf32>
    %38 = arith.truncf %37 : vector<16x32xf32> to vector<16x32xbf16>
    %cst_16 = arith.constant dense<0.000000e+00> : vector<16x16xf32>
    %39 = tpu.matmul %34, %36, %cst_16 {dimension_numbers = #tpu.dot_dimension_numbers<[1], [1], [0], [0], [0, 0, 1, 0], [], []>} : vector<16x32xbf16>, vector<16x32xbf16>, vector<16x16xf32> -> vector<16x16xf32>
    %40 = vector.broadcast %11 : vector<1x16xf32> to vector<16x16xf32>
    %41 = arith.addf %39, %40 : vector<16x16xf32>
    %cst_17 = arith.constant dense<0xFF800000> : vector<16xf32>
    %42 = vector.multi_reduction <maximumf>, %41, %cst_17 [1] : vector<16x16xf32> to vector<16xf32>
    %43 = vector.shape_cast %42 : vector<16xf32> to vector<16x1xf32>
    %44 = vector.broadcast %43 : vector<16x1xf32> to vector<16x16xf32>
    %45 = arith.subf %41, %44 : vector<16x16xf32>
    %46 = math.exp %45 : vector<16x16xf32>
    %cst_18 = arith.constant dense<0.000000e+00> : vector<16xf32>
    %47 = vector.multi_reduction <add>, %46, %cst_18 [1] : vector<16x16xf32> to vector<16xf32>
    %48 = vector.shape_cast %47 : vector<16xf32> to vector<16x1xf32>
    %49 = tpu.reciprocal %48 {approx = true} : vector<16x1xf32> -> vector<16x1xf32>
    %50 = vector.broadcast %49 : vector<16x1xf32> to vector<16x16xf32>
    %51 = arith.mulf %46, %50 : vector<16x16xf32>
    %52 = arith.truncf %51 : vector<16x16xf32> to vector<16x16xbf16>
    %cst_19 = arith.constant dense<0.000000e+00> : vector<16x32xf32>
    %53 = tpu.matmul %52, %38, %cst_19 {dimension_numbers = #tpu.dot_dimension_numbers<[1], [0], [0], [1], [0, 0, 1, 1], [], []>} : vector<16x16xbf16>, vector<16x32xbf16>, vector<16x32xf32> -> vector<16x32xf32>
    %54 = vector.extract_strided_slice %9 {offsets = [0, 64], sizes = [16, 32], strides = [1, 1]} : vector<16x384xf32> to vector<16x32xf32>
    %55 = arith.truncf %54 : vector<16x32xf32> to vector<16x32xbf16>
    %56 = vector.extract_strided_slice %9 {offsets = [0, 192], sizes = [16, 32], strides = [1, 1]} : vector<16x384xf32> to vector<16x32xf32>
    %57 = arith.truncf %56 : vector<16x32xf32> to vector<16x32xbf16>
    %58 = vector.extract_strided_slice %9 {offsets = [0, 320], sizes = [16, 32], strides = [1, 1]} : vector<16x384xf32> to vector<16x32xf32>
    %59 = arith.truncf %58 : vector<16x32xf32> to vector<16x32xbf16>
    %cst_20 = arith.constant dense<0.000000e+00> : vector<16x16xf32>
    %60 = tpu.matmul %55, %57, %cst_20 {dimension_numbers = #tpu.dot_dimension_numbers<[1], [1], [0], [0], [0, 0, 1, 0], [], []>} : vector<16x32xbf16>, vector<16x32xbf16>, vector<16x16xf32> -> vector<16x16xf32>
    %61 = vector.broadcast %11 : vector<1x16xf32> to vector<16x16xf32>
    %62 = arith.addf %60, %61 : vector<16x16xf32>
    %cst_21 = arith.constant dense<0xFF800000> : vector<16xf32>
    %63 = vector.multi_reduction <maximumf>, %62, %cst_21 [1] : vector<16x16xf32> to vector<16xf32>
    %64 = vector.shape_cast %63 : vector<16xf32> to vector<16x1xf32>
    %65 = vector.broadcast %64 : vector<16x1xf32> to vector<16x16xf32>
    %66 = arith.subf %62, %65 : vector<16x16xf32>
    %67 = math.exp %66 : vector<16x16xf32>
    %cst_22 = arith.constant dense<0.000000e+00> : vector<16xf32>
    %68 = vector.multi_reduction <add>, %67, %cst_22 [1] : vector<16x16xf32> to vector<16xf32>
    %69 = vector.shape_cast %68 : vector<16xf32> to vector<16x1xf32>
    %70 = tpu.reciprocal %69 {approx = true} : vector<16x1xf32> -> vector<16x1xf32>
    %71 = vector.broadcast %70 : vector<16x1xf32> to vector<16x16xf32>
    %72 = arith.mulf %67, %71 : vector<16x16xf32>
    %73 = arith.truncf %72 : vector<16x16xf32> to vector<16x16xbf16>
    %cst_23 = arith.constant dense<0.000000e+00> : vector<16x32xf32>
    %74 = tpu.matmul %73, %59, %cst_23 {dimension_numbers = #tpu.dot_dimension_numbers<[1], [0], [0], [1], [0, 0, 1, 1], [], []>} : vector<16x16xbf16>, vector<16x32xbf16>, vector<16x32xf32> -> vector<16x32xf32>
    %75 = vector.extract_strided_slice %9 {offsets = [0, 96], sizes = [16, 32], strides = [1, 1]} : vector<16x384xf32> to vector<16x32xf32>
    %76 = arith.truncf %75 : vector<16x32xf32> to vector<16x32xbf16>
    %77 = vector.extract_strided_slice %9 {offsets = [0, 224], sizes = [16, 32], strides = [1, 1]} : vector<16x384xf32> to vector<16x32xf32>
    %78 = arith.truncf %77 : vector<16x32xf32> to vector<16x32xbf16>
    %79 = vector.extract_strided_slice %9 {offsets = [0, 352], sizes = [16, 32], strides = [1, 1]} : vector<16x384xf32> to vector<16x32xf32>
    %80 = arith.truncf %79 : vector<16x32xf32> to vector<16x32xbf16>
    %cst_24 = arith.constant dense<0.000000e+00> : vector<16x16xf32>
    %81 = tpu.matmul %76, %78, %cst_24 {dimension_numbers = #tpu.dot_dimension_numbers<[1], [1], [0], [0], [0, 0, 1, 0], [], []>} : vector<16x32xbf16>, vector<16x32xbf16>, vector<16x16xf32> -> vector<16x16xf32>
    %82 = vector.broadcast %11 : vector<1x16xf32> to vector<16x16xf32>
    %83 = arith.addf %81, %82 : vector<16x16xf32>
    %cst_25 = arith.constant dense<0xFF800000> : vector<16xf32>
    %84 = vector.multi_reduction <maximumf>, %83, %cst_25 [1] : vector<16x16xf32> to vector<16xf32>
    %85 = vector.shape_cast %84 : vector<16xf32> to vector<16x1xf32>
    %86 = vector.broadcast %85 : vector<16x1xf32> to vector<16x16xf32>
    %87 = arith.subf %83, %86 : vector<16x16xf32>
    %88 = math.exp %87 : vector<16x16xf32>
    %cst_26 = arith.constant dense<0.000000e+00> : vector<16xf32>
    %89 = vector.multi_reduction <add>, %88, %cst_26 [1] : vector<16x16xf32> to vector<16xf32>
    %90 = vector.shape_cast %89 : vector<16xf32> to vector<16x1xf32>
    %91 = tpu.reciprocal %90 {approx = true} : vector<16x1xf32> -> vector<16x1xf32>
    %92 = vector.broadcast %91 : vector<16x1xf32> to vector<16x16xf32>
    %93 = arith.mulf %88, %92 : vector<16x16xf32>
    %94 = arith.truncf %93 : vector<16x16xf32> to vector<16x16xbf16>
    %cst_27 = arith.constant dense<0.000000e+00> : vector<16x32xf32>
    %95 = tpu.matmul %94, %80, %cst_27 {dimension_numbers = #tpu.dot_dimension_numbers<[1], [0], [0], [1], [0, 0, 1, 1], [], []>} : vector<16x16xbf16>, vector<16x32xbf16>, vector<16x32xf32> -> vector<16x32xf32>
    %96 = tpu.concatenate %32, %53, %74, %95 in 1 : vector<16x32xf32>, vector<16x32xf32>, vector<16x32xf32>, vector<16x32xf32> -> vector<16x128xf32>
    %97 = arith.truncf %96 : vector<16x128xf32> to vector<16x128xbf16>
    %c0_28 = arith.constant 0 : index
    %c0_29 = arith.constant 0 : index
    %98 = vector.load %arg5[%c0_28, %c0_29] : memref<128x128xbf16, #tpu.memory_space<vmem>>, vector<128x128xbf16>
    %cst_30 = arith.constant dense<0.000000e+00> : vector<16x128xf32>
    %99 = tpu.matmul %97, %98, %cst_30 {dimension_numbers = #tpu.dot_dimension_numbers<[1], [0], [0], [1], [0, 0, 1, 1], [], []>} : vector<16x128xbf16>, vector<128x128xbf16>, vector<16x128xf32> -> vector<16x128xf32>
    %c0_31 = arith.constant 0 : index
    %c0_32 = arith.constant 0 : index
    %100 = vector.load %arg6[%c0_31, %c0_32] : memref<1x128xf32, #tpu.memory_space<vmem>>, vector<1x128xf32>
    %101 = vector.broadcast %100 : vector<1x128xf32> to vector<16x128xf32>
    %102 = arith.addf %99, %101 : vector<16x128xf32>
    %103 = arith.addf %102, %4 : vector<16x128xf32>
    %cst_33 = arith.constant dense<0.000000e+00> : vector<16xf32>
    %104 = vector.multi_reduction <add>, %103, %cst_33 [1] : vector<16x128xf32> to vector<16xf32>
    %105 = vector.shape_cast %104 : vector<16xf32> to vector<16x1xf32>
    %cst_34 = arith.constant 1.280000e+02 : f32
    %106 = vector.broadcast %cst_34 : f32 to vector<16x1xf32>
    %107 = arith.divf %105, %106 : vector<16x1xf32>
    %108 = vector.broadcast %107 : vector<16x1xf32> to vector<16x128xf32>
    %109 = arith.subf %103, %108 : vector<16x128xf32>
    %110 = arith.mulf %109, %109 : vector<16x128xf32>
    %cst_35 = arith.constant dense<0.000000e+00> : vector<16xf32>
    %111 = vector.multi_reduction <add>, %110, %cst_35 [1] : vector<16x128xf32> to vector<16xf32>
    %112 = vector.shape_cast %111 : vector<16xf32> to vector<16x1xf32>
    %cst_36 = arith.constant 1.280000e+02 : f32
    %113 = vector.broadcast %cst_36 : f32 to vector<16x1xf32>
    %114 = arith.divf %112, %113 : vector<16x1xf32>
    %c0_37 = arith.constant 0 : index
    %c0_38 = arith.constant 0 : index
    %115 = vector.load %arg7[%c0_37, %c0_38] : memref<1x128xf32, #tpu.memory_space<vmem>>, vector<1x128xf32>
    %116 = vector.broadcast %107 : vector<16x1xf32> to vector<16x128xf32>
    %117 = arith.subf %103, %116 : vector<16x128xf32>
    %118 = vector.broadcast %115 : vector<1x128xf32> to vector<16x128xf32>
    %119 = arith.mulf %118, %117 : vector<16x128xf32>
    %cst_39 = arith.constant 9.99999996E-13 : f32
    %120 = vector.broadcast %cst_39 : f32 to vector<16x1xf32>
    %121 = arith.addf %114, %120 : vector<16x1xf32>
    %122 = math.rsqrt %121 : vector<16x1xf32>
    %123 = vector.broadcast %122 : vector<16x1xf32> to vector<16x128xf32>
    %124 = arith.mulf %119, %123 : vector<16x128xf32>
    %c0_40 = arith.constant 0 : index
    %c0_41 = arith.constant 0 : index
    %125 = vector.load %arg8[%c0_40, %c0_41] : memref<1x128xf32, #tpu.memory_space<vmem>>, vector<1x128xf32>
    %126 = vector.broadcast %125 : vector<1x128xf32> to vector<16x128xf32>
    %127 = arith.addf %124, %126 : vector<16x128xf32>
    %128 = arith.truncf %127 : vector<16x128xf32> to vector<16x128xbf16>
    %c0_42 = arith.constant 0 : index
    %c0_43 = arith.constant 0 : index
    %129 = vector.load %arg9[%c0_42, %c0_43] : memref<128x256xbf16, #tpu.memory_space<vmem>>, vector<128x256xbf16>
    %cst_44 = arith.constant dense<0.000000e+00> : vector<16x256xf32>
    %130 = tpu.matmul %128, %129, %cst_44 {dimension_numbers = #tpu.dot_dimension_numbers<[1], [0], [0], [1], [0, 0, 1, 1], [], []>} : vector<16x128xbf16>, vector<128x256xbf16>, vector<16x256xf32> -> vector<16x256xf32>
    %c0_45 = arith.constant 0 : index
    %c0_46 = arith.constant 0 : index
    %131 = vector.load %arg10[%c0_45, %c0_46] : memref<1x256xf32, #tpu.memory_space<vmem>>, vector<1x256xf32>
    %132 = vector.broadcast %131 : vector<1x256xf32> to vector<16x256xf32>
    %133 = arith.addf %130, %132 : vector<16x256xf32>
    %cst_47 = arith.constant 0.000000e+00 : f32
    %134 = vector.broadcast %cst_47 : f32 to vector<16x256xf32>
    %135 = arith.maximumf %133, %134 : vector<16x256xf32>
    %136 = arith.truncf %135 : vector<16x256xf32> to vector<16x256xbf16>
    %c0_48 = arith.constant 0 : index
    %c0_49 = arith.constant 0 : index
    %137 = vector.load %arg11[%c0_48, %c0_49] : memref<256x128xbf16, #tpu.memory_space<vmem>>, vector<256x128xbf16>
    %cst_50 = arith.constant dense<0.000000e+00> : vector<16x128xf32>
    %138 = tpu.matmul %136, %137, %cst_50 {dimension_numbers = #tpu.dot_dimension_numbers<[1], [0], [0], [1], [0, 0, 1, 1], [], []>} : vector<16x256xbf16>, vector<256x128xbf16>, vector<16x128xf32> -> vector<16x128xf32>
    %c0_51 = arith.constant 0 : index
    %c0_52 = arith.constant 0 : index
    %139 = vector.load %arg12[%c0_51, %c0_52] : memref<1x128xf32, #tpu.memory_space<vmem>>, vector<1x128xf32>
    %140 = vector.broadcast %139 : vector<1x128xf32> to vector<16x128xf32>
    %141 = arith.addf %138, %140 : vector<16x128xf32>
    %142 = arith.addf %141, %127 : vector<16x128xf32>
    %cst_53 = arith.constant dense<0.000000e+00> : vector<16xf32>
    %143 = vector.multi_reduction <add>, %142, %cst_53 [1] : vector<16x128xf32> to vector<16xf32>
    %144 = vector.shape_cast %143 : vector<16xf32> to vector<16x1xf32>
    %cst_54 = arith.constant 1.280000e+02 : f32
    %145 = vector.broadcast %cst_54 : f32 to vector<16x1xf32>
    %146 = arith.divf %144, %145 : vector<16x1xf32>
    %147 = vector.broadcast %146 : vector<16x1xf32> to vector<16x128xf32>
    %148 = arith.subf %142, %147 : vector<16x128xf32>
    %149 = arith.mulf %148, %148 : vector<16x128xf32>
    %cst_55 = arith.constant dense<0.000000e+00> : vector<16xf32>
    %150 = vector.multi_reduction <add>, %149, %cst_55 [1] : vector<16x128xf32> to vector<16xf32>
    %151 = vector.shape_cast %150 : vector<16xf32> to vector<16x1xf32>
    %cst_56 = arith.constant 1.280000e+02 : f32
    %152 = vector.broadcast %cst_56 : f32 to vector<16x1xf32>
    %153 = arith.divf %151, %152 : vector<16x1xf32>
    %c0_57 = arith.constant 0 : index
    %c0_58 = arith.constant 0 : index
    %154 = vector.load %arg13[%c0_57, %c0_58] : memref<1x128xf32, #tpu.memory_space<vmem>>, vector<1x128xf32>
    %155 = vector.broadcast %146 : vector<16x1xf32> to vector<16x128xf32>
    %156 = arith.subf %142, %155 : vector<16x128xf32>
    %157 = vector.broadcast %154 : vector<1x128xf32> to vector<16x128xf32>
    %158 = arith.mulf %157, %156 : vector<16x128xf32>
    %cst_59 = arith.constant 9.99999996E-13 : f32
    %159 = vector.broadcast %cst_59 : f32 to vector<16x1xf32>
    %160 = arith.addf %153, %159 : vector<16x1xf32>
    %161 = math.rsqrt %160 : vector<16x1xf32>
    %162 = vector.broadcast %161 : vector<16x1xf32> to vector<16x128xf32>
    %163 = arith.mulf %158, %162 : vector<16x128xf32>
    %c0_60 = arith.constant 0 : index
    %c0_61 = arith.constant 0 : index
    %164 = vector.load %arg14[%c0_60, %c0_61] : memref<1x128xf32, #tpu.memory_space<vmem>>, vector<1x128xf32>
    %165 = vector.broadcast %164 : vector<1x128xf32> to vector<16x128xf32>
    %166 = arith.addf %163, %165 : vector<16x128xf32>
    %167 = arith.truncf %166 : vector<16x128xf32> to vector<16x128xbf16>
    %c0_62 = arith.constant 0 : index
    %c0_63 = arith.constant 0 : index
    %c0_64 = arith.constant 0 : index
    %168 = vector.load %arg15[%c0_62, %c0_63, %c0_64] : memref<1x16x128xbf16, #tpu.memory_space<vmem>>, vector<1x16x128xbf16>
    %169 = vector.shape_cast %168 : vector<1x16x128xbf16> to vector<16x128xbf16>
    %170 = vector.shape_cast %167 : vector<16x128xbf16> to vector<1x16x128xbf16>
    tpu.vector_store %arg15[%c0_62, %c0_63, %c0_64], %170 {strides = array<i32>} : memref<1x16x128xbf16, #tpu.memory_space<vmem>>, vector<1x16x128xbf16>,
    return
  }
  func.func @transform_0(%arg0: i32) -> (i32, i32, i32) {
    %c0_i32 = arith.constant 0 : i32
    %c0_i32_0 = arith.constant 0 : i32
    %c0_i32_1 = arith.constant 0 : i32
    return %arg0, %c0_i32, %c0_i32_0 : i32, i32, i32
  }
  func.func @transform_1(%arg0: i32) -> (i32, i32, i32) {
    %c0_i32 = arith.constant 0 : i32
    %c0_i32_0 = arith.constant 0 : i32
    %c0_i32_1 = arith.constant 0 : i32
    return %arg0, %c0_i32, %c0_i32_0 : i32, i32, i32
  }
  func.func @transform_2(%arg0: i32) -> (i32, i32) {
    %c0_i32 = arith.constant 0 : i32
    %c0_i32_0 = arith.constant 0 : i32
    %c0_i32_1 = arith.constant 0 : i32
    return %c0_i32, %c0_i32_0 : i32, i32
  }
  func.func @transform_3(%arg0: i32) -> (i32, i32) {
    %c0_i32 = arith.constant 0 : i32
    %c0_i32_0 = arith.constant 0 : i32
    %c0_i32_1 = arith.constant 0 : i32
    return %c0_i32, %c0_i32_0 : i32, i32
  }
  func.func @transform_4(%arg0: i32) -> (i32, i32) {
    %c0_i32 = arith.constant 0 : i32
    %c0_i32_0 = arith.constant 0 : i32
    %c0_i32_1 = arith.constant 0 : i32
    return %c0_i32, %c0_i32_0 : i32, i32
  }
  func.func @transform_5(%arg0: i32) -> (i32, i32) {
    %c0_i32 = arith.constant 0 : i32
    %c0_i32_0 = arith.constant 0 : i32
    %c0_i32_1 = arith.constant 0 : i32
    return %c0_i32, %c0_i32_0 : i32, i32
  }
  func.func @transform_6(%arg0: i32) -> (i32, i32) {
    %c0_i32 = arith.constant 0 : i32
    %c0_i32_0 = arith.constant 0 : i32
    %c0_i32_1 = arith.constant 0 : i32
    return %c0_i32, %c0_i32_0 : i32, i32
  }
  func.func @transform_7(%arg0: i32) -> (i32, i32) {
    %c0_i32 = arith.constant 0 : i32
    %c0_i32_0 = arith.constant 0 : i32
    %c0_i32_1 = arith.constant 0 : i32
    return %c0_i32, %c0_i32_0 : i32, i32
  }
  func.func @transform_8(%arg0: i32) -> (i32, i32) {
    %c0_i32 = arith.constant 0 : i32
    %c0_i32_0 = arith.constant 0 : i32
    %c0_i32_1 = arith.constant 0 : i32
    return %c0_i32, %c0_i32_0 : i32, i32
  }
  func.func @transform_9(%arg0: i32) -> (i32, i32) {
    %c0_i32 = arith.constant 0 : i32
    %c0_i32_0 = arith.constant 0 : i32
    %c0_i32_1 = arith.constant 0 : i32
    return %c0_i32, %c0_i32_0 : i32, i32
  }
  func.func @transform_10(%arg0: i32) -> (i32, i32) {
    %c0_i32 = arith.constant 0 : i32
    %c0_i32_0 = arith.constant 0 : i32
    %c0_i32_1 = arith.constant 0 : i32
    return %c0_i32, %c0_i32_0 : i32, i32
  }
  func.func @transform_11(%arg0: i32) -> (i32, i32) {
    %c0_i32 = arith.constant 0 : i32
    %c0_i32_0 = arith.constant 0 : i32
    %c0_i32_1 = arith.constant 0 : i32
    return %c0_i32, %c0_i32_0 : i32, i32
  }
  func.func @transform_12(%arg0: i32) -> (i32, i32) {
    %c0_i32 = arith.constant 0 : i32
    %c0_i32_0 = arith.constant 0 : i32
    %c0_i32_1 = arith.constant 0 : i32
    return %c0_i32, %c0_i32_0 : i32, i32
  }
  func.func @transform_13(%arg0: i32) -> (i32, i32) {
    %c0_i32 = arith.constant 0 : i32
    %c0_i32_0 = arith.constant 0 : i32
    %c0_i32_1 = arith.constant 0 : i32
    return %c0_i32, %c0_i32_0 : i32, i32
  }
  func.func @transform_14(%arg0: i32) -> (i32, i32, i32) {
    %c0_i32 = arith.constant 0 : i32
    %c0_i32_0 = arith.constant 0 : i32
    %c0_i32_1 = arith.constant 0 : i32
    return %arg0, %c0_i32, %c0_i32_0 : i32, i32, i32
  }
}

module attributes {stable_mosaic.version = 11 : i64} {
  func.func @_encoder_layer_kernel(%arg0: i32, %arg1: memref<1x16x128xbf16, #tpu.memory_space<vmem>>, %arg2: memref<1x1x16xf32, #tpu.memory_space<vmem>>, %arg3: memref<128x384xbf16, #tpu.memory_space<vmem>>, %arg4: memref<1x384xf32, #tpu.memory_space<vmem>>, %arg5: memref<128x128xbf16, #tpu.memory_space<vmem>>, %arg6: memref<1x128xf32, #tpu.memory_space<vmem>>, %arg7: memref<1x128xf32, #tpu.memory_space<vmem>>, %arg8: memref<1x128xf32, #tpu.memory_space<vmem>>, %arg9: memref<128x256xbf16, #tpu.memory_space<vmem>>, %arg10: memref<1x256xf32, #tpu.memory_space<vmem>>, %arg11: memref<256x128xbf16, #tpu.memory_space<vmem>>, %arg12: memref<1x128xf32, #tpu.memory_space<vmem>>, %arg13: memref<1x128xf32, #tpu.memory_space<vmem>>, %arg14: memref<1x128xf32, #tpu.memory_space<vmem>>, %arg15: memref<1x16x128xf32, #tpu.memory_space<vmem>>) attributes {dimension_semantics = [#tpu.dimension_semantics<parallel>], iteration_bounds = array<i64: 2>, scalar_prefetch = 0 : i64, scratch_operands = 0 : i64, tpu.core_type = #tpu.core_type<tc>, window_params = [{transform_indices = @transform_0, window_bounds = array<i64: 1, 16, 128>}, {transform_indices = @transform_1, window_bounds = array<i64: 1, 1, 16>}, {pipeline_mode = #tpu.pipeline_mode<synchronous>, transform_indices = @transform_2, window_bounds = array<i64: 128, 384>}, {pipeline_mode = #tpu.pipeline_mode<synchronous>, transform_indices = @transform_3, window_bounds = array<i64: 1, 384>}, {pipeline_mode = #tpu.pipeline_mode<synchronous>, transform_indices = @transform_4, window_bounds = array<i64: 128, 128>}, {pipeline_mode = #tpu.pipeline_mode<synchronous>, transform_indices = @transform_5, window_bounds = array<i64: 1, 128>}, {pipeline_mode = #tpu.pipeline_mode<synchronous>, transform_indices = @transform_6, window_bounds = array<i64: 1, 128>}, {pipeline_mode = #tpu.pipeline_mode<synchronous>, transform_indices = @transform_7, window_bounds = array<i64: 1, 128>}, {pipeline_mode = #tpu.pipeline_mode<synchronous>, transform_indices = @transform_8, window_bounds = array<i64: 128, 256>}, {pipeline_mode = #tpu.pipeline_mode<synchronous>, transform_indices = @transform_9, window_bounds = array<i64: 1, 256>}, {pipeline_mode = #tpu.pipeline_mode<synchronous>, transform_indices = @transform_10, window_bounds = array<i64: 256, 128>}, {pipeline_mode = #tpu.pipeline_mode<synchronous>, transform_indices = @transform_11, window_bounds = array<i64: 1, 128>}, {pipeline_mode = #tpu.pipeline_mode<synchronous>, transform_indices = @transform_12, window_bounds = array<i64: 1, 128>}, {pipeline_mode = #tpu.pipeline_mode<synchronous>, transform_indices = @transform_13, window_bounds = array<i64: 1, 128>}, {transform_indices = @transform_14, window_bounds = array<i64: 1, 16, 128>}]} {
    %c0 = arith.constant 0 : index
    %c0_0 = arith.constant 0 : index
    %c0_1 = arith.constant 0 : index
    %0 = vector.load %arg1[%c0, %c0_0, %c0_1] : memref<1x16x128xbf16, #tpu.memory_space<vmem>>, vector<1x16x128xbf16>
    %1 = vector.shape_cast %0 : vector<1x16x128xbf16> to vector<16x128xbf16>
    %c0_2 = arith.constant 0 : index
    %c0_3 = arith.constant 0 : index
    %c0_4 = arith.constant 0 : index
    %2 = vector.load %arg1[%c0_2, %c0_3, %c0_4] : memref<1x16x128xbf16, #tpu.memory_space<vmem>>, vector<1x16x128xbf16>
    %3 = vector.shape_cast %2 : vector<1x16x128xbf16> to vector<16x128xbf16>
    %4 = arith.extf %3 : vector<16x128xbf16> to vector<16x128xf32>
    %c0_5 = arith.constant 0 : index
    %c0_6 = arith.constant 0 : index
    %5 = vector.load %arg3[%c0_5, %c0_6] : memref<128x384xbf16, #tpu.memory_space<vmem>>, vector<128x384xbf16>
    %cst = arith.constant dense<0.000000e+00> : vector<16x384xf32>
    %6 = tpu.matmul %1, %5, %cst {dimension_numbers = #tpu.dot_dimension_numbers<[1], [0], [0], [1], [0, 0, 1, 1], [], []>} : vector<16x128xbf16>, vector<128x384xbf16>, vector<16x384xf32> -> vector<16x384xf32>
    %c0_7 = arith.constant 0 : index
    %c0_8 = arith.constant 0 : index
    %7 = vector.load %arg4[%c0_7, %c0_8] : memref<1x384xf32, #tpu.memory_space<vmem>>, vector<1x384xf32>
    %8 = vector.broadcast %7 : vector<1x384xf32> to vector<16x384xf32>
    %9 = arith.addf %6, %8 : vector<16x384xf32>
    %c0_9 = arith.constant 0 : index
    %c0_10 = arith.constant 0 : index
    %c0_11 = arith.constant 0 : index
    %10 = vector.load %arg2[%c0_9, %c0_10, %c0_11] : memref<1x1x16xf32, #tpu.memory_space<vmem>>, vector<1x1x16xf32>
    %11 = vector.shape_cast %10 : vector<1x1x16xf32> to vector<1x16xf32>
    %12 = vector.extract_strided_slice %9 {offsets = [0, 0], sizes = [16, 32], strides = [1, 1]} : vector<16x384xf32> to vector<16x32xf32>
    %13 = arith.truncf %12 : vector<16x32xf32> to vector<16x32xbf16>
    %14 = vector.extract_strided_slice %9 {offsets = [0, 128], sizes = [16, 32], strides = [1, 1]} : vector<16x384xf32> to vector<16x32xf32>
    %15 = arith.truncf %14 : vector<16x32xf32> to vector<16x32xbf16>
    %16 = vector.extract_strided_slice %9 {offsets = [0, 256], sizes = [16, 32], strides = [1, 1]} : vector<16x384xf32> to vector<16x32xf32>
    %17 = arith.truncf %16 : vector<16x32xf32> to vector<16x32xbf16>
    %cst_12 = arith.constant dense<0.000000e+00> : vector<16x16xf32>
    %18 = tpu.matmul %13, %15, %cst_12 {dimension_numbers = #tpu.dot_dimension_numbers<[1], [1], [0], [0], [0, 0, 1, 0], [], []>} : vector<16x32xbf16>, vector<16x32xbf16>, vector<16x16xf32> -> vector<16x16xf32>
    %19 = vector.broadcast %11 : vector<1x16xf32> to vector<16x16xf32>
    %20 = arith.addf %18, %19 : vector<16x16xf32>
    %cst_13 = arith.constant dense<0xFF800000> : vector<16xf32>
    %21 = vector.multi_reduction <maximumf>, %20, %cst_13 [1] : vector<16x16xf32> to vector<16xf32>
    %22 = vector.shape_cast %21 : vector<16xf32> to vector<16x1xf32>
    %23 = vector.broadcast %22 : vector<16x1xf32> to vector<16x16xf32>
    %24 = arith.subf %20, %23 : vector<16x16xf32>
    %25 = math.exp %24 : vector<16x16xf32>
    %cst_14 = arith.constant dense<0.000000e+00> : vector<16xf32>
    %26 = vector.multi_reduction <add>, %25, %cst_14 [1] : vector<16x16xf32> to vector<16xf32>
    %27 = vector.shape_cast %26 : vector<16xf32> to vector<16x1xf32>
    %28 = tpu.reciprocal %27 {approx = true} : vector<16x1xf32> -> vector<16x1xf32>
    %29 = vector.broadcast %28 : vector<16x1xf32> to vector<16x16xf32>
    %30 = arith.mulf %25, %29 : vector<16x16xf32>
    %31 = arith.truncf %30 : vector<16x16xf32> to vector<16x16xbf16>
    %cst_15 = arith.constant dense<0.000000e+00> : vector<16x32xf32>
    %32 = tpu.matmul %31, %17, %cst_15 {dimension_numbers = #tpu.dot_dimension_numbers<[1], [0], [0], [1], [0, 0, 1, 1], [], []>} : vector<16x16xbf16>, vector<16x32xbf16>, vector<16x32xf32> -> vector<16x32xf32>
    %33 = vector.extract_strided_slice %9 {offsets = [0, 32], sizes = [16, 32], strides = [1, 1]} : vector<16x384xf32> to vector<16x32xf32>
    %34 = arith.truncf %33 : vector<16x32xf32> to vector<16x32xbf16>
    %35 = vector.extract_strided_slice %9 {offsets = [0, 160], sizes = [16, 32], strides = [1, 1]} : vector<16x384xf32> to vector<16x32xf32>
    %36 = arith.truncf %35 : vector<16x32xf32> to vector<16x32xbf16>
    %37 = vector.extract_strided_slice %9 {offsets = [0, 288], sizes = [16, 32], strides = [1, 1]} : vector<16x384xf32> to vector<16x32xf32>
    %38 = arith.truncf %37 : vector<16x32xf32> to vector<16x32xbf16>
    %cst_16 = arith.constant dense<0.000000e+00> : vector<16x16xf32>
    %39 = tpu.matmul %34, %36, %cst_16 {dimension_numbers = #tpu.dot_dimension_numbers<[1], [1], [0], [0], [0, 0, 1, 0], [], []>} : vector<16x32xbf16>, vector<16x32xbf16>, vector<16x16xf32> -> vector<16x16xf32>
    %40 = vector.broadcast %11 : vector<1x16xf32> to vector<16x16xf32>
    %41 = arith.addf %39, %40 : vector<16x16xf32>
    %cst_17 = arith.constant dense<0xFF800000> : vector<16xf32>
    %42 = vector.multi_reduction <maximumf>, %41, %cst_17 [1] : vector<16x16xf32> to vector<16xf32>
    %43 = vector.shape_cast %42 : vector<16xf32> to vector<16x1xf32>
    %44 = vector.broadcast %43 : vector<16x1xf32> to vector<16x16xf32>
    %45 = arith.subf %41, %44 : vector<16x16xf32>
    %46 = math.exp %45 : vector<16x16xf32>
    %cst_18 = arith.constant dense<0.000000e+00> : vector<16xf32>
    %47 = vector.multi_reduction <add>, %46, %cst_18 [1] : vector<16x16xf32> to vector<16xf32>
    %48 = vector.shape_cast %47 : vector<16xf32> to vector<16x1xf32>
    %49 = tpu.reciprocal %48 {approx = true} : vector<16x1xf32> -> vector<16x1xf32>
    %50 = vector.broadcast %49 : vector<16x1xf32> to vector<16x16xf32>
    %51 = arith.mulf %46, %50 : vector<16x16xf32>
    %52 = arith.truncf %51 : vector<16x16xf32> to vector<16x16xbf16>
    %cst_19 = arith.constant dense<0.000000e+00> : vector<16x32xf32>
    %53 = tpu.matmul %52, %38, %cst_19 {dimension_numbers = #tpu.dot_dimension_numbers<[1], [0], [0], [1], [0, 0, 1, 1], [], []>} : vector<16x16xbf16>, vector<16x32xbf16>, vector<16x32xf32> -> vector<16x32xf32>
    %54 = vector.extract_strided_slice %9 {offsets = [0, 64], sizes = [16, 32], strides = [1, 1]} : vector<16x384xf32> to vector<16x32xf32>
    %55 = arith.truncf %54 : vector<16x32xf32> to vector<16x32xbf16>
    %56 = vector.extract_strided_slice %9 {offsets = [0, 192], sizes = [16, 32], strides = [1, 1]} : vector<16x384xf32> to vector<16x32xf32>
    %57 = arith.truncf %56 : vector<16x32xf32> to vector<16x32xbf16>
    %58 = vector.extract_strided_slice %9 {offsets = [0, 320], sizes = [16, 32], strides = [1, 1]} : vector<16x384xf32> to vector<16x32xf32>
    %59 = arith.truncf %58 : vector<16x32xf32> to vector<16x32xbf16>
    %cst_20 = arith.constant dense<0.000000e+00> : vector<16x16xf32>
    %60 = tpu.matmul %55, %57, %cst_20 {dimension_numbers = #tpu.dot_dimension_numbers<[1], [1], [0], [0], [0, 0, 1, 0], [], []>} : vector<16x32xbf16>, vector<16x32xbf16>, vector<16x16xf32> -> vector<16x16xf32>
    %61 = vector.broadcast %11 : vector<1x16xf32> to vector<16x16xf32>
    %62 = arith.addf %60, %61 : vector<16x16xf32>
    %cst_21 = arith.constant dense<0xFF800000> : vector<16xf32>
    %63 = vector.multi_reduction <maximumf>, %62, %cst_21 [1] : vector<16x16xf32> to vector<16xf32>
    %64 = vector.shape_cast %63 : vector<16xf32> to vector<16x1xf32>
    %65 = vector.broadcast %64 : vector<16x1xf32> to vector<16x16xf32>
    %66 = arith.subf %62, %65 : vector<16x16xf32>
    %67 = math.exp %66 : vector<16x16xf32>
    %cst_22 = arith.constant dense<0.000000e+00> : vector<16xf32>
    %68 = vector.multi_reduction <add>, %67, %cst_22 [1] : vector<16x16xf32> to vector<16xf32>
    %69 = vector.shape_cast %68 : vector<16xf32> to vector<16x1xf32>
    %70 = tpu.reciprocal %69 {approx = true} : vector<16x1xf32> -> vector<16x1xf32>
    %71 = vector.broadcast %70 : vector<16x1xf32> to vector<16x16xf32>
    %72 = arith.mulf %67, %71 : vector<16x16xf32>
    %73 = arith.truncf %72 : vector<16x16xf32> to vector<16x16xbf16>
    %cst_23 = arith.constant dense<0.000000e+00> : vector<16x32xf32>
    %74 = tpu.matmul %73, %59, %cst_23 {dimension_numbers = #tpu.dot_dimension_numbers<[1], [0], [0], [1], [0, 0, 1, 1], [], []>} : vector<16x16xbf16>, vector<16x32xbf16>, vector<16x32xf32> -> vector<16x32xf32>
    %75 = vector.extract_strided_slice %9 {offsets = [0, 96], sizes = [16, 32], strides = [1, 1]} : vector<16x384xf32> to vector<16x32xf32>
    %76 = arith.truncf %75 : vector<16x32xf32> to vector<16x32xbf16>
    %77 = vector.extract_strided_slice %9 {offsets = [0, 224], sizes = [16, 32], strides = [1, 1]} : vector<16x384xf32> to vector<16x32xf32>
    %78 = arith.truncf %77 : vector<16x32xf32> to vector<16x32xbf16>
    %79 = vector.extract_strided_slice %9 {offsets = [0, 352], sizes = [16, 32], strides = [1, 1]} : vector<16x384xf32> to vector<16x32xf32>
    %80 = arith.truncf %79 : vector<16x32xf32> to vector<16x32xbf16>
    %cst_24 = arith.constant dense<0.000000e+00> : vector<16x16xf32>
    %81 = tpu.matmul %76, %78, %cst_24 {dimension_numbers = #tpu.dot_dimension_numbers<[1], [1], [0], [0], [0, 0, 1, 0], [], []>} : vector<16x32xbf16>, vector<16x32xbf16>, vector<16x16xf32> -> vector<16x16xf32>
    %82 = vector.broadcast %11 : vector<1x16xf32> to vector<16x16xf32>
    %83 = arith.addf %81, %82 : vector<16x16xf32>
    %cst_25 = arith.constant dense<0xFF800000> : vector<16xf32>
    %84 = vector.multi_reduction <maximumf>, %83, %cst_25 [1] : vector<16x16xf32> to vector<16xf32>
    %85 = vector.shape_cast %84 : vector<16xf32> to vector<16x1xf32>
    %86 = vector.broadcast %85 : vector<16x1xf32> to vector<16x16xf32>
    %87 = arith.subf %83, %86 : vector<16x16xf32>
    %88 = math.exp %87 : vector<16x16xf32>
    %cst_26 = arith.constant dense<0.000000e+00> : vector<16xf32>
    %89 = vector.multi_reduction <add>, %88, %cst_26 [1] : vector<16x16xf32> to vector<16xf32>
    %90 = vector.shape_cast %89 : vector<16xf32> to vector<16x1xf32>
    %91 = tpu.reciprocal %90 {approx = true} : vector<16x1xf32> -> vector<16x1xf32>
    %92 = vector.broadcast %91 : vector<16x1xf32> to vector<16x16xf32>
    %93 = arith.mulf %88, %92 : vector<16x16xf32>
    %94 = arith.truncf %93 : vector<16x16xf32> to vector<16x16xbf16>
    %cst_27 = arith.constant dense<0.000000e+00> : vector<16x32xf32>
    %95 = tpu.matmul %94, %80, %cst_27 {dimension_numbers = #tpu.dot_dimension_numbers<[1], [0], [0], [1], [0, 0, 1, 1], [], []>} : vector<16x16xbf16>, vector<16x32xbf16>, vector<16x32xf32> -> vector<16x32xf32>
    %96 = tpu.concatenate %32, %53, %74, %95 in 1 : vector<16x32xf32>, vector<16x32xf32>, vector<16x32xf32>, vector<16x32xf32> -> vector<16x128xf32>
    %97 = arith.truncf %96 : vector<16x128xf32> to vector<16x128xbf16>
    %c0_28 = arith.constant 0 : index
    %c0_29 = arith.constant 0 : index
    %98 = vector.load %arg5[%c0_28, %c0_29] : memref<128x128xbf16, #tpu.memory_space<vmem>>, vector<128x128xbf16>
    %cst_30 = arith.constant dense<0.000000e+00> : vector<16x128xf32>
    %99 = tpu.matmul %97, %98, %cst_30 {dimension_numbers = #tpu.dot_dimension_numbers<[1], [0], [0], [1], [0, 0, 1, 1], [], []>} : vector<16x128xbf16>, vector<128x128xbf16>, vector<16x128xf32> -> vector<16x128xf32>
    %c0_31 = arith.constant 0 : index
    %c0_32 = arith.constant 0 : index
    %100 = vector.load %arg6[%c0_31, %c0_32] : memref<1x128xf32, #tpu.memory_space<vmem>>, vector<1x128xf32>
    %101 = vector.broadcast %100 : vector<1x128xf32> to vector<16x128xf32>
    %102 = arith.addf %99, %101 : vector<16x128xf32>
    %103 = arith.addf %102, %4 : vector<16x128xf32>
    %cst_33 = arith.constant dense<0.000000e+00> : vector<16xf32>
    %104 = vector.multi_reduction <add>, %103, %cst_33 [1] : vector<16x128xf32> to vector<16xf32>
    %105 = vector.shape_cast %104 : vector<16xf32> to vector<16x1xf32>
    %cst_34 = arith.constant 1.280000e+02 : f32
    %106 = vector.broadcast %cst_34 : f32 to vector<16x1xf32>
    %107 = arith.divf %105, %106 : vector<16x1xf32>
    %108 = vector.broadcast %107 : vector<16x1xf32> to vector<16x128xf32>
    %109 = arith.subf %103, %108 : vector<16x128xf32>
    %110 = arith.mulf %109, %109 : vector<16x128xf32>
    %cst_35 = arith.constant dense<0.000000e+00> : vector<16xf32>
    %111 = vector.multi_reduction <add>, %110, %cst_35 [1] : vector<16x128xf32> to vector<16xf32>
    %112 = vector.shape_cast %111 : vector<16xf32> to vector<16x1xf32>
    %cst_36 = arith.constant 1.280000e+02 : f32
    %113 = vector.broadcast %cst_36 : f32 to vector<16x1xf32>
    %114 = arith.divf %112, %113 : vector<16x1xf32>
    %c0_37 = arith.constant 0 : index
    %c0_38 = arith.constant 0 : index
    %115 = vector.load %arg7[%c0_37, %c0_38] : memref<1x128xf32, #tpu.memory_space<vmem>>, vector<1x128xf32>
    %116 = vector.broadcast %107 : vector<16x1xf32> to vector<16x128xf32>
    %117 = arith.subf %103, %116 : vector<16x128xf32>
    %118 = vector.broadcast %115 : vector<1x128xf32> to vector<16x128xf32>
    %119 = arith.mulf %118, %117 : vector<16x128xf32>
    %cst_39 = arith.constant 9.99999996E-13 : f32
    %120 = vector.broadcast %cst_39 : f32 to vector<16x1xf32>
    %121 = arith.addf %114, %120 : vector<16x1xf32>
    %122 = math.rsqrt %121 : vector<16x1xf32>
    %123 = vector.broadcast %122 : vector<16x1xf32> to vector<16x128xf32>
    %124 = arith.mulf %119, %123 : vector<16x128xf32>
    %c0_40 = arith.constant 0 : index
    %c0_41 = arith.constant 0 : index
    %125 = vector.load %arg8[%c0_40, %c0_41] : memref<1x128xf32, #tpu.memory_space<vmem>>, vector<1x128xf32>
    %126 = vector.broadcast %125 : vector<1x128xf32> to vector<16x128xf32>
    %127 = arith.addf %124, %126 : vector<16x128xf32>
    %128 = arith.truncf %127 : vector<16x128xf32> to vector<16x128xbf16>
    %c0_42 = arith.constant 0 : index
    %c0_43 = arith.constant 0 : index
    %129 = vector.load %arg9[%c0_42, %c0_43] : memref<128x256xbf16, #tpu.memory_space<vmem>>, vector<128x256xbf16>
    %cst_44 = arith.constant dense<0.000000e+00> : vector<16x256xf32>
    %130 = tpu.matmul %128, %129, %cst_44 {dimension_numbers = #tpu.dot_dimension_numbers<[1], [0], [0], [1], [0, 0, 1, 1], [], []>} : vector<16x128xbf16>, vector<128x256xbf16>, vector<16x256xf32> -> vector<16x256xf32>
    %c0_45 = arith.constant 0 : index
    %c0_46 = arith.constant 0 : index
    %131 = vector.load %arg10[%c0_45, %c0_46] : memref<1x256xf32, #tpu.memory_space<vmem>>, vector<1x256xf32>
    %132 = vector.broadcast %131 : vector<1x256xf32> to vector<16x256xf32>
    %133 = arith.addf %130, %132 : vector<16x256xf32>
    %cst_47 = arith.constant 0.000000e+00 : f32
    %134 = vector.broadcast %cst_47 : f32 to vector<16x256xf32>
    %135 = arith.maximumf %133, %134 : vector<16x256xf32>
    %136 = arith.truncf %135 : vector<16x256xf32> to vector<16x256xbf16>
    %c0_48 = arith.constant 0 : index
    %c0_49 = arith.constant 0 : index
    %137 = vector.load %arg11[%c0_48, %c0_49] : memref<256x128xbf16, #tpu.memory_space<vmem>>, vector<256x128xbf16>
    %cst_50 = arith.constant dense<0.000000e+00> : vector<16x128xf32>
    %138 = tpu.matmul %136, %137, %cst_50 {dimension_numbers = #tpu.dot_dimension_numbers<[1], [0], [0], [1], [0, 0, 1, 1], [], []>} : vector<16x256xbf16>, vector<256x128xbf16>, vector<16x128xf32> -> vector<16x128xf32>
    %c0_51 = arith.constant 0 : index
    %c0_52 = arith.constant 0 : index
    %139 = vector.load %arg12[%c0_51, %c0_52] : memref<1x128xf32, #tpu.memory_space<vmem>>, vector<1x128xf32>
    %140 = vector.broadcast %139 : vector<1x128xf32> to vector<16x128xf32>
    %141 = arith.addf %138, %140 : vector<16x128xf32>
    %142 = arith.addf %141, %127 : vector<16x128xf32>
    %cst_53 = arith.constant dense<0.000000e+00> : vector<16xf32>
    %143 = vector.multi_reduction <add>, %142, %cst_53 [1] : vector<16x128xf32> to vector<16xf32>
    %144 = vector.shape_cast %143 : vector<16xf32> to vector<16x1xf32>
    %cst_54 = arith.constant 1.280000e+02 : f32
    %145 = vector.broadcast %cst_54 : f32 to vector<16x1xf32>
    %146 = arith.divf %144, %145 : vector<16x1xf32>
    %147 = vector.broadcast %146 : vector<16x1xf32> to vector<16x128xf32>
    %148 = arith.subf %142, %147 : vector<16x128xf32>
    %149 = arith.mulf %148, %148 : vector<16x128xf32>
    %cst_55 = arith.constant dense<0.000000e+00> : vector<16xf32>
    %150 = vector.multi_reduction <add>, %149, %cst_55 [1] : vector<16x128xf32> to vector<16xf32>
    %151 = vector.shape_cast %150 : vector<16xf32> to vector<16x1xf32>
    %cst_56 = arith.constant 1.280000e+02 : f32
    %152 = vector.broadcast %cst_56 : f32 to vector<16x1xf32>
    %153 = arith.divf %151, %152 : vector<16x1xf32>
    %c0_57 = arith.constant 0 : index
    %c0_58 = arith.constant 0 : index
    %154 = vector.load %arg13[%c0_57, %c0_58] : memref<1x128xf32, #tpu.memory_space<vmem>>, vector<1x128xf32>
    %155 = vector.broadcast %146 : vector<16x1xf32> to vector<16x128xf32>
    %156 = arith.subf %142, %155 : vector<16x128xf32>
    %157 = vector.broadcast %154 : vector<1x128xf32> to vector<16x128xf32>
    %158 = arith.mulf %157, %156 : vector<16x128xf32>
    %cst_59 = arith.constant 9.99999996E-13 : f32
    %159 = vector.broadcast %cst_59 : f32 to vector<16x1xf32>
    %160 = arith.addf %153, %159 : vector<16x1xf32>
    %161 = math.rsqrt %160 : vector<16x1xf32>
    %162 = vector.broadcast %161 : vector<16x1xf32> to vector<16x128xf32>
    %163 = arith.mulf %158, %162 : vector<16x128xf32>
    %c0_60 = arith.constant 0 : index
    %c0_61 = arith.constant 0 : index
    %164 = vector.load %arg14[%c0_60, %c0_61] : memref<1x128xf32, #tpu.memory_space<vmem>>, vector<1x128xf32>
    %165 = vector.broadcast %164 : vector<1x128xf32> to vector<16x128xf32>
    %166 = arith.addf %163, %165 : vector<16x128xf32>
    %c0_62 = arith.constant 0 : index
    %c0_63 = arith.constant 0 : index
    %c0_64 = arith.constant 0 : index
    %167 = vector.load %arg15[%c0_62, %c0_63, %c0_64] : memref<1x16x128xf32, #tpu.memory_space<vmem>>, vector<1x16x128xf32>
    %168 = vector.shape_cast %167 : vector<1x16x128xf32> to vector<16x128xf32>
    %169 = vector.shape_cast %166 : vector<16x128xf32> to vector<1x16x128xf32>
    tpu.vector_store %arg15[%c0_62, %c0_63, %c0_64], %169 {strides = array<i32>} : memref<1x16x128xf32, #tpu.memory_space<vmem>>, vector<1x16x128xf32>,
    return
  }
  func.func @transform_0(%arg0: i32) -> (i32, i32, i32) {
    %c0_i32 = arith.constant 0 : i32
    %c0_i32_0 = arith.constant 0 : i32
    %c0_i32_1 = arith.constant 0 : i32
    return %arg0, %c0_i32, %c0_i32_0 : i32, i32, i32
  }
  func.func @transform_1(%arg0: i32) -> (i32, i32, i32) {
    %c0_i32 = arith.constant 0 : i32
    %c0_i32_0 = arith.constant 0 : i32
    %c0_i32_1 = arith.constant 0 : i32
    return %arg0, %c0_i32, %c0_i32_0 : i32, i32, i32
  }
  func.func @transform_2(%arg0: i32) -> (i32, i32) {
    %c0_i32 = arith.constant 0 : i32
    %c0_i32_0 = arith.constant 0 : i32
    %c0_i32_1 = arith.constant 0 : i32
    return %c0_i32, %c0_i32_0 : i32, i32
  }
  func.func @transform_3(%arg0: i32) -> (i32, i32) {
    %c0_i32 = arith.constant 0 : i32
    %c0_i32_0 = arith.constant 0 : i32
    %c0_i32_1 = arith.constant 0 : i32
    return %c0_i32, %c0_i32_0 : i32, i32
  }
  func.func @transform_4(%arg0: i32) -> (i32, i32) {
    %c0_i32 = arith.constant 0 : i32
    %c0_i32_0 = arith.constant 0 : i32
    %c0_i32_1 = arith.constant 0 : i32
    return %c0_i32, %c0_i32_0 : i32, i32
  }
  func.func @transform_5(%arg0: i32) -> (i32, i32) {
    %c0_i32 = arith.constant 0 : i32
    %c0_i32_0 = arith.constant 0 : i32
    %c0_i32_1 = arith.constant 0 : i32
    return %c0_i32, %c0_i32_0 : i32, i32
  }
  func.func @transform_6(%arg0: i32) -> (i32, i32) {
    %c0_i32 = arith.constant 0 : i32
    %c0_i32_0 = arith.constant 0 : i32
    %c0_i32_1 = arith.constant 0 : i32
    return %c0_i32, %c0_i32_0 : i32, i32
  }
  func.func @transform_7(%arg0: i32) -> (i32, i32) {
    %c0_i32 = arith.constant 0 : i32
    %c0_i32_0 = arith.constant 0 : i32
    %c0_i32_1 = arith.constant 0 : i32
    return %c0_i32, %c0_i32_0 : i32, i32
  }
  func.func @transform_8(%arg0: i32) -> (i32, i32) {
    %c0_i32 = arith.constant 0 : i32
    %c0_i32_0 = arith.constant 0 : i32
    %c0_i32_1 = arith.constant 0 : i32
    return %c0_i32, %c0_i32_0 : i32, i32
  }
  func.func @transform_9(%arg0: i32) -> (i32, i32) {
    %c0_i32 = arith.constant 0 : i32
    %c0_i32_0 = arith.constant 0 : i32
    %c0_i32_1 = arith.constant 0 : i32
    return %c0_i32, %c0_i32_0 : i32, i32
  }
  func.func @transform_10(%arg0: i32) -> (i32, i32) {
    %c0_i32 = arith.constant 0 : i32
    %c0_i32_0 = arith.constant 0 : i32
    %c0_i32_1 = arith.constant 0 : i32
    return %c0_i32, %c0_i32_0 : i32, i32
  }
  func.func @transform_11(%arg0: i32) -> (i32, i32) {
    %c0_i32 = arith.constant 0 : i32
    %c0_i32_0 = arith.constant 0 : i32
    %c0_i32_1 = arith.constant 0 : i32
    return %c0_i32, %c0_i32_0 : i32, i32
  }
  func.func @transform_12(%arg0: i32) -> (i32, i32) {
    %c0_i32 = arith.constant 0 : i32
    %c0_i32_0 = arith.constant 0 : i32
    %c0_i32_1 = arith.constant 0 : i32
    return %c0_i32, %c0_i32_0 : i32, i32
  }
  func.func @transform_13(%arg0: i32) -> (i32, i32) {
    %c0_i32 = arith.constant 0 : i32
    %c0_i32_0 = arith.constant 0 : i32
    %c0_i32_1 = arith.constant 0 : i32
    return %c0_i32, %c0_i32_0 : i32, i32
  }
  func.func @transform_14(%arg0: i32) -> (i32, i32, i32) {
    %c0_i32 = arith.constant 0 : i32
    %c0_i32_0 = arith.constant 0 : i32
    %c0_i32_1 = arith.constant 0 : i32
    return %arg0, %c0_i32, %c0_i32_0 : i32, i32, i32
  }
}

</mosaic_0001>

<llo_original>
// kernel: encoder_forward.2
$region0: #{encoder_forward.2}
  #allocation0 [shape = 'u32[]', space=smem, size = 0x4, offset = 0x4, fixed_abs, tag = 'smem constant byte address 0x4 - core index']
  #allocation1 [shape = 'u32[144,128]{1,0:T(1,128)}', space=vmem, size = 0x12000, scoped, tag = 'internal scratch']
  %s0 = inlined_call_operand.vmem [shape: bf16[2,16,128], index: 0, kind: input, shape index: {}]
  %s1 = inlined_call_operand.vmem [shape: f32[2,1,16], index: 1, kind: input, shape index: {}]
  %s2 = inlined_call_operand.vmem [shape: bf16[128,384], index: 2, kind: input, shape index: {}]
  %s3 = inlined_call_operand.vmem [shape: f32[1,384], index: 3, kind: input, shape index: {}]
  %s4 = inlined_call_operand.hbm [shape: bf16[128,128], index: 4, kind: input, shape index: {}]
  %s5 = inlined_call_operand.vmem [shape: f32[1,128], index: 5, kind: input, shape index: {}]
  %s6 = inlined_call_operand.vmem [shape: f32[1,128], index: 6, kind: input, shape index: {}]
  %s7 = inlined_call_operand.vmem [shape: f32[1,128], index: 7, kind: input, shape index: {}]
  %s8 = inlined_call_operand.vmem [shape: bf16[128,256], index: 8, kind: input, shape index: {}]
  %s9 = inlined_call_operand.vmem [shape: f32[1,256], index: 9, kind: input, shape index: {}]
  %s10 = inlined_call_operand.vmem [shape: bf16[256,128], index: 10, kind: input, shape index: {}]
  %s11 = inlined_call_operand.hbm [shape: f32[1,128], index: 11, kind: input, shape index: {}]
  %s12 = inlined_call_operand.hbm [shape: f32[1,128], index: 12, kind: input, shape index: {}]
  %s13 = inlined_call_operand.hbm [shape: f32[1,128], index: 13, kind: input, shape index: {}]
  %s14 = inlined_call_operand.vmem [shape: bf16[2,16,128], index: 14, kind: output, shape index: {}]
  %s15 = sld [smem:[#allocation0]]
  $region105: #{encoder_forward.2} parent=0
    _
  %s17 = ssub.s32 1, %s15
  %s18 = scalar_select 0, %s17, %s15
  $region1: #{encoder_forward.2} parent=0
    #allocation2 [shape = 'u8[32768]{0}', space=vmem, size = 0x8000, scoped, tag = 'input window, operand 4, single buffered']
    #allocation3 [shape = 's32[2]{0}', space=sflag, size = 0x8, scoped, tag = 'scoped memory for encoder_forward.2']
    #allocation4 [shape = 'u8[512]{0}', space=vmem, size = 0x400, scoped, tag = 'input window, operand 11, single buffered']
    #allocation5 [shape = 's32[1]{0}', space=sflag, size = 0x4, scoped, tag = 'scoped memory for encoder_forward.2']
    #allocation6 [shape = 'u8[512]{0}', space=vmem, size = 0x400, scoped, tag = 'input window, operand 12, single buffered']
    #allocation7 [shape = 'u8[512]{0}', space=vmem, size = 0x400, scoped, tag = 'input window, operand 13, single buffered']
    #allocation8 [shape = 's32[1]{0}', space=sflag, size = 0x4, scoped, tag = 'scoped memory for encoder_forward.2']
    %19 = vsyncpa [#allocation3], 0
    %20 = vsyncpa [#allocation5], 0
    %21 = vsyncpa [#allocation8], 0
    loop: start=0, step=1, limit=4
    $region2: #{encoder_forward.2} parent=1 // loop_pre_header
      _
    $region3: #{encoder_forward.2} parent=1 // loop_header
      %s23 = sphi 0, %s27
      %p24 = scmp.ge.s32.totalorder %s23, 4
      %s33 = sphi 0, %s35
      %s36 = sphi 0, %s33
      %s37 = sphi 0, %s36
      %s53 = sphi 0, %s37
      %s59 = sphi 0, %s61
      %s62 = sphi 0, %s59
      %s63 = sphi 0, %s62
      %s79 = sphi 0, %s63
      %s83 = sphi 0, %s83
      %s85 = sphi 0, %s83
      %s86 = sphi 0, %s85
      %s100 = sphi 0, %s86
      %s104 = sphi 0, %s104
      %s106 = sphi 0, %s104
      %s107 = sphi 0, %s106
      %s121 = sphi 0, %s107
      %s125 = sphi 0, %s125
      %s127 = sphi 0, %s125
      %s128 = sphi 0, %s127
      %s142 = sphi 0, %s128
      %s146 = sphi 0, %s146
      %s148 = sphi 0, %s146
      %s149 = sphi 0, %s148
      %s163 = sphi 0, %s149
      %s167 = sphi 0, %s167
      %s169 = sphi 0, %s167
      %s170 = sphi 0, %s169
      %s184 = sphi 0, %s170
      %s188 = sphi 0, %s188
      %s190 = sphi 0, %s188
      %s191 = sphi 0, %s190
      %s205 = sphi 0, %s191
      %s209 = sphi 0, %s209
      %s211 = sphi 0, %s209
      %s212 = sphi 0, %s211
      %s226 = sphi 0, %s212
      %s230 = sphi 0, %s230
      %s232 = sphi 0, %s230
      %s233 = sphi 0, %s232
      %s247 = sphi 0, %s233
      %s251 = sphi 0, %s251
      %s253 = sphi 0, %s251
      %s254 = sphi 0, %s253
      %s268 = sphi 0, %s254
      %s272 = sphi 0, %s272
      %s274 = sphi 0, %s272
      %s275 = sphi 0, %s274
      %s289 = sphi 0, %s275
      %s293 = sphi 0, %s293
      %s295 = sphi 0, %s293
      %s296 = sphi 0, %s295
      %s310 = sphi 0, %s296
      %s314 = sphi 0, %s314
      %s316 = sphi 0, %s314
      %s317 = sphi 0, %s316
      %s331 = sphi 0, %s317
      %s337 = sphi 0, %s339
      %s340 = sphi 0, %s337
      %s341 = sphi 0, %s340
      %s357 = sphi 0, %s341
    $region4: #{encoder_forward.2} parent=1 // loop_header_branch
      %26 = sbr.rel (%p24) target = $region8
    $region5: #{encoder_forward.2} parent=1 // loop_body
      %s28 = ssub.s32 %s23, 1
      %s29 = ssub.s32 %s23, 2
      %s30 = sadd.s32 %s23, 1
      %s31 = ssub.s32 %s23, %s30
      %p32 = scmp.eq.s32.totalorder %s31, 0
      %s34 = sadd.s32 %s33, 1
      %s35 = scalar_select %p32, %s33, %s34
      %p38 = pneg %p32
      %p39 = scmp.eq.s32.totalorder %s23, 1
      %p40 = por %p38, %p39
      %p41 = scmp.ne.s32.totalorder %s33, %s36
      %p42 = scmp.eq.s32.totalorder %s23, 0
      %p43 = por %p41, %p42
      %p44 = scmp.ne.s32.totalorder %s33, %s36
      %p45 = scmp.eq.s32.totalorder %s28, 1
      %p46 = por %p44, %p45
      %p47 = scmp.ne.s32.totalorder %s36, %s37
      %p48 = scmp.eq.s32.totalorder %s28, 0
      %p49 = por %p47, %p48
      %p50 = scmp.ne.s32.totalorder %s36, %s37
      %p51 = scmp.eq.s32.totalorder %s29, 1
      %p52 = por %p50, %p51
      %p54 = scmp.ne.s32.totalorder %s37, %s53
      %p55 = scmp.eq.s32.totalorder %s29, 0
      %p56 = por %p54, %p55
      %s57 = ssub.s32 %s23, %s30
      %p58 = scmp.eq.s32.totalorder %s57, 0
      %s60 = sadd.s32 %s59, 1
      %s61 = scalar_select %p58, %s59, %s60
      %p64 = pneg %p58
      %p65 = scmp.eq.s32.totalorder %s23, 1
      %p66 = por %p64, %p65
      %p67 = scmp.ne.s32.totalorder %s59, %s62
      %p68 = scmp.eq.s32.totalorder %s23, 0
      %p69 = por %p67, %p68
      %p70 = scmp.ne.s32.totalorder %s59, %s62
      %p71 = scmp.eq.s32.totalorder %s28, 1
      %p72 = por %p70, %p71
      %p73 = scmp.ne.s32.totalorder %s62, %s63
      %p74 = scmp.eq.s32.totalorder %s28, 0
      %p75 = por %p73, %p74
      %p76 = scmp.ne.s32.totalorder %s62, %s63
      %p77 = scmp.eq.s32.totalorder %s29, 1
      %p78 = por %p76, %p77
      %p80 = scmp.ne.s32.totalorder %s63, %s79
      %p81 = scmp.eq.s32.totalorder %s29, 0
      %p82 = por %p80, %p81
      %s84 = sadd.s32 %s83, 1
      %p87 = scmp.eq.s32.totalorder %s23, 1
      %p88 = scmp.ne.s32.totalorder %s83, %s85
      %p89 = scmp.eq.s32.totalorder %s23, 0
      %p90 = por %p88, %p89
      %p91 = scmp.ne.s32.totalorder %s83, %s85
      %p92 = scmp.eq.s32.totalorder %s28, 1
      %p93 = por %p91, %p92
      %p94 = scmp.ne.s32.totalorder %s85, %s86
      %p95 = scmp.eq.s32.totalorder %s28, 0
      %p96 = por %p94, %p95
      %p97 = scmp.ne.s32.totalorder %s85, %s86
      %p98 = scmp.eq.s32.totalorder %s29, 1
      %p99 = por %p97, %p98
      %p101 = scmp.ne.s32.totalorder %s86, %s100
      %p102 = scmp.eq.s32.totalorder %s29, 0
      %p103 = por %p101, %p102
      %s105 = sadd.s32 %s104, 1
      %p108 = scmp.eq.s32.totalorder %s23, 1
      %p109 = scmp.ne.s32.totalorder %s104, %s106
      %p110 = scmp.eq.s32.totalorder %s23, 0
      %p111 = por %p109, %p110
      %p112 = scmp.ne.s32.totalorder %s104, %s106
      %p113 = scmp.eq.s32.totalorder %s28, 1
      %p114 = por %p112, %p113
      %p115 = scmp.ne.s32.totalorder %s106, %s107
      %p116 = scmp.eq.s32.totalorder %s28, 0
      %p117 = por %p115, %p116
      %p118 = scmp.ne.s32.totalorder %s106, %s107
      %p119 = scmp.eq.s32.totalorder %s29, 1
      %p120 = por %p118, %p119
      %p122 = scmp.ne.s32.totalorder %s107, %s121
      %p123 = scmp.eq.s32.totalorder %s29, 0
      %p124 = por %p122, %p123
      %s126 = sadd.s32 %s125, 1
      %p129 = scmp.eq.s32.totalorder %s23, 1
      %p130 = scmp.ne.s32.totalorder %s125, %s127
      %p131 = scmp.eq.s32.totalorder %s23, 0
      %p132 = por %p130, %p131
      %p133 = scmp.ne.s32.totalorder %s125, %s127
      %p134 = scmp.eq.s32.totalorder %s28, 1
      %p135 = por %p133, %p134
      %p136 = scmp.ne.s32.totalorder %s127, %s128
      %p137 = scmp.eq.s32.totalorder %s28, 0
      %p138 = por %p136, %p137
      %p139 = scmp.ne.s32.totalorder %s127, %s128
      %p140 = scmp.eq.s32.totalorder %s29, 1
      %p141 = por %p139, %p140
      %p143 = scmp.ne.s32.totalorder %s128, %s142
      %p144 = scmp.eq.s32.totalorder %s29, 0
      %p145 = por %p143, %p144
      %s147 = sadd.s32 %s146, 1
      %p150 = scmp.eq.s32.totalorder %s23, 1
      %p151 = scmp.ne.s32.totalorder %s146, %s148
      %p152 = scmp.eq.s32.totalorder %s23, 0
      %p153 = por %p151, %p152
      %p154 = scmp.ne.s32.totalorder %s146, %s148
      %p155 = scmp.eq.s32.totalorder %s28, 1
      %p156 = por %p154, %p155
      %p157 = scmp.ne.s32.totalorder %s148, %s149
      %p158 = scmp.eq.s32.totalorder %s28, 0
      %p159 = por %p157, %p158
      %p160 = scmp.ne.s32.totalorder %s148, %s149
      %p161 = scmp.eq.s32.totalorder %s29, 1
      %p162 = por %p160, %p161
      %p164 = scmp.ne.s32.totalorder %s149, %s163
      %p165 = scmp.eq.s32.totalorder %s29, 0
      %p166 = por %p164, %p165
      %s168 = sadd.s32 %s167, 1
      %p171 = scmp.eq.s32.totalorder %s23, 1
      %p172 = scmp.ne.s32.totalorder %s167, %s169
      %p173 = scmp.eq.s32.totalorder %s23, 0
      %p174 = por %p172, %p173
      %p175 = scmp.ne.s32.totalorder %s167, %s169
      %p176 = scmp.eq.s32.totalorder %s28, 1
      %p177 = por %p175, %p176
      %p178 = scmp.ne.s32.totalorder %s169, %s170
      %p179 = scmp.eq.s32.totalorder %s28, 0
      %p180 = por %p178, %p179
      %p181 = scmp.ne.s32.totalorder %s169, %s170
      %p182 = scmp.eq.s32.totalorder %s29, 1
      %p183 = por %p181, %p182
      %p185 = scmp.ne.s32.totalorder %s170, %s184
      %p186 = scmp.eq.s32.totalorder %s29, 0
      %p187 = por %p185, %p186
      %s189 = sadd.s32 %s188, 1
      %p192 = scmp.eq.s32.totalorder %s23, 1
      %p193 = scmp.ne.s32.totalorder %s188, %s190
      %p194 = scmp.eq.s32.totalorder %s23, 0
      %p195 = por %p193, %p194
      %p196 = scmp.ne.s32.totalorder %s188, %s190
      %p197 = scmp.eq.s32.totalorder %s28, 1
      %p198 = por %p196, %p197
      %p199 = scmp.ne.s32.totalorder %s190, %s191
      %p200 = scmp.eq.s32.totalorder %s28, 0
      %p201 = por %p199, %p200
      %p202 = scmp.ne.s32.totalorder %s190, %s191
      %p203 = scmp.eq.s32.totalorder %s29, 1
      %p204 = por %p202, %p203
      %p206 = scmp.ne.s32.totalorder %s191, %s205
      %p207 = scmp.eq.s32.totalorder %s29, 0
      %p208 = por %p206, %p207
      %s210 = sadd.s32 %s209, 1
      %p213 = scmp.eq.s32.totalorder %s23, 1
      %p214 = scmp.ne.s32.totalorder %s209, %s211
      %p215 = scmp.eq.s32.totalorder %s23, 0
      %p216 = por %p214, %p215
      %p217 = scmp.ne.s32.totalorder %s209, %s211
      %p218 = scmp.eq.s32.totalorder %s28, 1
      %p219 = por %p217, %p218
      %p220 = scmp.ne.s32.totalorder %s211, %s212
      %p221 = scmp.eq.s32.totalorder %s28, 0
      %p222 = por %p220, %p221
      %p223 = scmp.ne.s32.totalorder %s211, %s212
      %p224 = scmp.eq.s32.totalorder %s29, 1
      %p225 = por %p223, %p224
      %p227 = scmp.ne.s32.totalorder %s212, %s226
      %p228 = scmp.eq.s32.totalorder %s29, 0
      %p229 = por %p227, %p228
      %s231 = sadd.s32 %s230, 1
      %p234 = scmp.eq.s32.totalorder %s23, 1
      %p235 = scmp.ne.s32.totalorder %s230, %s232
      %p236 = scmp.eq.s32.totalorder %s23, 0
      %p237 = por %p235, %p236
      %p238 = scmp.ne.s32.totalorder %s230, %s232
      %p239 = scmp.eq.s32.totalorder %s28, 1
      %p240 = por %p238, %p239
      %p241 = scmp.ne.s32.totalorder %s232, %s233
      %p242 = scmp.eq.s32.totalorder %s28, 0
      %p243 = por %p241, %p242
      %p244 = scmp.ne.s32.totalorder %s232, %s233
      %p245 = scmp.eq.s32.totalorder %s29, 1
      %p246 = por %p244, %p245
      %p248 = scmp.ne.s32.totalorder %s233, %s247
      %p249 = scmp.eq.s32.totalorder %s29, 0
      %p250 = por %p248, %p249
      %s252 = sadd.s32 %s251, 1
      %p255 = scmp.eq.s32.totalorder %s23, 1
      %p256 = scmp.ne.s32.totalorder %s251, %s253
      %p257 = scmp.eq.s32.totalorder %s23, 0
      %p258 = por %p256, %p257
      %p259 = scmp.ne.s32.totalorder %s251, %s253
      %p260 = scmp.eq.s32.totalorder %s28, 1
      %p261 = por %p259, %p260
      %p262 = scmp.ne.s32.totalorder %s253, %s254
      %p263 = scmp.eq.s32.totalorder %s28, 0
      %p264 = por %p262, %p263
      %p265 = scmp.ne.s32.totalorder %s253, %s254
      %p266 = scmp.eq.s32.totalorder %s29, 1
      %p267 = por %p265, %p266
      %p269 = scmp.ne.s32.totalorder %s254, %s268
      %p270 = scmp.eq.s32.totalorder %s29, 0
      %p271 = por %p269, %p270
      %s273 = sadd.s32 %s272, 1
      %p276 = scmp.eq.s32.totalorder %s23, 1
      %p277 = scmp.ne.s32.totalorder %s272, %s274
      %p278 = scmp.eq.s32.totalorder %s23, 0
      %p279 = por %p277, %p278
      %p280 = scmp.ne.s32.totalorder %s272, %s274
      %p281 = scmp.eq.s32.totalorder %s28, 1
      %p282 = por %p280, %p281
      %p283 = scmp.ne.s32.totalorder %s274, %s275
      %p284 = scmp.eq.s32.totalorder %s28, 0
      %p285 = por %p283, %p284
      %p286 = scmp.ne.s32.totalorder %s274, %s275
      %p287 = scmp.eq.s32.totalorder %s29, 1
      %p288 = por %p286, %p287
      %p290 = scmp.ne.s32.totalorder %s275, %s289
      %p291 = scmp.eq.s32.totalorder %s29, 0
      %p292 = por %p290, %p291
      %s294 = sadd.s32 %s293, 1
      %p297 = scmp.eq.s32.totalorder %s23, 1
      %p298 = scmp.ne.s32.totalorder %s293, %s295
      %p299 = scmp.eq.s32.totalorder %s23, 0
      %p300 = por %p298, %p299
      %p301 = scmp.ne.s32.totalorder %s293, %s295
      %p302 = scmp.eq.s32.totalorder %s28, 1
      %p303 = por %p301, %p302
      %p304 = scmp.ne.s32.totalorder %s295, %s296
      %p305 = scmp.eq.s32.totalorder %s28, 0
      %p306 = por %p304, %p305
      %p307 = scmp.ne.s32.totalorder %s295, %s296
      %p308 = scmp.eq.s32.totalorder %s29, 1
      %p309 = por %p307, %p308
      %p311 = scmp.ne.s32.totalorder %s296, %s310
      %p312 = scmp.eq.s32.totalorder %s29, 0
      %p313 = por %p311, %p312
      %s315 = sadd.s32 %s314, 1
      %p318 = scmp.eq.s32.totalorder %s23, 1
      %p319 = scmp.ne.s32.totalorder %s314, %s316
      %p320 = scmp.eq.s32.totalorder %s23, 0
      %p321 = por %p319, %p320
      %p322 = scmp.ne.s32.totalorder %s314, %s316
      %p323 = scmp.eq.s32.totalorder %s28, 1
      %p324 = por %p322, %p323
      %p325 = scmp.ne.s32.totalorder %s316, %s317
      %p326 = scmp.eq.s32.totalorder %s28, 0
      %p327 = por %p325, %p326
      %p328 = scmp.ne.s32.totalorder %s316, %s317
      %p329 = scmp.eq.s32.totalorder %s29, 1
      %p330 = por %p328, %p329
      %p332 = scmp.ne.s32.totalorder %s317, %s331
      %p333 = scmp.eq.s32.totalorder %s29, 0
      %p334 = por %p332, %p333
      %s335 = ssub.s32 %s23, %s30
      %p336 = scmp.eq.s32.totalorder %s335, 0
      %s338 = sadd.s32 %s337, 1
      %s339 = scalar_select %p336, %s337, %s338
      %p342 = pneg %p336
      %p343 = scmp.eq.s32.totalorder %s23, 1
      %p344 = por %p342, %p343
      %p345 = scmp.ne.s32.totalorder %s337, %s340
      %p346 = scmp.eq.s32.totalorder %s23, 0
      %p347 = por %p345, %p346
      %p348 = scmp.ne.s32.totalorder %s337, %s340
      %p349 = scmp.eq.s32.totalorder %s28, 1
      %p350 = por %p348, %p349
      %p351 = scmp.ne.s32.totalorder %s340, %s341
      %p352 = scmp.eq.s32.totalorder %s28, 0
      %p353 = por %p351, %p352
      %p354 = scmp.ne.s32.totalorder %s340, %s341
      %p355 = scmp.eq.s32.totalorder %s29, 1
      %p356 = por %p354, %p355
      %p358 = scmp.ne.s32.totalorder %s341, %s357
      %p359 = scmp.eq.s32.totalorder %s29, 0
      %p360 = por %p358, %p359
      %p361 = scmp.le.s32.totalorder 1, %s23
      %p362 = scmp.lt.s32.totalorder %s23, 3
      %p363 = pnand %p361, %p362
      %p364 = pneg %p363
      // Predicated region
      $region9: #{encoder_forward.2} parent=5 // pred_check
        _
      $region10: #{encoder_forward.2} parent=5 // pred_check_branch
        %366 = sbr.rel (%p363) target = $region12
      $region11: #{encoder_forward.2} parent=5 // pred_region
        %s367 = ssub.s32 %s23, 1
        // Predicated region
        $region13: #{encoder_forward.2} parent=11 // pred_check
          %p368 = pneg %p96
        $region14: #{encoder_forward.2} parent=11 // pred_check_branch
          %370 = sbr.rel (%p368) target = $region16
        $region15: #{encoder_forward.2} parent=11 // pred_region
          _
        $region16: #{encoder_forward.2} parent=11 // pred_fallthru
          _
        // Predicated region
        $region17: #{encoder_forward.2} parent=11 // pred_check
          %p371 = pneg %p117
        $region18: #{encoder_forward.2} parent=11 // pred_check_branch
          %373 = sbr.rel (%p371) target = $region20
        $region19: #{encoder_forward.2} parent=11 // pred_region
          _
        $region20: #{encoder_forward.2} parent=11 // pred_fallthru
          _
        // Predicated region
        $region21: #{encoder_forward.2} parent=11 // pred_check
          %p374 = pneg %p138
        $region22: #{encoder_forward.2} parent=11 // pred_check_branch
          %376 = sbr.rel (%p374) target = $region24
        $region23: #{encoder_forward.2} parent=11 // pred_region
          %s378 = ssub.s32 1024, 1024
          %379 = vsyncadd [#allocation3], %s378
          %s380 = sshll.u32 [#allocation2], 4
          %s381 = int_to_ptr.vmem [resolvable:$true] %s380
          %386 = dma.hbm_to_vmem [thread:$0]  %s4, 1024, %s381, [#allocation3], 64, 64, 4
        $region24: #{encoder_forward.2} parent=11 // pred_fallthru
          _
        // Predicated region
        $region25: #{encoder_forward.2} parent=11 // pred_check
          %p387 = pneg %p159
        $region26: #{encoder_forward.2} parent=11 // pred_check_branch
          %389 = sbr.rel (%p387) target = $region28
        $region27: #{encoder_forward.2} parent=11 // pred_region
          _
        $region28: #{encoder_forward.2} parent=11 // pred_fallthru
          _
        // Predicated region
        $region29: #{encoder_forward.2} parent=11 // pred_check
          %p390 = pneg %p180
        $region30: #{encoder_forward.2} parent=11 // pred_check_branch
          %392 = sbr.rel (%p390) target = $region32
        $region31: #{encoder_forward.2} parent=11 // pred_region
          _
        $region32: #{encoder_forward.2} parent=11 // pred_fallthru
          _
        // Predicated region
        $region33: #{encoder_forward.2} parent=11 // pred_check
          %p393 = pneg %p201
        $region34: #{encoder_forward.2} parent=11 // pred_check_branch
          %395 = sbr.rel (%p393) target = $region36
        $region35: #{encoder_forward.2} parent=11 // pred_region
          _
        $region36: #{encoder_forward.2} parent=11 // pred_fallthru
          _
        // Predicated region
        $region37: #{encoder_forward.2} parent=11 // pred_check
          %p396 = pneg %p222
        $region38: #{encoder_forward.2} parent=11 // pred_check_branch
          %398 = sbr.rel (%p396) target = $region40
        $region39: #{encoder_forward.2} parent=11 // pred_region
          _
        $region40: #{encoder_forward.2} parent=11 // pred_fallthru
          _
        // Predicated region
        $region41: #{encoder_forward.2} parent=11 // pred_check
          %p399 = pneg %p243
        $region42: #{encoder_forward.2} parent=11 // pred_check_branch
          %401 = sbr.rel (%p399) target = $region44
        $region43: #{encoder_forward.2} parent=11 // pred_region
          _
        $region44: #{encoder_forward.2} parent=11 // pred_fallthru
          _
        // Predicated region
        $region45: #{encoder_forward.2} parent=11 // pred_check
          %p402 = pneg %p264
        $region46: #{encoder_forward.2} parent=11 // pred_check_branch
          %404 = sbr.rel (%p402) target = $region48
        $region47: #{encoder_forward.2} parent=11 // pred_region
          _
        $region48: #{encoder_forward.2} parent=11 // pred_fallthru
          _
        // Predicated region
        $region49: #{encoder_forward.2} parent=11 // pred_check
          %p405 = pneg %p285
        $region50: #{encoder_forward.2} parent=11 // pred_check_branch
          %407 = sbr.rel (%p405) target = $region52
        $region51: #{encoder_forward.2} parent=11 // pred_region
          %s409 = ssub.s32 16, 16
          %410 = vsyncadd [#allocation5], %s409
          %s412 = sshll.u32 [#allocation4], 4
          %s413 = int_to_ptr.vmem [resolvable:$true] %s412
          %415 = dma.hbm_to_vmem [thread:$0]  %s11, 16, %s413, [#allocation5]
        $region52: #{encoder_forward.2} parent=11 // pred_fallthru
          _
        // Predicated region
        $region53: #{encoder_forward.2} parent=11 // pred_check
          %p416 = pneg %p306
        $region54: #{encoder_forward.2} parent=11 // pred_check_branch
          %418 = sbr.rel (%p416) target = $region56
        $region55: #{encoder_forward.2} parent=11 // pred_region
          %s420 = ssub.s32 16, 16
          %421 = vsyncadd [#allocation5], %s420
          %s423 = sshll.u32 [#allocation6], 4
          %s424 = int_to_ptr.vmem [resolvable:$true] %s423
          %426 = dma.hbm_to_vmem [thread:$0]  %s12, 16, %s424, [#allocation5]
        $region56: #{encoder_forward.2} parent=11 // pred_fallthru
          _
        // Predicated region
        $region57: #{encoder_forward.2} parent=11 // pred_check
          %p427 = pneg %p327
        $region58: #{encoder_forward.2} parent=11 // pred_check_branch
          %429 = sbr.rel (%p427) target = $region60
        $region59: #{encoder_forward.2} parent=11 // pred_region
          %s431 = ssub.s32 16, 16
          %432 = vsyncadd [#allocation8], %s431
          %s434 = sshll.u32 [#allocation7], 4
          %s435 = int_to_ptr.vmem [resolvable:$true] %s434
          %437 = dma.hbm_to_vmem [thread:$0]  %s13, 16, %s435, [#allocation8]
        $region60: #{encoder_forward.2} parent=11 // pred_fallthru
          _
      $region12: #{encoder_forward.2} parent=5 // pred_fallthru
        _
      %p438 = scmp.lt.s32.totalorder %s23, 2
      // Predicated region
      $region61: #{encoder_forward.2} parent=5 // pred_check
        %p439 = pneg %p438
      $region62: #{encoder_forward.2} parent=5 // pred_check_branch
        %441 = sbr.rel (%p439) target = $region64
      $region63: #{encoder_forward.2} parent=5 // pred_region
        // Predicated region
        $region65: #{encoder_forward.2} parent=63 // pred_check
          %p442 = pneg %p43
        $region66: #{encoder_forward.2} parent=63 // pred_check_branch
          %444 = sbr.rel (%p442) target = $region68
        $region67: #{encoder_forward.2} parent=63 // pred_region
          %p445 = scmp.lt.s32.totalorder %s23, 1
          %s446 = scalar_select %p445, %s23, 1
          %s447 = smul.addr %s446, 2
          %s448 = smul.addr %s447, 4
          %s449 = scalar_lea.vmem %s0, %s448
        $region68: #{encoder_forward.2} parent=63 // pred_fallthru
          _
        // Predicated region
        $region69: #{encoder_forward.2} parent=63 // pred_check
          %p450 = pneg %p69
        $region70: #{encoder_forward.2} parent=63 // pred_check_branch
          %452 = sbr.rel (%p450) target = $region72
        $region71: #{encoder_forward.2} parent=63 // pred_region
          %p453 = scmp.lt.s32.totalorder %s23, 1
          %s454 = scalar_select %p453, %s23, 1
          %s455 = scalar_lea.vmem %s1, %s454
        $region72: #{encoder_forward.2} parent=63 // pred_fallthru
          _
      $region64: #{encoder_forward.2} parent=5 // pred_fallthru
        _
      %p456 = scmp.le.s32.totalorder 1, %s23
      %p457 = scmp.lt.s32.totalorder %s23, 3
      %p458 = pnand %p456, %p457
      %p459 = pneg %p458
      // Predicated region
      $region73: #{encoder_forward.2} parent=5 // pred_check
        _
      $region74: #{encoder_forward.2} parent=5 // pred_check_branch
        %461 = sbr.rel (%p458) target = $region76
      $region75: #{encoder_forward.2} parent=5 // pred_region
        %s462 = ssub.s32 %s23, 1
        // Predicated region
        $region77: #{encoder_forward.2} parent=75 // pred_check
          %p463 = pneg %p138
        $region78: #{encoder_forward.2} parent=75 // pred_check_branch
          %465 = sbr.rel (%p463) target = $region80
        $region79: #{encoder_forward.2} parent=75 // pred_region
          %466 = dma.done [#allocation3], 1024
        $region80: #{encoder_forward.2} parent=75 // pred_fallthru
          _
        // Predicated region
        $region81: #{encoder_forward.2} parent=75 // pred_check
          %p467 = pneg %p285
        $region82: #{encoder_forward.2} parent=75 // pred_check_branch
          %469 = sbr.rel (%p467) target = $region84
        $region83: #{encoder_forward.2} parent=75 // pred_region
          %470 = dma.done [#allocation5], 16
        $region84: #{encoder_forward.2} parent=75 // pred_fallthru
          _
        // Predicated region
        $region85: #{encoder_forward.2} parent=75 // pred_check
          %p471 = pneg %p306
        $region86: #{encoder_forward.2} parent=75 // pred_check_branch
          %473 = sbr.rel (%p471) target = $region88
        $region87: #{encoder_forward.2} parent=75 // pred_region
          %474 = dma.done [#allocation5], 16
        $region88: #{encoder_forward.2} parent=75 // pred_fallthru
          _
        // Predicated region
        $region89: #{encoder_forward.2} parent=75 // pred_check
          %p475 = pneg %p327
        $region90: #{encoder_forward.2} parent=75 // pred_check_branch
          %477 = sbr.rel (%p475) target = $region92
        $region91: #{encoder_forward.2} parent=75 // pred_region
          %478 = dma.done [#allocation8], 16
        $region92: #{encoder_forward.2} parent=75 // pred_fallthru
          _
        %p479 = scmp.lt.s32.totalorder %s28, 1
        %s480 = scalar_select %p479, %s28, 1
        %s481 = smul.addr %s480, 2
        %s482 = smul.addr %s481, 4
        %s483 = scalar_lea.vmem %s0, %s482
        %p484 = pneg %p49
        %p485 = pneg %p46
        %p486 = scmp.lt.s32.totalorder %s28, 1
        %s487 = scalar_select %p486, %s28, 1
        %s488 = scalar_lea.vmem %s1, %s487
        %p489 = pneg %p75
        %p490 = pneg %p72
        %p491 = pneg %p96
        %p492 = pneg %p93
        %p493 = pneg %p117
        %p494 = pneg %p114
        %p495 = pneg %p138
        %p496 = pneg %p135
        %p497 = pneg %p159
        %p498 = pneg %p156
        %p499 = pneg %p180
        %p500 = pneg %p177
        %p501 = pneg %p201
        %p502 = pneg %p198
        %p503 = pneg %p222
        %p504 = pneg %p219
        %p505 = pneg %p243
        %p506 = pneg %p240
        %p507 = pneg %p264
        %p508 = pneg %p261
        %p509 = pneg %p285
        %p510 = pneg %p282
        %p511 = pneg %p306
        %p512 = pneg %p303
        %p513 = pneg %p327
        %p514 = pneg %p324
        %p515 = pneg %p353
        %p516 = pneg %p350
        %p517 = scmp.lt.s32.totalorder %s28, 1
        %s518 = scalar_select %p517, %s28, 1
        %s519 = smul.addr %s518, 2
        %s520 = smul.addr %s519, 4
        %s521 = scalar_lea.vmem %s14, %s520
        %p522 = scmp.lt.s32.totalorder %s28, 1
        %s523 = scalar_select %p522, %s28, 1
        %s524 = smul.addr %s523, 2
        %s525 = smul.addr %s524, 4
        %s526 = scalar_lea.vmem %s0, %s525
        %p527 = scmp.lt.s32.totalorder %s28, 1
        %s528 = scalar_select %p527, %s28, 1
        %s529 = scalar_lea.vmem %s1, %s528
        %p530 = scmp.lt.s32.totalorder %s28, 1
        %s531 = scalar_select %p530, %s28, 1
        %s532 = smul.addr %s531, 2
        %s533 = smul.addr %s532, 4
        %s534 = scalar_lea.vmem %s14, %s533
        %v536 = vld [vmem:[%s526] sm:$0xf]
        %v537 = vld [vmem:[%s526 + $0x4] sm:$0xf]
        %v538 = vunpack.c.l.bf16 %v536
        %v539 = vunpack.c.l.bf16 %v537
        %v540 = vld [vmem:[%s2] sm:$0xff]
        %v541 = vld [vmem:[%s2 + $0x8] sm:$0xf]
        %v542 = vld [vmem:[%s2 + $0xc] sm:$0xff]
        %v543 = vld [vmem:[%s2 + $0x14] sm:$0xf]
        %v544 = vld [vmem:[%s2 + $0x18] sm:$0xff]
        %v545 = vld [vmem:[%s2 + $0x20] sm:$0xf]
        %v546 = vld [vmem:[%s2 + $0x24] sm:$0xff]
        %v547 = vld [vmem:[%s2 + $0x2c] sm:$0xf]
        %v548 = vld [vmem:[%s2 + $0x30] sm:$0xff]
        %v549 = vld [vmem:[%s2 + $0x38] sm:$0xf]
        %v550 = vld [vmem:[%s2 + $0x3c] sm:$0xff]
        %v551 = vld [vmem:[%s2 + $0x44] sm:$0xf]
        %v552 = vld [vmem:[%s2 + $0x48] sm:$0xff]
        %v553 = vld [vmem:[%s2 + $0x50] sm:$0xf]
        %v554 = vld [vmem:[%s2 + $0x54] sm:$0xff]
        %v555 = vld [vmem:[%s2 + $0x5c] sm:$0xf]
        %v556 = vld [vmem:[%s2 + $0x60] sm:$0xff]
        %v557 = vld [vmem:[%s2 + $0x68] sm:$0xf]
        %v558 = vld [vmem:[%s2 + $0x6c] sm:$0xff]
        %v559 = vld [vmem:[%s2 + $0x74] sm:$0xf]
        %v560 = vld [vmem:[%s2 + $0x78] sm:$0xff]
        %v561 = vld [vmem:[%s2 + $0x80] sm:$0xf]
        %v562 = vld [vmem:[%s2 + $0x84] sm:$0xff]
        %v563 = vld [vmem:[%s2 + $0x8c] sm:$0xf]
        %v564 = vld [vmem:[%s2 + $0x90] sm:$0xff]
        %v565 = vld [vmem:[%s2 + $0x98] sm:$0xf]
        %v566 = vld [vmem:[%s2 + $0x9c] sm:$0xff]
        %v567 = vld [vmem:[%s2 + $0xa4] sm:$0xf]
        %v568 = vld [vmem:[%s2 + $0xa8] sm:$0xff]
        %v569 = vld [vmem:[%s2 + $0xb0] sm:$0xf]
        %v570 = vld [vmem:[%s2 + $0xb4] sm:$0xff]
        %v571 = vld [vmem:[%s2 + $0xbc] sm:$0xf]
        %v572 = vld [vmem:[%s3] sm:$0x7]
        %v574 = vlaneseq
        %v575 = vshrl.u32 %v574, 7
        %v576 = vsub.s32 0, %v575
        %v577 = vrot.slane %v572, %v576
        %v578 = vlaneseq
        %v579 = vshrl.u32 %v578, 7
        %v580 = vsub.s32 1, %v579
        %v581 = vrot.slane %v572, %v580
        %v582 = vlaneseq
        %v583 = vshrl.u32 %v582, 7
        %v584 = vsub.s32 2, %v583
        %v585 = vrot.slane %v572, %v584
        %v591 = vunpack.c.l.b16 %v536
        %v592 = vunpack.c.l.b16 %v537
        %v593 = vpack.c.b16 %v592, %v591
        %v627 = vunpack.c.l.b16 %v540
        %v628 = vunpack.c.h.b16 %v540
        %v629 = vunpack.c.l.b16 %v541
        %v630 = vunpack.c.l.b16 %v542
        %v631 = vunpack.c.h.b16 %v542
        %v632 = vunpack.c.l.b16 %v543
        %v633 = vunpack.c.l.b16 %v544
        %v634 = vunpack.c.h.b16 %v544
        %v635 = vunpack.c.l.b16 %v545
        %v636 = vunpack.c.l.b16 %v546
        %v637 = vunpack.c.h.b16 %v546
        %v638 = vunpack.c.l.b16 %v547
        %v639 = vunpack.c.l.b16 %v548
        %v640 = vunpack.c.h.b16 %v548
        %v641 = vunpack.c.l.b16 %v549
        %v642 = vunpack.c.l.b16 %v550
        %v643 = vunpack.c.h.b16 %v550
        %v644 = vunpack.c.l.b16 %v551
        %v645 = vunpack.c.l.b16 %v552
        %v646 = vunpack.c.h.b16 %v552
        %v647 = vunpack.c.l.b16 %v553
        %v648 = vunpack.c.l.b16 %v554
        %v649 = vunpack.c.h.b16 %v554
        %v650 = vunpack.c.l.b16 %v555
        %v651 = vunpack.c.l.b16 %v556
        %v652 = vunpack.c.h.b16 %v556
        %v653 = vunpack.c.l.b16 %v557
        %v654 = vunpack.c.l.b16 %v558
        %v655 = vunpack.c.h.b16 %v558
        %v656 = vunpack.c.l.b16 %v559
        %v657 = vunpack.c.l.b16 %v560
        %v658 = vunpack.c.h.b16 %v560
        %v659 = vunpack.c.l.b16 %v561
        %v660 = vunpack.c.l.b16 %v562
        %v661 = vunpack.c.h.b16 %v562
        %v662 = vunpack.c.l.b16 %v563
        %v663 = vunpack.c.l.b16 %v564
        %v664 = vunpack.c.h.b16 %v564
        %v665 = vunpack.c.l.b16 %v565
        %v666 = vunpack.c.l.b16 %v566
        %v667 = vunpack.c.h.b16 %v566
        %v668 = vunpack.c.l.b16 %v567
        %v669 = vunpack.c.l.b16 %v568
        %v670 = vunpack.c.h.b16 %v568
        %v671 = vunpack.c.l.b16 %v569
        %v672 = vunpack.c.l.b16 %v570
        %v673 = vunpack.c.h.b16 %v570
        %v674 = vunpack.c.l.b16 %v571
        %v675 = vpack.c.b16 %v630, %v627
        %v676 = vpack.c.b16 %v631, %v628
        %v677 = vpack.c.b16 %v632, %v629
        %v678 = vpack.c.b16 %v636, %v633
        %v679 = vpack.c.b16 %v637, %v634
        %v680 = vpack.c.b16 %v638, %v635
        %v681 = vpack.c.b16 %v642, %v639
        %v682 = vpack.c.b16 %v643, %v640
        %v683 = vpack.c.b16 %v644, %v641
        %v684 = vpack.c.b16 %v648, %v645
        %v685 = vpack.c.b16 %v649, %v646
        %v686 = vpack.c.b16 %v650, %v647
        %v687 = vpack.c.b16 %v654, %v651
        %v688 = vpack.c.b16 %v655, %v652
        %v689 = vpack.c.b16 %v656, %v653
        %v690 = vpack.c.b16 %v660, %v657
        %v691 = vpack.c.b16 %v661, %v658
        %v692 = vpack.c.b16 %v662, %v659
        %v693 = vpack.c.b16 %v666, %v663
        %v694 = vpack.c.b16 %v667, %v664
        %v695 = vpack.c.b16 %v668, %v665
        %v696 = vpack.c.b16 %v672, %v669
        %v697 = vpack.c.b16 %v673, %v670
        %v698 = vpack.c.b16 %v674, %v671
        %723 = vmatprep.subr.bf16.mxu0 %v676
        %724 = vmatpush1.bf16.msra.mxu0 %v675
        %725 = vmatprep.subr.bf16.mxu0 %v679
        %726 = vmatpush1.bf16.msra.mxu0 %v678
        %727 = vmatprep.subr.bf16.mxu0 %v682
        %728 = vmatpush1.bf16.msra.mxu0 %v681
        %729 = vmatprep.subr.bf16.mxu0 %v685
        %730 = vmatpush1.bf16.msra.mxu0 %v684
        %731 = vmatprep.subr.bf16.mxu0 %v688
        %732 = vmatpush1.bf16.msra.mxu0 %v687
        %733 = vmatprep.subr.bf16.mxu0 %v691
        %734 = vmatpush1.bf16.msra.mxu0 %v690
        %735 = vmatprep.subr.bf16.mxu0 %v694
        %736 = vmatpush1.bf16.msra.mxu0 %v693
        %737 = vmatprep.subr.bf16.mxu0 %v697
        %738 = vmatpush1.bf16.msra.mxu0 %v696
        %739 = vmatprep.subr.bf16.mxu0 0
        %740 = vmatpush1.bf16.msra.mxu0 0
        %741 = vmatprep.subr.bf16.mxu0 0
        %742 = vmatpush1.bf16.msra.mxu0 0
        %743 = vmatprep.subr.bf16.mxu0 0
        %744 = vmatpush1.bf16.msra.mxu0 0
        %745 = vmatprep.subr.bf16.mxu0 0
        %746 = vmatpush1.bf16.msra.mxu0 0
        %747 = vmatprep.subr.bf16.mxu0 0
        %748 = vmatpush1.bf16.msra.mxu0 0
        %749 = vmatprep.subr.bf16.mxu0 0
        %750 = vmatpush1.bf16.msra.mxu0 0
        %751 = vmatprep.subr.bf16.mxu0 0
        %752 = vmatpush1.bf16.msra.mxu0 0
        %753 = vmatprep.subr.bf16.mxu0 0
        %754 = vmatpush1.bf16.msra.mxu0 0
        %755 = vmatprep.mubr.bf16.mxu0 0
        %756 = vmatmul.mubr.bf16.gmra.mrb[0].mxu0 %v593
        %v757 = vpop.f32.mrb[0].mxu0
        %v758 = vadd.f32 %v577, %v757
        %v759 = vpop.f32.mrb[0].mxu0
        %v760 = vadd.f32 %v581, %v759
        %v761 = vpop.f32.mrb[0].mxu0
        %v762 = vadd.f32 %v577, %v761
        %v763 = vpop.f32.mrb[0].mxu0
        %v764 = vadd.f32 %v581, %v763
        %765 = vdwg.mxu0
        %766 = vmatprep.subr.bf16.mxu0 0
        %767 = vmatpush1.bf16.msra.mxu0 %v677
        %768 = vmatprep.subr.bf16.mxu0 0
        %769 = vmatpush1.bf16.msra.mxu0 %v680
        %770 = vmatprep.subr.bf16.mxu0 0
        %771 = vmatpush1.bf16.msra.mxu0 %v683
        %772 = vmatprep.subr.bf16.mxu0 0
        %773 = vmatpush1.bf16.msra.mxu0 %v686
        %774 = vmatprep.subr.bf16.mxu0 0
        %775 = vmatpush1.bf16.msra.mxu0 %v689
        %776 = vmatprep.subr.bf16.mxu0 0
        %777 = vmatpush1.bf16.msra.mxu0 %v692
        %778 = vmatprep.subr.bf16.mxu0 0
        %779 = vmatpush1.bf16.msra.mxu0 %v695
        %780 = vmatprep.subr.bf16.mxu0 0
        %781 = vmatpush1.bf16.msra.mxu0 %v698
        %782 = vmatprep.subr.bf16.mxu0 0
        %783 = vmatpush1.bf16.msra.mxu0 0
        %784 = vmatprep.subr.bf16.mxu0 0
        %785 = vmatpush1.bf16.msra.mxu0 0
        %786 = vmatprep.subr.bf16.mxu0 0
        %787 = vmatpush1.bf16.msra.mxu0 0
        %788 = vmatprep.subr.bf16.mxu0 0
        %789 = vmatpush1.bf16.msra.mxu0 0
        %790 = vmatprep.subr.bf16.mxu0 0
        %791 = vmatpush1.bf16.msra.mxu0 0
        %792 = vmatprep.subr.bf16.mxu0 0
        %793 = vmatpush1.bf16.msra.mxu0 0
        %794 = vmatprep.subr.bf16.mxu0 0
        %795 = vmatpush1.bf16.msra.mxu0 0
        %796 = vmatprep.subr.bf16.mxu0 0
        %797 = vmatpush1.bf16.msra.mxu0 0
        %798 = vmatprep.mubr.bf16.mxu0 0
        %799 = vmatmul.mubr.bf16.gmra.mrb[0].mxu0 %v593
        %v800 = vpop.f32.mrb[0].mxu0
        %v801 = vadd.f32 %v585, %v800
        %v802 = vpop.f32.mrb[0].mxu0
        %v803 = vpop.f32.mrb[0].mxu0
        %v804 = vadd.f32 %v585, %v803
        %v805 = vpop.f32.mrb[0].mxu0
        %806 = vdwg.mxu0
        %v807 = vld [vmem:[%s529] sm:$0x1]
        %v808 = vpack.c.bf16 %v762, %v758
        %v809 = vpack.c.bf16 %v764, %v760
        %v810 = vpack.c.bf16 %v804, %v801
        %v812 = vlaneseq
        %v813 = vshrl.u32 %v812, 7
        %v814 = vsub.s32 0, %v813
        %v815 = vrot.slane %v807, %v814
        %vm817 = vcmask 261120
        %v819 = vsel %vm817, %v808, 0
        %v822 = vsel %vm817, %v809, 0
        %824 = vmatprep.subr.bf16.mxu0 0
        %825 = vmatpush1.bf16.xpose.msra.mxu0 %v822
        %826 = vmatprep.subr.bf16.mxu0 0
        %827 = vmatpush1.bf16.xpose.msra.mxu0 0
        %828 = vmatprep.subr.bf16.mxu0 0
        %829 = vmatpush1.bf16.xpose.msra.mxu0 0
        %830 = vmatprep.subr.bf16.mxu0 0
        %831 = vmatpush1.bf16.xpose.msra.mxu0 0
        %832 = vmatprep.subr.bf16.mxu0 0
        %833 = vmatpush1.bf16.xpose.msra.mxu0 0
        %834 = vmatprep.subr.bf16.mxu0 0
        %835 = vmatpush1.bf16.xpose.msra.mxu0 0
        %836 = vmatprep.subr.bf16.mxu0 0
        %837 = vmatpush1.bf16.xpose.msra.mxu0 0
        %838 = vmatprep.subr.bf16.mxu0 0
        %839 = vmatpush1.bf16.xpose.msra.mxu0 0
        %840 = vmatprep.subr.bf16.mxu0 0
        %841 = vmatpush1.bf16.xpose.msra.mxu0 0
        %842 = vmatprep.subr.bf16.mxu0 0
        %843 = vmatpush1.bf16.xpose.msra.mxu0 0
        %844 = vmatprep.subr.bf16.mxu0 0
        %845 = vmatpush1.bf16.xpose.msra.mxu0 0
        %846 = vmatprep.subr.bf16.mxu0 0
        %847 = vmatpush1.bf16.xpose.msra.mxu0 0
        %848 = vmatprep.subr.bf16.mxu0 0
        %849 = vmatpush1.bf16.xpose.msra.mxu0 0
        %850 = vmatprep.subr.bf16.mxu0 0
        %851 = vmatpush1.bf16.xpose.msra.mxu0 0
        %852 = vmatprep.subr.bf16.mxu0 0
        %853 = vmatpush1.bf16.xpose.msra.mxu0 0
        %854 = vmatprep.subr.bf16.mxu0 0
        %855 = vmatpush1.bf16.xpose.msra.mxu0 0
        %856 = vmatprep.mubr.bf16.mxu0 0
        %857 = vmatmul.mubr.bf16.gmra.mrb[0].mxu0 %v819
        %v858 = vpop.f32.mrb[0].mxu0
        %v859 = vadd.f32 %v815, %v858
        %v860 = vpop.f32.mrb[0].mxu0
        %v861 = vpop.f32.mrb[0].mxu0
        %v862 = vadd.f32 %v815, %v861
        %v863 = vpop.f32.mrb[0].mxu0
        %864 = vdwg.mxu0
        %vm865 = vcmask 130048
        %v866 = vsel %vm865, %v859, -inf
        %867 = vmax.xlane.f32.xlu0 %v866
        %v868 = vpop.xlane.xlu0 %867
        %v869 = vsel %vm865, %v862, -inf
        %870 = vmax.xlane.f32.xlu0 %v869
        %v871 = vpop.xlane.xlu0 %870
        %v872 = vsub.f32 %v859, %v868
        %v873 = vsub.f32 %v862, %v871
        %v874 = vmul.f32 %v872, 1.442695
        %v875 = vpow.pop %v874
        %v876 = vmul.f32 %v873, 1.442695
        %v877 = vpow.pop %v876
        %v878 = vsel %vm865, %v875, 0.0
        %879 = vadd.xlane.f32.xlu0 %v878
        %v880 = vpop.xlane.xlu0 %879
        %v881 = vsel %vm865, %v877, 0.0
        %882 = vadd.xlane.f32.xlu0 %v881
        %v883 = vpop.xlane.xlu0 %882
        %v884 = vrcp.pop %v880
        %v885 = vrcp.pop %v883
        %v886 = vmul.f32 %v875, %v884
        %v887 = vmul.f32 %v877, %v885
        %v888 = vpack.c.bf16 %v887, %v886
        %v890 = vsel %vm865, %v888, 0
        %892 = vmatprep.subr.bf16.mxu0 0
        %893 = vmatpush1.bf16.msra.mxu0 %v810
        %894 = vmatprep.subr.bf16.mxu0 0
        %895 = vmatpush1.bf16.msra.mxu0 0
        %896 = vmatprep.subr.bf16.mxu0 0
        %897 = vmatpush1.bf16.msra.mxu0 0
        %898 = vmatprep.subr.bf16.mxu0 0
        %899 = vmatpush1.bf16.msra.mxu0 0
        %900 = vmatprep.subr.bf16.mxu0 0
        %901 = vmatpush1.bf16.msra.mxu0 0
        %902 = vmatprep.subr.bf16.mxu0 0
        %903 = vmatpush1.bf16.msra.mxu0 0
        %904 = vmatprep.subr.bf16.mxu0 0
        %905 = vmatpush1.bf16.msra.mxu0 0
        %906 = vmatprep.subr.bf16.mxu0 0
        %907 = vmatpush1.bf16.msra.mxu0 0
        %908 = vmatprep.subr.bf16.mxu0 0
        %909 = vmatpush1.bf16.msra.mxu0 0
        %910 = vmatprep.subr.bf16.mxu0 0
        %911 = vmatpush1.bf16.msra.mxu0 0
        %912 = vmatprep.subr.bf16.mxu0 0
        %913 = vmatpush1.bf16.msra.mxu0 0
        %914 = vmatprep.subr.bf16.mxu0 0
        %915 = vmatpush1.bf16.msra.mxu0 0
        %916 = vmatprep.subr.bf16.mxu0 0
        %917 = vmatpush1.bf16.msra.mxu0 0
        %918 = vmatprep.subr.bf16.mxu0 0
        %919 = vmatpush1.bf16.msra.mxu0 0
        %920 = vmatprep.subr.bf16.mxu0 0
        %921 = vmatpush1.bf16.msra.mxu0 0
        %922 = vmatprep.subr.bf16.mxu0 0
        %923 = vmatpush1.bf16.msra.mxu0 0
        %924 = vmatprep.mubr.bf16.mxu0 0
        %925 = vmatmul.mubr.bf16.gmra.mrb[0].mxu0 %v890
        %v926 = vpop.f32.mrb[0].mxu0
        %v927 = vadd.f32 0.0, %v926
        %v928 = vpop.f32.mrb[0].mxu0
        %v929 = vpop.f32.mrb[0].mxu0
        %v930 = vadd.f32 0.0, %v929
        %v931 = vpop.f32.mrb[0].mxu0
        %932 = vdwg.mxu0
        %934 = vrot.lane.b32.xlu0 %v808, 96
        %v935 = vpop.permute.xlu0 %934
        %937 = vrot.lane.b32.xlu0 %v809, 96
        %v938 = vpop.permute.xlu0 %937
        %v940 = vsel %vm817, %v935, 0
        %v943 = vsel %vm817, %v938, 0
        %945 = vmatprep.subr.bf16.mxu0 0
        %946 = vmatpush1.bf16.xpose.msra.mxu0 %v943
        %947 = vmatprep.subr.bf16.mxu0 0
        %948 = vmatpush1.bf16.xpose.msra.mxu0 0
        %949 = vmatprep.subr.bf16.mxu0 0
        %950 = vmatpush1.bf16.xpose.msra.mxu0 0
        %951 = vmatprep.subr.bf16.mxu0 0
        %952 = vmatpush1.bf16.xpose.msra.mxu0 0
        %953 = vmatprep.subr.bf16.mxu0 0
        %954 = vmatpush1.bf16.xpose.msra.mxu0 0
        %955 = vmatprep.subr.bf16.mxu0 0
        %956 = vmatpush1.bf16.xpose.msra.mxu0 0
        %957 = vmatprep.subr.bf16.mxu0 0
        %958 = vmatpush1.bf16.xpose.msra.mxu0 0
        %959 = vmatprep.subr.bf16.mxu0 0
        %960 = vmatpush1.bf16.xpose.msra.mxu0 0
        %961 = vmatprep.subr.bf16.mxu0 0
        %962 = vmatpush1.bf16.xpose.msra.mxu0 0
        %963 = vmatprep.subr.bf16.mxu0 0
        %964 = vmatpush1.bf16.xpose.msra.mxu0 0
        %965 = vmatprep.subr.bf16.mxu0 0
        %966 = vmatpush1.bf16.xpose.msra.mxu0 0
        %967 = vmatprep.subr.bf16.mxu0 0
        %968 = vmatpush1.bf16.xpose.msra.mxu0 0
        %969 = vmatprep.subr.bf16.mxu0 0
        %970 = vmatpush1.bf16.xpose.msra.mxu0 0
        %971 = vmatprep.subr.bf16.mxu0 0
        %972 = vmatpush1.bf16.xpose.msra.mxu0 0
        %973 = vmatprep.subr.bf16.mxu0 0
        %974 = vmatpush1.bf16.xpose.msra.mxu0 0
        %975 = vmatprep.subr.bf16.mxu0 0
        %976 = vmatpush1.bf16.xpose.msra.mxu0 0
        %977 = vmatprep.mubr.bf16.mxu0 0
        %978 = vmatmul.mubr.bf16.gmra.mrb[0].mxu0 %v940
        %v979 = vpop.f32.mrb[0].mxu0
        %v980 = vadd.f32 %v815, %v979
        %v981 = vpop.f32.mrb[0].mxu0
        %v982 = vpop.f32.mrb[0].mxu0
        %v983 = vadd.f32 %v815, %v982
        %v984 = vpop.f32.mrb[0].mxu0
        %985 = vdwg.mxu0
        %v986 = vsel %vm865, %v980, -inf
        %987 = vmax.xlane.f32.xlu0 %v986
        %v988 = vpop.xlane.xlu0 %987
        %v989 = vsel %vm865, %v983, -inf
        %990 = vmax.xlane.f32.xlu0 %v989
        %v991 = vpop.xlane.xlu0 %990
        %v992 = vsub.f32 %v980, %v988
        %v993 = vsub.f32 %v983, %v991
        %v994 = vmul.f32 %v992, 1.442695
        %v995 = vpow.pop %v994
        %v996 = vmul.f32 %v993, 1.442695
        %v997 = vpow.pop %v996
        %v998 = vsel %vm865, %v995, 0.0
        %999 = vadd.xlane.f32.xlu0 %v998
        %v1000 = vpop.xlane.xlu0 %999
        %v1001 = vsel %vm865, %v997, 0.0
        %1002 = vadd.xlane.f32.xlu0 %v1001
        %v1003 = vpop.xlane.xlu0 %1002
        %v1004 = vrcp.pop %v1000
        %v1005 = vrcp.pop %v1003
        %v1006 = vmul.f32 %v995, %v1004
        %v1007 = vmul.f32 %v997, %v1005
        %v1008 = vpack.c.bf16 %v1007, %v1006
        %1010 = vrot.lane.b32.xlu0 %v810, 96
        %v1011 = vpop.permute.xlu0 %1010
        %v1014 = vsel %vm865, %v1008, 0
        %1016 = vmatprep.subr.bf16.mxu0 0
        %1017 = vmatpush1.bf16.msra.mxu0 %v1011
        %1018 = vmatprep.subr.bf16.mxu0 0
        %1019 = vmatpush1.bf16.msra.mxu0 0
        %1020 = vmatprep.subr.bf16.mxu0 0
        %1021 = vmatpush1.bf16.msra.mxu0 0
        %1022 = vmatprep.subr.bf16.mxu0 0
        %1023 = vmatpush1.bf16.msra.mxu0 0
        %1024 = vmatprep.subr.bf16.mxu0 0
        %1025 = vmatpush1.bf16.msra.mxu0 0
        %1026 = vmatprep.subr.bf16.mxu0 0
        %1027 = vmatpush1.bf16.msra.mxu0 0
        %1028 = vmatprep.subr.bf16.mxu0 0
        %1029 = vmatpush1.bf16.msra.mxu0 0
        %1030 = vmatprep.subr.bf16.mxu0 0
        %1031 = vmatpush1.bf16.msra.mxu0 0
        %1032 = vmatprep.subr.bf16.mxu0 0
        %1033 = vmatpush1.bf16.msra.mxu0 0
        %1034 = vmatprep.subr.bf16.mxu0 0
        %1035 = vmatpush1.bf16.msra.mxu0 0
        %1036 = vmatprep.subr.bf16.mxu0 0
        %1037 = vmatpush1.bf16.msra.mxu0 0
        %1038 = vmatprep.subr.bf16.mxu0 0
        %1039 = vmatpush1.bf16.msra.mxu0 0
        %1040 = vmatprep.subr.bf16.mxu0 0
        %1041 = vmatpush1.bf16.msra.mxu0 0
        %1042 = vmatprep.subr.bf16.mxu0 0
        %1043 = vmatpush1.bf16.msra.mxu0 0
        %1044 = vmatprep.subr.bf16.mxu0 0
        %1045 = vmatpush1.bf16.msra.mxu0 0
        %1046 = vmatprep.subr.bf16.mxu0 0
        %1047 = vmatpush1.bf16.msra.mxu0 0
        %1048 = vmatprep.mubr.bf16.mxu0 0
        %1049 = vmatmul.mubr.bf16.gmra.mrb[0].mxu0 %v1014
        %v1050 = vpop.f32.mrb[0].mxu0
        %v1051 = vadd.f32 0.0, %v1050
        %v1052 = vpop.f32.mrb[0].mxu0
        %v1053 = vpop.f32.mrb[0].mxu0
        %v1054 = vadd.f32 0.0, %v1053
        %v1055 = vpop.f32.mrb[0].mxu0
        %1056 = vdwg.mxu0
        %1057 = vrot.lane.b32.xlu0 %v808, 64
        %v1058 = vpop.permute.xlu0 %1057
        %1059 = vrot.lane.b32.xlu0 %v809, 64
        %v1060 = vpop.permute.xlu0 %1059
        %v1062 = vsel %vm817, %v1058, 0
        %v1065 = vsel %vm817, %v1060, 0
        %1067 = vmatprep.subr.bf16.mxu0 0
        %1068 = vmatpush1.bf16.xpose.msra.mxu0 %v1065
        %1069 = vmatprep.subr.bf16.mxu0 0
        %1070 = vmatpush1.bf16.xpose.msra.mxu0 0
        %1071 = vmatprep.subr.bf16.mxu0 0
        %1072 = vmatpush1.bf16.xpose.msra.mxu0 0
        %1073 = vmatprep.subr.bf16.mxu0 0
        %1074 = vmatpush1.bf16.xpose.msra.mxu0 0
        %1075 = vmatprep.subr.bf16.mxu0 0
        %1076 = vmatpush1.bf16.xpose.msra.mxu0 0
        %1077 = vmatprep.subr.bf16.mxu0 0
        %1078 = vmatpush1.bf16.xpose.msra.mxu0 0
        %1079 = vmatprep.subr.bf16.mxu0 0
        %1080 = vmatpush1.bf16.xpose.msra.mxu0 0
        %1081 = vmatprep.subr.bf16.mxu0 0
        %1082 = vmatpush1.bf16.xpose.msra.mxu0 0
        %1083 = vmatprep.subr.bf16.mxu0 0
        %1084 = vmatpush1.bf16.xpose.msra.mxu0 0
        %1085 = vmatprep.subr.bf16.mxu0 0
        %1086 = vmatpush1.bf16.xpose.msra.mxu0 0
        %1087 = vmatprep.subr.bf16.mxu0 0
        %1088 = vmatpush1.bf16.xpose.msra.mxu0 0
        %1089 = vmatprep.subr.bf16.mxu0 0
        %1090 = vmatpush1.bf16.xpose.msra.mxu0 0
        %1091 = vmatprep.subr.bf16.mxu0 0
        %1092 = vmatpush1.bf16.xpose.msra.mxu0 0
        %1093 = vmatprep.subr.bf16.mxu0 0
        %1094 = vmatpush1.bf16.xpose.msra.mxu0 0
        %1095 = vmatprep.subr.bf16.mxu0 0
        %1096 = vmatpush1.bf16.xpose.msra.mxu0 0
        %1097 = vmatprep.subr.bf16.mxu0 0
        %1098 = vmatpush1.bf16.xpose.msra.mxu0 0
        %1099 = vmatprep.mubr.bf16.mxu0 0
        %1100 = vmatmul.mubr.bf16.gmra.mrb[0].mxu0 %v1062
        %v1101 = vpop.f32.mrb[0].mxu0
        %v1102 = vadd.f32 %v815, %v1101
        %v1103 = vpop.f32.mrb[0].mxu0
        %v1104 = vpop.f32.mrb[0].mxu0
        %v1105 = vadd.f32 %v815, %v1104
        %v1106 = vpop.f32.mrb[0].mxu0
        %1107 = vdwg.mxu0
        %v1108 = vsel %vm865, %v1102, -inf
        %1109 = vmax.xlane.f32.xlu0 %v1108
        %v1110 = vpop.xlane.xlu0 %1109
        %v1111 = vsel %vm865, %v1105, -inf
        %1112 = vmax.xlane.f32.xlu0 %v1111
        %v1113 = vpop.xlane.xlu0 %1112
        %v1114 = vsub.f32 %v1102, %v1110
        %v1115 = vsub.f32 %v1105, %v1113
        %v1116 = vmul.f32 %v1114, 1.442695
        %v1117 = vpow.pop %v1116
        %v1118 = vmul.f32 %v1115, 1.442695
        %v1119 = vpow.pop %v1118
        %v1120 = vsel %vm865, %v1117, 0.0
        %1121 = vadd.xlane.f32.xlu0 %v1120
        %v1122 = vpop.xlane.xlu0 %1121
        %v1123 = vsel %vm865, %v1119, 0.0
        %1124 = vadd.xlane.f32.xlu0 %v1123
        %v1125 = vpop.xlane.xlu0 %1124
        %v1126 = vrcp.pop %v1122
        %v1127 = vrcp.pop %v1125
        %v1128 = vmul.f32 %v1117, %v1126
        %v1129 = vmul.f32 %v1119, %v1127
        %v1130 = vpack.c.bf16 %v1129, %v1128
        %1131 = vrot.lane.b32.xlu0 %v810, 64
        %v1132 = vpop.permute.xlu0 %1131
        %v1135 = vsel %vm865, %v1130, 0
        %1137 = vmatprep.subr.bf16.mxu0 0
        %1138 = vmatpush1.bf16.msra.mxu0 %v1132
        %1139 = vmatprep.subr.bf16.mxu0 0
        %1140 = vmatpush1.bf16.msra.mxu0 0
        %1141 = vmatprep.subr.bf16.mxu0 0
        %1142 = vmatpush1.bf16.msra.mxu0 0
        %1143 = vmatprep.subr.bf16.mxu0 0
        %1144 = vmatpush1.bf16.msra.mxu0 0
        %1145 = vmatprep.subr.bf16.mxu0 0
        %1146 = vmatpush1.bf16.msra.mxu0 0
        %1147 = vmatprep.subr.bf16.mxu0 0
        %1148 = vmatpush1.bf16.msra.mxu0 0
        %1149 = vmatprep.subr.bf16.mxu0 0
        %1150 = vmatpush1.bf16.msra.mxu0 0
        %1151 = vmatprep.subr.bf16.mxu0 0
        %1152 = vmatpush1.bf16.msra.mxu0 0
        %1153 = vmatprep.subr.bf16.mxu0 0
        %1154 = vmatpush1.bf16.msra.mxu0 0
        %1155 = vmatprep.subr.bf16.mxu0 0
        %1156 = vmatpush1.bf16.msra.mxu0 0
        %1157 = vmatprep.subr.bf16.mxu0 0
        %1158 = vmatpush1.bf16.msra.mxu0 0
        %1159 = vmatprep.subr.bf16.mxu0 0
        %1160 = vmatpush1.bf16.msra.mxu0 0
        %1161 = vmatprep.subr.bf16.mxu0 0
        %1162 = vmatpush1.bf16.msra.mxu0 0
        %1163 = vmatprep.subr.bf16.mxu0 0
        %1164 = vmatpush1.bf16.msra.mxu0 0
        %1165 = vmatprep.subr.bf16.mxu0 0
        %1166 = vmatpush1.bf16.msra.mxu0 0
        %1167 = vmatprep.subr.bf16.mxu0 0
        %1168 = vmatpush1.bf16.msra.mxu0 0
        %1169 = vmatprep.mubr.bf16.mxu0 0
        %1170 = vmatmul.mubr.bf16.gmra.mrb[0].mxu0 %v1135
        %v1171 = vpop.f32.mrb[0].mxu0
        %v1172 = vadd.f32 0.0, %v1171
        %v1173 = vpop.f32.mrb[0].mxu0
        %v1174 = vpop.f32.mrb[0].mxu0
        %v1175 = vadd.f32 0.0, %v1174
        %v1176 = vpop.f32.mrb[0].mxu0
        %1177 = vdwg.mxu0
        %1178 = vrot.lane.b32.xlu0 %v808, 32
        %v1179 = vpop.permute.xlu0 %1178
        %1180 = vrot.lane.b32.xlu0 %v809, 32
        %v1181 = vpop.permute.xlu0 %1180
        %v1183 = vsel %vm817, %v1179, 0
        %v1186 = vsel %vm817, %v1181, 0
        %1188 = vmatprep.subr.bf16.mxu0 0
        %1189 = vmatpush1.bf16.xpose.msra.mxu0 %v1186
        %1190 = vmatprep.subr.bf16.mxu0 0
        %1191 = vmatpush1.bf16.xpose.msra.mxu0 0
        %1192 = vmatprep.subr.bf16.mxu0 0
        %1193 = vmatpush1.bf16.xpose.msra.mxu0 0
        %1194 = vmatprep.subr.bf16.mxu0 0
        %1195 = vmatpush1.bf16.xpose.msra.mxu0 0
        %1196 = vmatprep.subr.bf16.mxu0 0
        %1197 = vmatpush1.bf16.xpose.msra.mxu0 0
        %1198 = vmatprep.subr.bf16.mxu0 0
        %1199 = vmatpush1.bf16.xpose.msra.mxu0 0
        %1200 = vmatprep.subr.bf16.mxu0 0
        %1201 = vmatpush1.bf16.xpose.msra.mxu0 0
        %1202 = vmatprep.subr.bf16.mxu0 0
        %1203 = vmatpush1.bf16.xpose.msra.mxu0 0
        %1204 = vmatprep.subr.bf16.mxu0 0
        %1205 = vmatpush1.bf16.xpose.msra.mxu0 0
        %1206 = vmatprep.subr.bf16.mxu0 0
        %1207 = vmatpush1.bf16.xpose.msra.mxu0 0
        %1208 = vmatprep.subr.bf16.mxu0 0
        %1209 = vmatpush1.bf16.xpose.msra.mxu0 0
        %1210 = vmatprep.subr.bf16.mxu0 0
        %1211 = vmatpush1.bf16.xpose.msra.mxu0 0
        %1212 = vmatprep.subr.bf16.mxu0 0
        %1213 = vmatpush1.bf16.xpose.msra.mxu0 0
        %1214 = vmatprep.subr.bf16.mxu0 0
        %1215 = vmatpush1.bf16.xpose.msra.mxu0 0
        %1216 = vmatprep.subr.bf16.mxu0 0
        %1217 = vmatpush1.bf16.xpose.msra.mxu0 0
        %1218 = vmatprep.subr.bf16.mxu0 0
        %1219 = vmatpush1.bf16.xpose.msra.mxu0 0
        %1220 = vmatprep.mubr.bf16.mxu0 0
        %1221 = vmatmul.mubr.bf16.gmra.mrb[0].mxu0 %v1183
        %v1222 = vpop.f32.mrb[0].mxu0
        %v1223 = vadd.f32 %v815, %v1222
        %v1224 = vpop.f32.mrb[0].mxu0
        %v1225 = vpop.f32.mrb[0].mxu0
        %v1226 = vadd.f32 %v815, %v1225
        %v1227 = vpop.f32.mrb[0].mxu0
        %1228 = vdwg.mxu0
        %v1229 = vsel %vm865, %v1223, -inf
        %1230 = vmax.xlane.f32.xlu0 %v1229
        %v1231 = vpop.xlane.xlu0 %1230
        %v1232 = vsel %vm865, %v1226, -inf
        %1233 = vmax.xlane.f32.xlu0 %v1232
        %v1234 = vpop.xlane.xlu0 %1233
        %v1235 = vsub.f32 %v1223, %v1231
        %v1236 = vsub.f32 %v1226, %v1234
        %v1237 = vmul.f32 %v1235, 1.442695
        %v1238 = vpow.pop %v1237
        %v1239 = vmul.f32 %v1236, 1.442695
        %v1240 = vpow.pop %v1239
        %v1241 = vsel %vm865, %v1238, 0.0
        %1242 = vadd.xlane.f32.xlu0 %v1241
        %v1243 = vpop.xlane.xlu0 %1242
        %v1244 = vsel %vm865, %v1240, 0.0
        %1245 = vadd.xlane.f32.xlu0 %v1244
        %v1246 = vpop.xlane.xlu0 %1245
        %v1247 = vrcp.pop %v1243
        %v1248 = vrcp.pop %v1246
        %v1249 = vmul.f32 %v1238, %v1247
        %v1250 = vmul.f32 %v1240, %v1248
        %v1251 = vpack.c.bf16 %v1250, %v1249
        %1252 = vrot.lane.b32.xlu0 %v810, 32
        %v1253 = vpop.permute.xlu0 %1252
        %v1256 = vsel %vm865, %v1251, 0
        %1258 = vmatprep.subr.bf16.mxu0 0
        %1259 = vmatpush1.bf16.msra.mxu0 %v1253
        %1260 = vmatprep.subr.bf16.mxu0 0
        %1261 = vmatpush1.bf16.msra.mxu0 0
        %1262 = vmatprep.subr.bf16.mxu0 0
        %1263 = vmatpush1.bf16.msra.mxu0 0
        %1264 = vmatprep.subr.bf16.mxu0 0
        %1265 = vmatpush1.bf16.msra.mxu0 0
        %1266 = vmatprep.subr.bf16.mxu0 0
        %1267 = vmatpush1.bf16.msra.mxu0 0
        %1268 = vmatprep.subr.bf16.mxu0 0
        %1269 = vmatpush1.bf16.msra.mxu0 0
        %1270 = vmatprep.subr.bf16.mxu0 0
        %1271 = vmatpush1.bf16.msra.mxu0 0
        %1272 = vmatprep.subr.bf16.mxu0 0
        %1273 = vmatpush1.bf16.msra.mxu0 0
        %1274 = vmatprep.subr.bf16.mxu0 0
        %1275 = vmatpush1.bf16.msra.mxu0 0
        %1276 = vmatprep.subr.bf16.mxu0 0
        %1277 = vmatpush1.bf16.msra.mxu0 0
        %1278 = vmatprep.subr.bf16.mxu0 0
        %1279 = vmatpush1.bf16.msra.mxu0 0
        %1280 = vmatprep.subr.bf16.mxu0 0
        %1281 = vmatpush1.bf16.msra.mxu0 0
        %1282 = vmatprep.subr.bf16.mxu0 0
        %1283 = vmatpush1.bf16.msra.mxu0 0
        %1284 = vmatprep.subr.bf16.mxu0 0
        %1285 = vmatpush1.bf16.msra.mxu0 0
        %1286 = vmatprep.subr.bf16.mxu0 0
        %1287 = vmatpush1.bf16.msra.mxu0 0
        %1288 = vmatprep.subr.bf16.mxu0 0
        %1289 = vmatpush1.bf16.msra.mxu0 0
        %1290 = vmatprep.mubr.bf16.mxu0 0
        %1291 = vmatmul.mubr.bf16.gmra.mrb[0].mxu0 %v1256
        %v1292 = vpop.f32.mrb[0].mxu0
        %v1293 = vadd.f32 0.0, %v1292
        %v1294 = vpop.f32.mrb[0].mxu0
        %v1295 = vpop.f32.mrb[0].mxu0
        %v1296 = vadd.f32 0.0, %v1295
        %v1297 = vpop.f32.mrb[0].mxu0
        %1298 = vdwg.mxu0
        %1301 = vrot.lane.b32.xlu0 %v1051, 32
        %v1302 = vpop.permute.xlu0 %1301
        %1303 = vrot.lane.b32.xlu0 %v1054, 32
        %v1304 = vpop.permute.xlu0 %1303
        %1309 = vrot.lane.b32.xlu0 %v1172, 64
        %v1310 = vpop.permute.xlu0 %1309
        %1311 = vrot.lane.b32.xlu0 %v1175, 64
        %v1312 = vpop.permute.xlu0 %1311
        %1317 = vrot.lane.b32.xlu0 %v1293, 96
        %v1318 = vpop.permute.xlu0 %1317
        %1319 = vrot.lane.b32.xlu0 %v1296, 96
        %v1320 = vpop.permute.xlu0 %1319
        %v1323 = vsel %vm817, %v927, %v1302
        %v1324 = vsel %vm817, %v930, %v1304
        %vm1325 = vcmask 523264
        %v1326 = vsel %vm1325, %v1323, %v1310
        %v1327 = vsel %vm1325, %v1324, %v1312
        %vm1328 = vcmask 785408
        %v1329 = vsel %vm1328, %v1326, %v1318
        %v1330 = vsel %vm1328, %v1327, %v1320
        %v1331 = vpack.c.bf16 %v1330, %v1329
        %v1332 = vld [vmem:[#allocation2] sm:$0xf]
        %v1333 = vld [vmem:[#allocation2 + $0x4] sm:$0xf]
        %v1334 = vld [vmem:[#allocation2 + $0x8] sm:$0xf]
        %v1335 = vld [vmem:[#allocation2 + $0xc] sm:$0xf]
        %v1336 = vld [vmem:[#allocation2 + $0x10] sm:$0xf]
        %v1337 = vld [vmem:[#allocation2 + $0x14] sm:$0xf]
        %v1338 = vld [vmem:[#allocation2 + $0x18] sm:$0xf]
        %v1339 = vld [vmem:[#allocation2 + $0x1c] sm:$0xf]
        %v1340 = vld [vmem:[#allocation2 + $0x20] sm:$0xf]
        %v1341 = vld [vmem:[#allocation2 + $0x24] sm:$0xf]
        %v1342 = vld [vmem:[#allocation2 + $0x28] sm:$0xf]
        %v1343 = vld [vmem:[#allocation2 + $0x2c] sm:$0xf]
        %v1344 = vld [vmem:[#allocation2 + $0x30] sm:$0xf]
        %v1345 = vld [vmem:[#allocation2 + $0x34] sm:$0xf]
        %v1346 = vld [vmem:[#allocation2 + $0x38] sm:$0xf]
        %v1347 = vld [vmem:[#allocation2 + $0x3c] sm:$0xf]
        %v1348 = vld [vmem:[%s5] sm:$0x1]
        %v1350 = vlaneseq
        %v1351 = vshrl.u32 %v1350, 7
        %v1352 = vsub.s32 0, %v1351
        %v1353 = vrot.slane %v1348, %v1352
        %v1371 = vunpack.c.l.b16 %v1332
        %v1372 = vunpack.c.l.b16 %v1333
        %v1373 = vunpack.c.l.b16 %v1334
        %v1374 = vunpack.c.l.b16 %v1335
        %v1375 = vunpack.c.l.b16 %v1336
        %v1376 = vunpack.c.l.b16 %v1337
        %v1377 = vunpack.c.l.b16 %v1338
        %v1378 = vunpack.c.l.b16 %v1339
        %v1379 = vunpack.c.l.b16 %v1340
        %v1380 = vunpack.c.l.b16 %v1341
        %v1381 = vunpack.c.l.b16 %v1342
        %v1382 = vunpack.c.l.b16 %v1343
        %v1383 = vunpack.c.l.b16 %v1344
        %v1384 = vunpack.c.l.b16 %v1345
        %v1385 = vunpack.c.l.b16 %v1346
        %v1386 = vunpack.c.l.b16 %v1347
        %v1387 = vpack.c.b16 %v1372, %v1371
        %v1388 = vpack.c.b16 %v1374, %v1373
        %v1389 = vpack.c.b16 %v1376, %v1375
        %v1390 = vpack.c.b16 %v1378, %v1377
        %v1391 = vpack.c.b16 %v1380, %v1379
        %v1392 = vpack.c.b16 %v1382, %v1381
        %v1393 = vpack.c.b16 %v1384, %v1383
        %v1394 = vpack.c.b16 %v1386, %v1385
        %1403 = vmatprep.subr.bf16.mxu0 0
        %1404 = vmatpush1.bf16.msra.mxu0 %v1387
        %1405 = vmatprep.subr.bf16.mxu0 0
        %1406 = vmatpush1.bf16.msra.mxu0 %v1388
        %1407 = vmatprep.subr.bf16.mxu0 0
        %1408 = vmatpush1.bf16.msra.mxu0 %v1389
        %1409 = vmatprep.subr.bf16.mxu0 0
        %1410 = vmatpush1.bf16.msra.mxu0 %v1390
        %1411 = vmatprep.subr.bf16.mxu0 0
        %1412 = vmatpush1.bf16.msra.mxu0 %v1391
        %1413 = vmatprep.subr.bf16.mxu0 0
        %1414 = vmatpush1.bf16.msra.mxu0 %v1392
        %1415 = vmatprep.subr.bf16.mxu0 0
        %1416 = vmatpush1.bf16.msra.mxu0 %v1393
        %1417 = vmatprep.subr.bf16.mxu0 0
        %1418 = vmatpush1.bf16.msra.mxu0 %v1394
        %1419 = vmatprep.subr.bf16.mxu0 0
        %1420 = vmatpush1.bf16.msra.mxu0 0
        %1421 = vmatprep.subr.bf16.mxu0 0
        %1422 = vmatpush1.bf16.msra.mxu0 0
        %1423 = vmatprep.subr.bf16.mxu0 0
        %1424 = vmatpush1.bf16.msra.mxu0 0
        %1425 = vmatprep.subr.bf16.mxu0 0
        %1426 = vmatpush1.bf16.msra.mxu0 0
        %1427 = vmatprep.subr.bf16.mxu0 0
        %1428 = vmatpush1.bf16.msra.mxu0 0
        %1429 = vmatprep.subr.bf16.mxu0 0
        %1430 = vmatpush1.bf16.msra.mxu0 0
        %1431 = vmatprep.subr.bf16.mxu0 0
        %1432 = vmatpush1.bf16.msra.mxu0 0
        %1433 = vmatprep.subr.bf16.mxu0 0
        %1434 = vmatpush1.bf16.msra.mxu0 0
        %1435 = vmatprep.mubr.bf16.mxu0 0
        %1436 = vmatmul.mubr.bf16.gmra.mrb[0].mxu0 %v1331
        %v1437 = vpop.f32.mrb[0].mxu0
        %v1438 = vadd.f32 %v1353, %v1437
        %v1439 = vpop.f32.mrb[0].mxu0
        %v1440 = vpop.f32.mrb[0].mxu0
        %v1441 = vadd.f32 %v1353, %v1440
        %v1442 = vpop.f32.mrb[0].mxu0
        %1443 = vdwg.mxu0
        %v1444 = vadd.f32 %v1438, %v538
        %v1445 = vadd.f32 %v1441, %v539
        %1446 = vadd.xlane.f32.xlu0 %v1444
        %v1447 = vpop.xlane.xlu0 %1446
        %1448 = vadd.xlane.f32.xlu0 %v1445
        %v1449 = vpop.xlane.xlu0 %1448
        %v1450 = vrcp.pop 128.0
        %v1451 = vmul.f32 %v1447, %v1450
        %v1452 = vmul.f32 %v1449, %v1450
        %v1453 = vsub.f32 %v1444, %v1451
        %v1454 = vsub.f32 %v1445, %v1452
        %v1455 = vmul.f32 %v1453, %v1453
        %v1456 = vmul.f32 %v1454, %v1454
        %1457 = vadd.xlane.f32.xlu0 %v1455
        %v1458 = vpop.xlane.xlu0 %1457
        %1459 = vadd.xlane.f32.xlu0 %v1456
        %v1460 = vpop.xlane.xlu0 %1459
        %v1461 = vmul.f32 %v1458, %v1450
        %v1462 = vmul.f32 %v1460, %v1450
        %v1463 = vld [vmem:[%s6] sm:$0x1]
        %v1465 = vlaneseq
        %v1466 = vshrl.u32 %v1465, 7
        %v1467 = vsub.s32 0, %v1466
        %v1468 = vrot.slane %v1463, %v1467
        %v1470 = vmul.f32 %v1468, %v1453
        %v1471 = vmul.f32 %v1468, %v1454
        %v1472 = vadd.f32 %v1461, 1e-12
        %v1473 = vadd.f32 %v1462, 1e-12
        %v1474 = vrsqrt.pop %v1472
        %v1475 = vrsqrt.pop %v1473
        %v1476 = vmul.f32 %v1470, %v1474
        %v1477 = vmul.f32 %v1471, %v1475
        %v1478 = vld [vmem:[%s7] sm:$0x1]
        %v1480 = vlaneseq
        %v1481 = vshrl.u32 %v1480, 7
        %v1482 = vsub.s32 0, %v1481
        %v1483 = vrot.slane %v1478, %v1482
        %v1485 = vadd.f32 %v1476, %v1483
        %v1486 = vadd.f32 %v1477, %v1483
        %v1487 = vpack.c.bf16 %v1486, %v1485
        %v1488 = vld [vmem:[%s8] sm:$0xff]
        %v1489 = vld [vmem:[%s8 + $0x8] sm:$0xff]
        %v1490 = vld [vmem:[%s8 + $0x10] sm:$0xff]
        %v1491 = vld [vmem:[%s8 + $0x18] sm:$0xff]
        %v1492 = vld [vmem:[%s8 + $0x20] sm:$0xff]
        %v1493 = vld [vmem:[%s8 + $0x28] sm:$0xff]
        %v1494 = vld [vmem:[%s8 + $0x30] sm:$0xff]
        %v1495 = vld [vmem:[%s8 + $0x38] sm:$0xff]
        %v1496 = vld [vmem:[%s8 + $0x40] sm:$0xff]
        %v1497 = vld [vmem:[%s8 + $0x48] sm:$0xff]
        %v1498 = vld [vmem:[%s8 + $0x50] sm:$0xff]
        %v1499 = vld [vmem:[%s8 + $0x58] sm:$0xff]
        %v1500 = vld [vmem:[%s8 + $0x60] sm:$0xff]
        %v1501 = vld [vmem:[%s8 + $0x68] sm:$0xff]
        %v1502 = vld [vmem:[%s8 + $0x70] sm:$0xff]
        %v1503 = vld [vmem:[%s8 + $0x78] sm:$0xff]
        %v1504 = vld [vmem:[%s9] sm:$0x3]
        %v1506 = vlaneseq
        %v1507 = vshrl.u32 %v1506, 7
        %v1508 = vsub.s32 0, %v1507
        %v1509 = vrot.slane %v1504, %v1508
        %v1510 = vlaneseq
        %v1511 = vshrl.u32 %v1510, 7
        %v1512 = vsub.s32 1, %v1511
        %v1513 = vrot.slane %v1504, %v1512
        %v1532 = vunpack.c.l.b16 %v1488
        %v1533 = vunpack.c.h.b16 %v1488
        %v1534 = vunpack.c.l.b16 %v1489
        %v1535 = vunpack.c.h.b16 %v1489
        %v1536 = vunpack.c.l.b16 %v1490
        %v1537 = vunpack.c.h.b16 %v1490
        %v1538 = vunpack.c.l.b16 %v1491
        %v1539 = vunpack.c.h.b16 %v1491
        %v1540 = vunpack.c.l.b16 %v1492
        %v1541 = vunpack.c.h.b16 %v1492
        %v1542 = vunpack.c.l.b16 %v1493
        %v1543 = vunpack.c.h.b16 %v1493
        %v1544 = vunpack.c.l.b16 %v1494
        %v1545 = vunpack.c.h.b16 %v1494
        %v1546 = vunpack.c.l.b16 %v1495
        %v1547 = vunpack.c.h.b16 %v1495
        %v1548 = vunpack.c.l.b16 %v1496
        %v1549 = vunpack.c.h.b16 %v1496
        %v1550 = vunpack.c.l.b16 %v1497
        %v1551 = vunpack.c.h.b16 %v1497
        %v1552 = vunpack.c.l.b16 %v1498
        %v1553 = vunpack.c.h.b16 %v1498
        %v1554 = vunpack.c.l.b16 %v1499
        %v1555 = vunpack.c.h.b16 %v1499
        %v1556 = vunpack.c.l.b16 %v1500
        %v1557 = vunpack.c.h.b16 %v1500
        %v1558 = vunpack.c.l.b16 %v1501
        %v1559 = vunpack.c.h.b16 %v1501
        %v1560 = vunpack.c.l.b16 %v1502
        %v1561 = vunpack.c.h.b16 %v1502
        %v1562 = vunpack.c.l.b16 %v1503
        %v1563 = vunpack.c.h.b16 %v1503
        %v1564 = vpack.c.b16 %v1534, %v1532
        %v1565 = vpack.c.b16 %v1535, %v1533
        %v1566 = vpack.c.b16 %v1538, %v1536
        %v1567 = vpack.c.b16 %v1539, %v1537
        %v1568 = vpack.c.b16 %v1542, %v1540
        %v1569 = vpack.c.b16 %v1543, %v1541
        %v1570 = vpack.c.b16 %v1546, %v1544
        %v1571 = vpack.c.b16 %v1547, %v1545
        %v1572 = vpack.c.b16 %v1550, %v1548
        %v1573 = vpack.c.b16 %v1551, %v1549
        %v1574 = vpack.c.b16 %v1554, %v1552
        %v1575 = vpack.c.b16 %v1555, %v1553
        %v1576 = vpack.c.b16 %v1558, %v1556
        %v1577 = vpack.c.b16 %v1559, %v1557
        %v1578 = vpack.c.b16 %v1562, %v1560
        %v1579 = vpack.c.b16 %v1563, %v1561
        %1596 = vmatprep.subr.bf16.mxu0 %v1565
        %1597 = vmatpush1.bf16.msra.mxu0 %v1564
        %1598 = vmatprep.subr.bf16.mxu0 %v1567
        %1599 = vmatpush1.bf16.msra.mxu0 %v1566
        %1600 = vmatprep.subr.bf16.mxu0 %v1569
        %1601 = vmatpush1.bf16.msra.mxu0 %v1568
        %1602 = vmatprep.subr.bf16.mxu0 %v1571
        %1603 = vmatpush1.bf16.msra.mxu0 %v1570
        %1604 = vmatprep.subr.bf16.mxu0 %v1573
        %1605 = vmatpush1.bf16.msra.mxu0 %v1572
        %1606 = vmatprep.subr.bf16.mxu0 %v1575
        %1607 = vmatpush1.bf16.msra.mxu0 %v1574
        %1608 = vmatprep.subr.bf16.mxu0 %v1577
        %1609 = vmatpush1.bf16.msra.mxu0 %v1576
        %1610 = vmatprep.subr.bf16.mxu0 %v1579
        %1611 = vmatpush1.bf16.msra.mxu0 %v1578
        %1612 = vmatprep.subr.bf16.mxu0 0
        %1613 = vmatpush1.bf16.msra.mxu0 0
        %1614 = vmatprep.subr.bf16.mxu0 0
        %1615 = vmatpush1.bf16.msra.mxu0 0
        %1616 = vmatprep.subr.bf16.mxu0 0
        %1617 = vmatpush1.bf16.msra.mxu0 0
        %1618 = vmatprep.subr.bf16.mxu0 0
        %1619 = vmatpush1.bf16.msra.mxu0 0
        %1620 = vmatprep.subr.bf16.mxu0 0
        %1621 = vmatpush1.bf16.msra.mxu0 0
        %1622 = vmatprep.subr.bf16.mxu0 0
        %1623 = vmatpush1.bf16.msra.mxu0 0
        %1624 = vmatprep.subr.bf16.mxu0 0
        %1625 = vmatpush1.bf16.msra.mxu0 0
        %1626 = vmatprep.subr.bf16.mxu0 0
        %1627 = vmatpush1.bf16.msra.mxu0 0
        %1628 = vmatprep.mubr.bf16.mxu0 0
        %1629 = vmatmul.mubr.bf16.gmra.mrb[0].mxu0 %v1487
        %v1630 = vpop.f32.mrb[0].mxu0
        %v1631 = vadd.f32 %v1509, %v1630
        %v1632 = vpop.f32.mrb[0].mxu0
        %v1633 = vadd.f32 %v1513, %v1632
        %v1634 = vpop.f32.mrb[0].mxu0
        %v1635 = vadd.f32 %v1509, %v1634
        %v1636 = vpop.f32.mrb[0].mxu0
        %v1637 = vadd.f32 %v1513, %v1636
        %1638 = vdwg.mxu0
        %v1639 = vmax.f32 %v1631, 0.0
        %v1640 = vmax.f32 %v1633, 0.0
        %v1641 = vmax.f32 %v1635, 0.0
        %v1642 = vmax.f32 %v1637, 0.0
        %v1643 = vpack.c.bf16 %v1641, %v1639
        %v1644 = vpack.c.bf16 %v1642, %v1640
        %v1645 = vld [vmem:[%s10] sm:$0xf]
        %v1646 = vld [vmem:[%s10 + $0x4] sm:$0xf]
        %v1647 = vld [vmem:[%s10 + $0x8] sm:$0xf]
        %v1648 = vld [vmem:[%s10 + $0xc] sm:$0xf]
        %v1649 = vld [vmem:[%s10 + $0x10] sm:$0xf]
        %v1650 = vld [vmem:[%s10 + $0x14] sm:$0xf]
        %v1651 = vld [vmem:[%s10 + $0x18] sm:$0xf]
        %v1652 = vld [vmem:[%s10 + $0x1c] sm:$0xf]
        %v1653 = vld [vmem:[%s10 + $0x20] sm:$0xf]
        %v1654 = vld [vmem:[%s10 + $0x24] sm:$0xf]
        %v1655 = vld [vmem:[%s10 + $0x28] sm:$0xf]
        %v1656 = vld [vmem:[%s10 + $0x2c] sm:$0xf]
        %v1657 = vld [vmem:[%s10 + $0x30] sm:$0xf]
        %v1658 = vld [vmem:[%s10 + $0x34] sm:$0xf]
        %v1659 = vld [vmem:[%s10 + $0x38] sm:$0xf]
        %v1660 = vld [vmem:[%s10 + $0x3c] sm:$0xf]
        %v1661 = vld [vmem:[%s10 + $0x40] sm:$0xf]
        %v1662 = vld [vmem:[%s10 + $0x44] sm:$0xf]
        %v1663 = vld [vmem:[%s10 + $0x48] sm:$0xf]
        %v1664 = vld [vmem:[%s10 + $0x4c] sm:$0xf]
        %v1665 = vld [vmem:[%s10 + $0x50] sm:$0xf]
        %v1666 = vld [vmem:[%s10 + $0x54] sm:$0xf]
        %v1667 = vld [vmem:[%s10 + $0x58] sm:$0xf]
        %v1668 = vld [vmem:[%s10 + $0x5c] sm:$0xf]
        %v1669 = vld [vmem:[%s10 + $0x60] sm:$0xf]
        %v1670 = vld [vmem:[%s10 + $0x64] sm:$0xf]
        %v1671 = vld [vmem:[%s10 + $0x68] sm:$0xf]
        %v1672 = vld [vmem:[%s10 + $0x6c] sm:$0xf]
        %v1673 = vld [vmem:[%s10 + $0x70] sm:$0xf]
        %v1674 = vld [vmem:[%s10 + $0x74] sm:$0xf]
        %v1675 = vld [vmem:[%s10 + $0x78] sm:$0xf]
        %v1676 = vld [vmem:[%s10 + $0x7c] sm:$0xf]
        %v1677 = vld [vmem:[#allocation4] sm:$0x1]
        %v1679 = vlaneseq
        %v1680 = vshrl.u32 %v1679, 7
        %v1681 = vsub.s32 0, %v1680
        %v1682 = vrot.slane %v1677, %v1681
        %v1716 = vunpack.c.l.b16 %v1645
        %v1717 = vunpack.c.l.b16 %v1646
        %v1718 = vunpack.c.l.b16 %v1647
        %v1719 = vunpack.c.l.b16 %v1648
        %v1720 = vunpack.c.l.b16 %v1649
        %v1721 = vunpack.c.l.b16 %v1650
        %v1722 = vunpack.c.l.b16 %v1651
        %v1723 = vunpack.c.l.b16 %v1652
        %v1724 = vunpack.c.l.b16 %v1653
        %v1725 = vunpack.c.l.b16 %v1654
        %v1726 = vunpack.c.l.b16 %v1655
        %v1727 = vunpack.c.l.b16 %v1656
        %v1728 = vunpack.c.l.b16 %v1657
        %v1729 = vunpack.c.l.b16 %v1658
        %v1730 = vunpack.c.l.b16 %v1659
        %v1731 = vunpack.c.l.b16 %v1660
        %v1732 = vunpack.c.l.b16 %v1661
        %v1733 = vunpack.c.l.b16 %v1662
        %v1734 = vunpack.c.l.b16 %v1663
        %v1735 = vunpack.c.l.b16 %v1664
        %v1736 = vunpack.c.l.b16 %v1665
        %v1737 = vunpack.c.l.b16 %v1666
        %v1738 = vunpack.c.l.b16 %v1667
        %v1739 = vunpack.c.l.b16 %v1668
        %v1740 = vunpack.c.l.b16 %v1669
        %v1741 = vunpack.c.l.b16 %v1670
        %v1742 = vunpack.c.l.b16 %v1671
        %v1743 = vunpack.c.l.b16 %v1672
        %v1744 = vunpack.c.l.b16 %v1673
        %v1745 = vunpack.c.l.b16 %v1674
        %v1746 = vunpack.c.l.b16 %v1675
        %v1747 = vunpack.c.l.b16 %v1676
        %v1748 = vpack.c.b16 %v1717, %v1716
        %v1749 = vpack.c.b16 %v1719, %v1718
        %v1750 = vpack.c.b16 %v1721, %v1720
        %v1751 = vpack.c.b16 %v1723, %v1722
        %v1752 = vpack.c.b16 %v1725, %v1724
        %v1753 = vpack.c.b16 %v1727, %v1726
        %v1754 = vpack.c.b16 %v1729, %v1728
        %v1755 = vpack.c.b16 %v1731, %v1730
        %v1756 = vpack.c.b16 %v1733, %v1732
        %v1757 = vpack.c.b16 %v1735, %v1734
        %v1758 = vpack.c.b16 %v1737, %v1736
        %v1759 = vpack.c.b16 %v1739, %v1738
        %v1760 = vpack.c.b16 %v1741, %v1740
        %v1761 = vpack.c.b16 %v1743, %v1742
        %v1762 = vpack.c.b16 %v1745, %v1744
        %v1763 = vpack.c.b16 %v1747, %v1746
        %1780 = vmatprep.subr.bf16.mxu0 0
        %1781 = vmatpush1.bf16.msra.mxu0 %v1748
        %1782 = vmatprep.subr.bf16.mxu0 0
        %1783 = vmatpush1.bf16.msra.mxu0 %v1749
        %1784 = vmatprep.subr.bf16.mxu0 0
        %1785 = vmatpush1.bf16.msra.mxu0 %v1750
        %1786 = vmatprep.subr.bf16.mxu0 0
        %1787 = vmatpush1.bf16.msra.mxu0 %v1751
        %1788 = vmatprep.subr.bf16.mxu0 0
        %1789 = vmatpush1.bf16.msra.mxu0 %v1752
        %1790 = vmatprep.subr.bf16.mxu0 0
        %1791 = vmatpush1.bf16.msra.mxu0 %v1753
        %1792 = vmatprep.subr.bf16.mxu0 0
        %1793 = vmatpush1.bf16.msra.mxu0 %v1754
        %1794 = vmatprep.subr.bf16.mxu0 0
        %1795 = vmatpush1.bf16.msra.mxu0 %v1755
        %1796 = vmatprep.subr.bf16.mxu0 0
        %1797 = vmatpush1.bf16.msra.mxu0 %v1756
        %1798 = vmatprep.subr.bf16.mxu0 0
        %1799 = vmatpush1.bf16.msra.mxu0 %v1757
        %1800 = vmatprep.subr.bf16.mxu0 0
        %1801 = vmatpush1.bf16.msra.mxu0 %v1758
        %1802 = vmatprep.subr.bf16.mxu0 0
        %1803 = vmatpush1.bf16.msra.mxu0 %v1759
        %1804 = vmatprep.subr.bf16.mxu0 0
        %1805 = vmatpush1.bf16.msra.mxu0 %v1760
        %1806 = vmatprep.subr.bf16.mxu0 0
        %1807 = vmatpush1.bf16.msra.mxu0 %v1761
        %1808 = vmatprep.subr.bf16.mxu0 0
        %1809 = vmatpush1.bf16.msra.mxu0 %v1762
        %1810 = vmatprep.subr.bf16.mxu0 0
        %1811 = vmatpush1.bf16.msra.mxu0 %v1763
        %1812 = vmatprep.mubr.bf16.mxu0 %v1644
        %1813 = vmatmul.mubr.bf16.gmra.mrb[0].mxu0 %v1643
        %v1814 = vpop.f32.mrb[0].mxu0
        %v1815 = vadd.f32 %v1682, %v1814
        %v1816 = vpop.f32.mrb[0].mxu0
        %v1817 = vpop.f32.mrb[0].mxu0
        %v1818 = vadd.f32 %v1682, %v1817
        %v1819 = vpop.f32.mrb[0].mxu0
        %1820 = vdwg.mxu0
        %v1821 = vadd.f32 %v1815, %v1485
        %v1822 = vadd.f32 %v1818, %v1486
        %1823 = vadd.xlane.f32.xlu0 %v1821
        %v1824 = vpop.xlane.xlu0 %1823
        %1825 = vadd.xlane.f32.xlu0 %v1822
        %v1826 = vpop.xlane.xlu0 %1825
        %v1827 = vmul.f32 %v1824, %v1450
        %v1828 = vmul.f32 %v1826, %v1450
        %v1829 = vsub.f32 %v1821, %v1827
        %v1830 = vsub.f32 %v1822, %v1828
        %v1831 = vmul.f32 %v1829, %v1829
        %v1832 = vmul.f32 %v1830, %v1830
        %1833 = vadd.xlane.f32.xlu0 %v1831
        %v1834 = vpop.xlane.xlu0 %1833
        %1835 = vadd.xlane.f32.xlu0 %v1832
        %v1836 = vpop.xlane.xlu0 %1835
        %v1837 = vmul.f32 %v1834, %v1450
        %v1838 = vmul.f32 %v1836, %v1450
        %v1839 = vld [vmem:[#allocation6] sm:$0x1]
        %v1841 = vlaneseq
        %v1842 = vshrl.u32 %v1841, 7
        %v1843 = vsub.s32 0, %v1842
        %v1844 = vrot.slane %v1839, %v1843
        %v1846 = vmul.f32 %v1844, %v1829
        %v1847 = vmul.f32 %v1844, %v1830
        %v1848 = vadd.f32 %v1837, 1e-12
        %v1849 = vadd.f32 %v1838, 1e-12
        %v1850 = vrsqrt.pop %v1848
        %v1851 = vrsqrt.pop %v1849
        %v1852 = vmul.f32 %v1846, %v1850
        %v1853 = vmul.f32 %v1847, %v1851
        %v1854 = vld [vmem:[#allocation7] sm:$0x1]
        %v1856 = vlaneseq
        %v1857 = vshrl.u32 %v1856, 7
        %v1858 = vsub.s32 0, %v1857
        %v1859 = vrot.slane %v1854, %v1858
        %v1861 = vadd.f32 %v1852, %v1859
        %v1862 = vadd.f32 %v1853, %v1859
        %v1863 = vpack.c.bf16 %v1862, %v1861
        %v1865 = vunpack.c.l.b16 %v1863
        %v1866 = vunpack.c.h.b16 %v1863
        %v1867 = vpack.c.b16 %v1865, %v1865
        %v1868 = vpack.c.b16 %v1866, %v1866
        %1871 = vst [vmem:[%s534] sm:$0xf] %v1867
        %1872 = vst [vmem:[%s534 + $0x4] sm:$0xf] %v1868
        %p1873 = scmp.lt.s32.totalorder %s28, 1
        %s1874 = scalar_select %p1873, %s28, 1
        %s1875 = smul.addr %s1874, 2
        %s1876 = smul.addr %s1875, 4
        %s1877 = scalar_lea.vmem %s14, %s1876
        // Predicated region
        $region93: #{encoder_forward.2} parent=75 // pred_check
          %p1878 = pneg %p350
        $region94: #{encoder_forward.2} parent=75 // pred_check_branch
          %1880 = sbr.rel (%p1878) target = $region96
        $region95: #{encoder_forward.2} parent=75 // pred_region
          _
        $region96: #{encoder_forward.2} parent=75 // pred_fallthru
          _
      $region76: #{encoder_forward.2} parent=5 // pred_fallthru
        _
      %p1881 = scmp.le.s32.totalorder 2, %s23
      // Predicated region
      $region97: #{encoder_forward.2} parent=5 // pred_check
        %p1882 = pneg %p1881
      $region98: #{encoder_forward.2} parent=5 // pred_check_branch
        %1884 = sbr.rel (%p1882) target = $region100
      $region99: #{encoder_forward.2} parent=5 // pred_region
        %s1885 = ssub.s32 %s23, 2
        // Predicated region
        $region101: #{encoder_forward.2} parent=99 // pred_check
          %p1886 = pneg %p356
        $region102: #{encoder_forward.2} parent=99 // pred_check_branch
          %1888 = sbr.rel (%p1886) target = $region104
        $region103: #{encoder_forward.2} parent=99 // pred_region
          %p1889 = scmp.lt.s32.totalorder %s29, 1
          %s1890 = scalar_select %p1889, %s29, 1
          %s1891 = smul.addr %s1890, 2
          %s1892 = smul.addr %s1891, 4
          %s1893 = scalar_lea.vmem %s14, %s1892
        $region104: #{encoder_forward.2} parent=99 // pred_fallthru
          _
      $region100: #{encoder_forward.2} parent=5 // pred_fallthru
        _
    $region6: #{encoder_forward.2} parent=1 // loop_footer
      %s27 = sadd.s32 1, %s23
    $region7: #{encoder_forward.2} parent=1 // loop_footer_branch
      %22 = sbr.rel target = $region3
    $region8: #{encoder_forward.2} parent=1 // loop_exit
      _
    %1894 = vsyncpa [#allocation3], 1
    %s1895 = scalar_lea.sflag [#allocation3], 1
    %1896 = vsyncpa %s1895, 1
    %1897 = vsyncpa [#allocation5], 1
    %1898 = vsyncpa [#allocation8], 1

// kernel: encoder_forward.3
$region0: #{encoder_forward.3}
  #allocation0 [shape = 'u32[]', space=smem, size = 0x4, offset = 0x4, fixed_abs, tag = 'smem constant byte address 0x4 - core index']
  #allocation1 [shape = 'u32[144,128]{1,0:T(1,128)}', space=vmem, size = 0x12000, scoped, tag = 'internal scratch']
  %s0 = inlined_call_operand.vmem [shape: bf16[2,16,128], index: 0, kind: input, shape index: {}]
  %s1 = inlined_call_operand.vmem [shape: f32[2,1,16], index: 1, kind: input, shape index: {}]
  %s2 = inlined_call_operand.vmem [shape: bf16[128,384], index: 2, kind: input, shape index: {}]
  %s3 = inlined_call_operand.vmem [shape: f32[1,384], index: 3, kind: input, shape index: {}]
  %s4 = inlined_call_operand.vmem [shape: bf16[128,128], index: 4, kind: input, shape index: {}]
  %s5 = inlined_call_operand.vmem [shape: f32[1,128], index: 5, kind: input, shape index: {}]
  %s6 = inlined_call_operand.vmem [shape: f32[1,128], index: 6, kind: input, shape index: {}]
  %s7 = inlined_call_operand.vmem [shape: f32[1,128], index: 7, kind: input, shape index: {}]
  %s8 = inlined_call_operand.vmem [shape: bf16[128,256], index: 8, kind: input, shape index: {}]
  %s9 = inlined_call_operand.vmem [shape: f32[1,256], index: 9, kind: input, shape index: {}]
  %s10 = inlined_call_operand.vmem [shape: bf16[256,128], index: 10, kind: input, shape index: {}]
  %s11 = inlined_call_operand.vmem [shape: f32[1,128], index: 11, kind: input, shape index: {}]
  %s12 = inlined_call_operand.vmem [shape: f32[1,128], index: 12, kind: input, shape index: {}]
  %s13 = inlined_call_operand.vmem [shape: f32[1,128], index: 13, kind: input, shape index: {}]
  %s14 = inlined_call_operand.hbm [shape: f32[2,16,128], index: 14, kind: output, shape index: {}]
  %s15 = sld [smem:[#allocation0]]
  $region89: #{encoder_forward.3} parent=0
    _
  %s17 = ssub.s32 1, %s15
  %s18 = scalar_select 0, %s17, %s15
  $region1: #{encoder_forward.3} parent=0
    #allocation2 [shape = 'u8[16384]{0}', space=vmem, size = 0x4000, scoped, tag = 'output window, operand 0']
    #allocation3 [shape = 's32[2]{0}', space=sflag, size = 0x8, scoped, tag = 'scoped memory for encoder_forward.3']
    %19 = vsyncpa [#allocation3], 0
    %s20 = scalar_lea.sflag [#allocation3], 1
    %21 = vsyncpa %s20, 0
    loop: start=0, step=1, limit=4
    $region2: #{encoder_forward.3} parent=1 // loop_pre_header
      _
    $region3: #{encoder_forward.3} parent=1 // loop_header
      %s23 = sphi 0, %s27
      %p24 = scmp.ge.s32.totalorder %s23, 4
      %s33 = sphi 0, %s35
      %s36 = sphi 0, %s33
      %s37 = sphi 0, %s36
      %s53 = sphi 0, %s37
      %s59 = sphi 0, %s61
      %s62 = sphi 0, %s59
      %s63 = sphi 0, %s62
      %s79 = sphi 0, %s63
      %s83 = sphi 0, %s83
      %s85 = sphi 0, %s83
      %s86 = sphi 0, %s85
      %s100 = sphi 0, %s86
      %s104 = sphi 0, %s104
      %s106 = sphi 0, %s104
      %s107 = sphi 0, %s106
      %s121 = sphi 0, %s107
      %s125 = sphi 0, %s125
      %s127 = sphi 0, %s125
      %s128 = sphi 0, %s127
      %s142 = sphi 0, %s128
      %s146 = sphi 0, %s146
      %s148 = sphi 0, %s146
      %s149 = sphi 0, %s148
      %s163 = sphi 0, %s149
      %s167 = sphi 0, %s167
      %s169 = sphi 0, %s167
      %s170 = sphi 0, %s169
      %s184 = sphi 0, %s170
      %s188 = sphi 0, %s188
      %s190 = sphi 0, %s188
      %s191 = sphi 0, %s190
      %s205 = sphi 0, %s191
      %s209 = sphi 0, %s209
      %s211 = sphi 0, %s209
      %s212 = sphi 0, %s211
      %s226 = sphi 0, %s212
      %s230 = sphi 0, %s230
      %s232 = sphi 0, %s230
      %s233 = sphi 0, %s232
      %s247 = sphi 0, %s233
      %s251 = sphi 0, %s251
      %s253 = sphi 0, %s251
      %s254 = sphi 0, %s253
      %s268 = sphi 0, %s254
      %s272 = sphi 0, %s272
      %s274 = sphi 0, %s272
      %s275 = sphi 0, %s274
      %s289 = sphi 0, %s275
      %s293 = sphi 0, %s293
      %s295 = sphi 0, %s293
      %s296 = sphi 0, %s295
      %s310 = sphi 0, %s296
      %s314 = sphi 0, %s314
      %s316 = sphi 0, %s314
      %s317 = sphi 0, %s316
      %s331 = sphi 0, %s317
      %s337 = sphi 0, %s339
      %s340 = sphi 0, %s337
      %s341 = sphi 0, %s340
      %s357 = sphi 0, %s341
    $region4: #{encoder_forward.3} parent=1 // loop_header_branch
      %26 = sbr.rel (%p24) target = $region8
    $region5: #{encoder_forward.3} parent=1 // loop_body
      %s28 = ssub.s32 %s23, 1
      %s29 = ssub.s32 %s23, 2
      %s30 = sadd.s32 %s23, 1
      %s31 = ssub.s32 %s23, %s30
      %p32 = scmp.eq.s32.totalorder %s31, 0
      %s34 = sadd.s32 %s33, 1
      %s35 = scalar_select %p32, %s33, %s34
      %p38 = pneg %p32
      %p39 = scmp.eq.s32.totalorder %s23, 1
      %p40 = por %p38, %p39
      %p41 = scmp.ne.s32.totalorder %s33, %s36
      %p42 = scmp.eq.s32.totalorder %s23, 0
      %p43 = por %p41, %p42
      %p44 = scmp.ne.s32.totalorder %s33, %s36
      %p45 = scmp.eq.s32.totalorder %s28, 1
      %p46 = por %p44, %p45
      %p47 = scmp.ne.s32.totalorder %s36, %s37
      %p48 = scmp.eq.s32.totalorder %s28, 0
      %p49 = por %p47, %p48
      %p50 = scmp.ne.s32.totalorder %s36, %s37
      %p51 = scmp.eq.s32.totalorder %s29, 1
      %p52 = por %p50, %p51
      %p54 = scmp.ne.s32.totalorder %s37, %s53
      %p55 = scmp.eq.s32.totalorder %s29, 0
      %p56 = por %p54, %p55
      %s57 = ssub.s32 %s23, %s30
      %p58 = scmp.eq.s32.totalorder %s57, 0
      %s60 = sadd.s32 %s59, 1
      %s61 = scalar_select %p58, %s59, %s60
      %p64 = pneg %p58
      %p65 = scmp.eq.s32.totalorder %s23, 1
      %p66 = por %p64, %p65
      %p67 = scmp.ne.s32.totalorder %s59, %s62
      %p68 = scmp.eq.s32.totalorder %s23, 0
      %p69 = por %p67, %p68
      %p70 = scmp.ne.s32.totalorder %s59, %s62
      %p71 = scmp.eq.s32.totalorder %s28, 1
      %p72 = por %p70, %p71
      %p73 = scmp.ne.s32.totalorder %s62, %s63
      %p74 = scmp.eq.s32.totalorder %s28, 0
      %p75 = por %p73, %p74
      %p76 = scmp.ne.s32.totalorder %s62, %s63
      %p77 = scmp.eq.s32.totalorder %s29, 1
      %p78 = por %p76, %p77
      %p80 = scmp.ne.s32.totalorder %s63, %s79
      %p81 = scmp.eq.s32.totalorder %s29, 0
      %p82 = por %p80, %p81
      %s84 = sadd.s32 %s83, 1
      %p87 = scmp.eq.s32.totalorder %s23, 1
      %p88 = scmp.ne.s32.totalorder %s83, %s85
      %p89 = scmp.eq.s32.totalorder %s23, 0
      %p90 = por %p88, %p89
      %p91 = scmp.ne.s32.totalorder %s83, %s85
      %p92 = scmp.eq.s32.totalorder %s28, 1
      %p93 = por %p91, %p92
      %p94 = scmp.ne.s32.totalorder %s85, %s86
      %p95 = scmp.eq.s32.totalorder %s28, 0
      %p96 = por %p94, %p95
      %p97 = scmp.ne.s32.totalorder %s85, %s86
      %p98 = scmp.eq.s32.totalorder %s29, 1
      %p99 = por %p97, %p98
      %p101 = scmp.ne.s32.totalorder %s86, %s100
      %p102 = scmp.eq.s32.totalorder %s29, 0
      %p103 = por %p101, %p102
      %s105 = sadd.s32 %s104, 1
      %p108 = scmp.eq.s32.totalorder %s23, 1
      %p109 = scmp.ne.s32.totalorder %s104, %s106
      %p110 = scmp.eq.s32.totalorder %s23, 0
      %p111 = por %p109, %p110
      %p112 = scmp.ne.s32.totalorder %s104, %s106
      %p113 = scmp.eq.s32.totalorder %s28, 1
      %p114 = por %p112, %p113
      %p115 = scmp.ne.s32.totalorder %s106, %s107
      %p116 = scmp.eq.s32.totalorder %s28, 0
      %p117 = por %p115, %p116
      %p118 = scmp.ne.s32.totalorder %s106, %s107
      %p119 = scmp.eq.s32.totalorder %s29, 1
      %p120 = por %p118, %p119
      %p122 = scmp.ne.s32.totalorder %s107, %s121
      %p123 = scmp.eq.s32.totalorder %s29, 0
      %p124 = por %p122, %p123
      %s126 = sadd.s32 %s125, 1
      %p129 = scmp.eq.s32.totalorder %s23, 1
      %p130 = scmp.ne.s32.totalorder %s125, %s127
      %p131 = scmp.eq.s32.totalorder %s23, 0
      %p132 = por %p130, %p131
      %p133 = scmp.ne.s32.totalorder %s125, %s127
      %p134 = scmp.eq.s32.totalorder %s28, 1
      %p135 = por %p133, %p134
      %p136 = scmp.ne.s32.totalorder %s127, %s128
      %p137 = scmp.eq.s32.totalorder %s28, 0
      %p138 = por %p136, %p137
      %p139 = scmp.ne.s32.totalorder %s127, %s128
      %p140 = scmp.eq.s32.totalorder %s29, 1
      %p141 = por %p139, %p140
      %p143 = scmp.ne.s32.totalorder %s128, %s142
      %p144 = scmp.eq.s32.totalorder %s29, 0
      %p145 = por %p143, %p144
      %s147 = sadd.s32 %s146, 1
      %p150 = scmp.eq.s32.totalorder %s23, 1
      %p151 = scmp.ne.s32.totalorder %s146, %s148
      %p152 = scmp.eq.s32.totalorder %s23, 0
      %p153 = por %p151, %p152
      %p154 = scmp.ne.s32.totalorder %s146, %s148
      %p155 = scmp.eq.s32.totalorder %s28, 1
      %p156 = por %p154, %p155
      %p157 = scmp.ne.s32.totalorder %s148, %s149
      %p158 = scmp.eq.s32.totalorder %s28, 0
      %p159 = por %p157, %p158
      %p160 = scmp.ne.s32.totalorder %s148, %s149
      %p161 = scmp.eq.s32.totalorder %s29, 1
      %p162 = por %p160, %p161
      %p164 = scmp.ne.s32.totalorder %s149, %s163
      %p165 = scmp.eq.s32.totalorder %s29, 0
      %p166 = por %p164, %p165
      %s168 = sadd.s32 %s167, 1
      %p171 = scmp.eq.s32.totalorder %s23, 1
      %p172 = scmp.ne.s32.totalorder %s167, %s169
      %p173 = scmp.eq.s32.totalorder %s23, 0
      %p174 = por %p172, %p173
      %p175 = scmp.ne.s32.totalorder %s167, %s169
      %p176 = scmp.eq.s32.totalorder %s28, 1
      %p177 = por %p175, %p176
      %p178 = scmp.ne.s32.totalorder %s169, %s170
      %p179 = scmp.eq.s32.totalorder %s28, 0
      %p180 = por %p178, %p179
      %p181 = scmp.ne.s32.totalorder %s169, %s170
      %p182 = scmp.eq.s32.totalorder %s29, 1
      %p183 = por %p181, %p182
      %p185 = scmp.ne.s32.totalorder %s170, %s184
      %p186 = scmp.eq.s32.totalorder %s29, 0
      %p187 = por %p185, %p186
      %s189 = sadd.s32 %s188, 1
      %p192 = scmp.eq.s32.totalorder %s23, 1
      %p193 = scmp.ne.s32.totalorder %s188, %s190
      %p194 = scmp.eq.s32.totalorder %s23, 0
      %p195 = por %p193, %p194
      %p196 = scmp.ne.s32.totalorder %s188, %s190
      %p197 = scmp.eq.s32.totalorder %s28, 1
      %p198 = por %p196, %p197
      %p199 = scmp.ne.s32.totalorder %s190, %s191
      %p200 = scmp.eq.s32.totalorder %s28, 0
      %p201 = por %p199, %p200
      %p202 = scmp.ne.s32.totalorder %s190, %s191
      %p203 = scmp.eq.s32.totalorder %s29, 1
      %p204 = por %p202, %p203
      %p206 = scmp.ne.s32.totalorder %s191, %s205
      %p207 = scmp.eq.s32.totalorder %s29, 0
      %p208 = por %p206, %p207
      %s210 = sadd.s32 %s209, 1
      %p213 = scmp.eq.s32.totalorder %s23, 1
      %p214 = scmp.ne.s32.totalorder %s209, %s211
      %p215 = scmp.eq.s32.totalorder %s23, 0
      %p216 = por %p214, %p215
      %p217 = scmp.ne.s32.totalorder %s209, %s211
      %p218 = scmp.eq.s32.totalorder %s28, 1
      %p219 = por %p217, %p218
      %p220 = scmp.ne.s32.totalorder %s211, %s212
      %p221 = scmp.eq.s32.totalorder %s28, 0
      %p222 = por %p220, %p221
      %p223 = scmp.ne.s32.totalorder %s211, %s212
      %p224 = scmp.eq.s32.totalorder %s29, 1
      %p225 = por %p223, %p224
      %p227 = scmp.ne.s32.totalorder %s212, %s226
      %p228 = scmp.eq.s32.totalorder %s29, 0
      %p229 = por %p227, %p228
      %s231 = sadd.s32 %s230, 1
      %p234 = scmp.eq.s32.totalorder %s23, 1
      %p235 = scmp.ne.s32.totalorder %s230, %s232
      %p236 = scmp.eq.s32.totalorder %s23, 0
      %p237 = por %p235, %p236
      %p238 = scmp.ne.s32.totalorder %s230, %s232
      %p239 = scmp.eq.s32.totalorder %s28, 1
      %p240 = por %p238, %p239
      %p241 = scmp.ne.s32.totalorder %s232, %s233
      %p242 = scmp.eq.s32.totalorder %s28, 0
      %p243 = por %p241, %p242
      %p244 = scmp.ne.s32.totalorder %s232, %s233
      %p245 = scmp.eq.s32.totalorder %s29, 1
      %p246 = por %p244, %p245
      %p248 = scmp.ne.s32.totalorder %s233, %s247
      %p249 = scmp.eq.s32.totalorder %s29, 0
      %p250 = por %p248, %p249
      %s252 = sadd.s32 %s251, 1
      %p255 = scmp.eq.s32.totalorder %s23, 1
      %p256 = scmp.ne.s32.totalorder %s251, %s253
      %p257 = scmp.eq.s32.totalorder %s23, 0
      %p258 = por %p256, %p257
      %p259 = scmp.ne.s32.totalorder %s251, %s253
      %p260 = scmp.eq.s32.totalorder %s28, 1
      %p261 = por %p259, %p260
      %p262 = scmp.ne.s32.totalorder %s253, %s254
      %p263 = scmp.eq.s32.totalorder %s28, 0
      %p264 = por %p262, %p263
      %p265 = scmp.ne.s32.totalorder %s253, %s254
      %p266 = scmp.eq.s32.totalorder %s29, 1
      %p267 = por %p265, %p266
      %p269 = scmp.ne.s32.totalorder %s254, %s268
      %p270 = scmp.eq.s32.totalorder %s29, 0
      %p271 = por %p269, %p270
      %s273 = sadd.s32 %s272, 1
      %p276 = scmp.eq.s32.totalorder %s23, 1
      %p277 = scmp.ne.s32.totalorder %s272, %s274
      %p278 = scmp.eq.s32.totalorder %s23, 0
      %p279 = por %p277, %p278
      %p280 = scmp.ne.s32.totalorder %s272, %s274
      %p281 = scmp.eq.s32.totalorder %s28, 1
      %p282 = por %p280, %p281
      %p283 = scmp.ne.s32.totalorder %s274, %s275
      %p284 = scmp.eq.s32.totalorder %s28, 0
      %p285 = por %p283, %p284
      %p286 = scmp.ne.s32.totalorder %s274, %s275
      %p287 = scmp.eq.s32.totalorder %s29, 1
      %p288 = por %p286, %p287
      %p290 = scmp.ne.s32.totalorder %s275, %s289
      %p291 = scmp.eq.s32.totalorder %s29, 0
      %p292 = por %p290, %p291
      %s294 = sadd.s32 %s293, 1
      %p297 = scmp.eq.s32.totalorder %s23, 1
      %p298 = scmp.ne.s32.totalorder %s293, %s295
      %p299 = scmp.eq.s32.totalorder %s23, 0
      %p300 = por %p298, %p299
      %p301 = scmp.ne.s32.totalorder %s293, %s295
      %p302 = scmp.eq.s32.totalorder %s28, 1
      %p303 = por %p301, %p302
      %p304 = scmp.ne.s32.totalorder %s295, %s296
      %p305 = scmp.eq.s32.totalorder %s28, 0
      %p306 = por %p304, %p305
      %p307 = scmp.ne.s32.totalorder %s295, %s296
      %p308 = scmp.eq.s32.totalorder %s29, 1
      %p309 = por %p307, %p308
      %p311 = scmp.ne.s32.totalorder %s296, %s310
      %p312 = scmp.eq.s32.totalorder %s29, 0
      %p313 = por %p311, %p312
      %s315 = sadd.s32 %s314, 1
      %p318 = scmp.eq.s32.totalorder %s23, 1
      %p319 = scmp.ne.s32.totalorder %s314, %s316
      %p320 = scmp.eq.s32.totalorder %s23, 0
      %p321 = por %p319, %p320
      %p322 = scmp.ne.s32.totalorder %s314, %s316
      %p323 = scmp.eq.s32.totalorder %s28, 1
      %p324 = por %p322, %p323
      %p325 = scmp.ne.s32.totalorder %s316, %s317
      %p326 = scmp.eq.s32.totalorder %s28, 0
      %p327 = por %p325, %p326
      %p328 = scmp.ne.s32.totalorder %s316, %s317
      %p329 = scmp.eq.s32.totalorder %s29, 1
      %p330 = por %p328, %p329
      %p332 = scmp.ne.s32.totalorder %s317, %s331
      %p333 = scmp.eq.s32.totalorder %s29, 0
      %p334 = por %p332, %p333
      %s335 = ssub.s32 %s23, %s30
      %p336 = scmp.eq.s32.totalorder %s335, 0
      %s338 = sadd.s32 %s337, 1
      %s339 = scalar_select %p336, %s337, %s338
      %p342 = pneg %p336
      %p343 = scmp.eq.s32.totalorder %s23, 1
      %p344 = por %p342, %p343
      %p345 = scmp.ne.s32.totalorder %s337, %s340
      %p346 = scmp.eq.s32.totalorder %s23, 0
      %p347 = por %p345, %p346
      %p348 = scmp.ne.s32.totalorder %s337, %s340
      %p349 = scmp.eq.s32.totalorder %s28, 1
      %p350 = por %p348, %p349
      %p351 = scmp.ne.s32.totalorder %s340, %s341
      %p352 = scmp.eq.s32.totalorder %s28, 0
      %p353 = por %p351, %p352
      %p354 = scmp.ne.s32.totalorder %s340, %s341
      %p355 = scmp.eq.s32.totalorder %s29, 1
      %p356 = por %p354, %p355
      %p358 = scmp.ne.s32.totalorder %s341, %s357
      %p359 = scmp.eq.s32.totalorder %s29, 0
      %p360 = por %p358, %p359
      %p361 = scmp.le.s32.totalorder 1, %s23
      %p362 = scmp.lt.s32.totalorder %s23, 3
      %p363 = pnand %p361, %p362
      %p364 = pneg %p363
      // Predicated region
      $region9: #{encoder_forward.3} parent=5 // pred_check
        _
      $region10: #{encoder_forward.3} parent=5 // pred_check_branch
        %366 = sbr.rel (%p363) target = $region12
      $region11: #{encoder_forward.3} parent=5 // pred_region
        %s367 = ssub.s32 %s23, 1
        // Predicated region
        $region13: #{encoder_forward.3} parent=11 // pred_check
          %p368 = pneg %p96
        $region14: #{encoder_forward.3} parent=11 // pred_check_branch
          %370 = sbr.rel (%p368) target = $region16
        $region15: #{encoder_forward.3} parent=11 // pred_region
          _
        $region16: #{encoder_forward.3} parent=11 // pred_fallthru
          _
        // Predicated region
        $region17: #{encoder_forward.3} parent=11 // pred_check
          %p371 = pneg %p117
        $region18: #{encoder_forward.3} parent=11 // pred_check_branch
          %373 = sbr.rel (%p371) target = $region20
        $region19: #{encoder_forward.3} parent=11 // pred_region
          _
        $region20: #{encoder_forward.3} parent=11 // pred_fallthru
          _
        // Predicated region
        $region21: #{encoder_forward.3} parent=11 // pred_check
          %p374 = pneg %p138
        $region22: #{encoder_forward.3} parent=11 // pred_check_branch
          %376 = sbr.rel (%p374) target = $region24
        $region23: #{encoder_forward.3} parent=11 // pred_region
          _
        $region24: #{encoder_forward.3} parent=11 // pred_fallthru
          _
        // Predicated region
        $region25: #{encoder_forward.3} parent=11 // pred_check
          %p377 = pneg %p159
        $region26: #{encoder_forward.3} parent=11 // pred_check_branch
          %379 = sbr.rel (%p377) target = $region28
        $region27: #{encoder_forward.3} parent=11 // pred_region
          _
        $region28: #{encoder_forward.3} parent=11 // pred_fallthru
          _
        // Predicated region
        $region29: #{encoder_forward.3} parent=11 // pred_check
          %p380 = pneg %p180
        $region30: #{encoder_forward.3} parent=11 // pred_check_branch
          %382 = sbr.rel (%p380) target = $region32
        $region31: #{encoder_forward.3} parent=11 // pred_region
          _
        $region32: #{encoder_forward.3} parent=11 // pred_fallthru
          _
        // Predicated region
        $region33: #{encoder_forward.3} parent=11 // pred_check
          %p383 = pneg %p201
        $region34: #{encoder_forward.3} parent=11 // pred_check_branch
          %385 = sbr.rel (%p383) target = $region36
        $region35: #{encoder_forward.3} parent=11 // pred_region
          _
        $region36: #{encoder_forward.3} parent=11 // pred_fallthru
          _
        // Predicated region
        $region37: #{encoder_forward.3} parent=11 // pred_check
          %p386 = pneg %p222
        $region38: #{encoder_forward.3} parent=11 // pred_check_branch
          %388 = sbr.rel (%p386) target = $region40
        $region39: #{encoder_forward.3} parent=11 // pred_region
          _
        $region40: #{encoder_forward.3} parent=11 // pred_fallthru
          _
        // Predicated region
        $region41: #{encoder_forward.3} parent=11 // pred_check
          %p389 = pneg %p243
        $region42: #{encoder_forward.3} parent=11 // pred_check_branch
          %391 = sbr.rel (%p389) target = $region44
        $region43: #{encoder_forward.3} parent=11 // pred_region
          _
        $region44: #{encoder_forward.3} parent=11 // pred_fallthru
          _
        // Predicated region
        $region45: #{encoder_forward.3} parent=11 // pred_check
          %p392 = pneg %p264
        $region46: #{encoder_forward.3} parent=11 // pred_check_branch
          %394 = sbr.rel (%p392) target = $region48
        $region47: #{encoder_forward.3} parent=11 // pred_region
          _
        $region48: #{encoder_forward.3} parent=11 // pred_fallthru
          _
        // Predicated region
        $region49: #{encoder_forward.3} parent=11 // pred_check
          %p395 = pneg %p285
        $region50: #{encoder_forward.3} parent=11 // pred_check_branch
          %397 = sbr.rel (%p395) target = $region52
        $region51: #{encoder_forward.3} parent=11 // pred_region
          _
        $region52: #{encoder_forward.3} parent=11 // pred_fallthru
          _
        // Predicated region
        $region53: #{encoder_forward.3} parent=11 // pred_check
          %p398 = pneg %p306
        $region54: #{encoder_forward.3} parent=11 // pred_check_branch
          %400 = sbr.rel (%p398) target = $region56
        $region55: #{encoder_forward.3} parent=11 // pred_region
          _
        $region56: #{encoder_forward.3} parent=11 // pred_fallthru
          _
        // Predicated region
        $region57: #{encoder_forward.3} parent=11 // pred_check
          %p401 = pneg %p327
        $region58: #{encoder_forward.3} parent=11 // pred_check_branch
          %403 = sbr.rel (%p401) target = $region60
        $region59: #{encoder_forward.3} parent=11 // pred_region
          _
        $region60: #{encoder_forward.3} parent=11 // pred_fallthru
          _
      $region12: #{encoder_forward.3} parent=5 // pred_fallthru
        _
      %p404 = scmp.lt.s32.totalorder %s23, 2
      // Predicated region
      $region61: #{encoder_forward.3} parent=5 // pred_check
        %p405 = pneg %p404
      $region62: #{encoder_forward.3} parent=5 // pred_check_branch
        %407 = sbr.rel (%p405) target = $region64
      $region63: #{encoder_forward.3} parent=5 // pred_region
        // Predicated region
        $region65: #{encoder_forward.3} parent=63 // pred_check
          %p408 = pneg %p43
        $region66: #{encoder_forward.3} parent=63 // pred_check_branch
          %410 = sbr.rel (%p408) target = $region68
        $region67: #{encoder_forward.3} parent=63 // pred_region
          %p411 = scmp.lt.s32.totalorder %s23, 1
          %s412 = scalar_select %p411, %s23, 1
          %s413 = smul.addr %s412, 2
          %s414 = smul.addr %s413, 4
          %s415 = scalar_lea.vmem %s0, %s414
        $region68: #{encoder_forward.3} parent=63 // pred_fallthru
          _
        // Predicated region
        $region69: #{encoder_forward.3} parent=63 // pred_check
          %p416 = pneg %p69
        $region70: #{encoder_forward.3} parent=63 // pred_check_branch
          %418 = sbr.rel (%p416) target = $region72
        $region71: #{encoder_forward.3} parent=63 // pred_region
          %p419 = scmp.lt.s32.totalorder %s23, 1
          %s420 = scalar_select %p419, %s23, 1
          %s421 = scalar_lea.vmem %s1, %s420
        $region72: #{encoder_forward.3} parent=63 // pred_fallthru
          _
      $region64: #{encoder_forward.3} parent=5 // pred_fallthru
        _
      %p422 = scmp.le.s32.totalorder 1, %s23
      %p423 = scmp.lt.s32.totalorder %s23, 3
      %p424 = pnand %p422, %p423
      %p425 = pneg %p424
      // Predicated region
      $region73: #{encoder_forward.3} parent=5 // pred_check
        _
      $region74: #{encoder_forward.3} parent=5 // pred_check_branch
        %427 = sbr.rel (%p424) target = $region76
      $region75: #{encoder_forward.3} parent=5 // pred_region
        %s428 = ssub.s32 %s23, 1
        %p429 = scmp.lt.s32.totalorder %s28, 1
        %s430 = scalar_select %p429, %s28, 1
        %s431 = smul.addr %s430, 2
        %s432 = smul.addr %s431, 4
        %s433 = scalar_lea.vmem %s0, %s432
        %p434 = pneg %p49
        %p435 = pneg %p46
        %p436 = scmp.lt.s32.totalorder %s28, 1
        %s437 = scalar_select %p436, %s28, 1
        %s438 = scalar_lea.vmem %s1, %s437
        %p439 = pneg %p75
        %p440 = pneg %p72
        %p441 = pneg %p96
        %p442 = pneg %p93
        %p443 = pneg %p117
        %p444 = pneg %p114
        %p445 = pneg %p138
        %p446 = pneg %p135
        %p447 = pneg %p159
        %p448 = pneg %p156
        %p449 = pneg %p180
        %p450 = pneg %p177
        %p451 = pneg %p201
        %p452 = pneg %p198
        %p453 = pneg %p222
        %p454 = pneg %p219
        %p455 = pneg %p243
        %p456 = pneg %p240
        %p457 = pneg %p264
        %p458 = pneg %p261
        %p459 = pneg %p285
        %p460 = pneg %p282
        %p461 = pneg %p306
        %p462 = pneg %p303
        %p463 = pneg %p327
        %p464 = pneg %p324
        %p465 = pneg %p353
        %p466 = pneg %p350
        %s467 = sand.u32 %s340, 1
        %s468 = scalar_lea.sflag [#allocation3], %s467
        %s469 = sand.u32 %s340, 1
        %s470 = smul.addr %s469, 16
        %s471 = scalar_lea.vmem [#allocation2], %s470
        %p472 = scmp.lt.s32.totalorder %s28, 1
        %s473 = scalar_select %p472, %s28, 1
        %s474 = smul.addr %s473, 2
        %s475 = smul.addr %s474, 4
        %s476 = scalar_lea.vmem %s0, %s475
        %p477 = scmp.lt.s32.totalorder %s28, 1
        %s478 = scalar_select %p477, %s28, 1
        %s479 = scalar_lea.vmem %s1, %s478
        %v481 = vld [vmem:[%s476] sm:$0xf]
        %v482 = vld [vmem:[%s476 + $0x4] sm:$0xf]
        %v483 = vunpack.c.l.bf16 %v481
        %v484 = vunpack.c.l.bf16 %v482
        %v485 = vld [vmem:[%s2] sm:$0xff]
        %v486 = vld [vmem:[%s2 + $0x8] sm:$0xf]
        %v487 = vld [vmem:[%s2 + $0xc] sm:$0xff]
        %v488 = vld [vmem:[%s2 + $0x14] sm:$0xf]
        %v489 = vld [vmem:[%s2 + $0x18] sm:$0xff]
        %v490 = vld [vmem:[%s2 + $0x20] sm:$0xf]
        %v491 = vld [vmem:[%s2 + $0x24] sm:$0xff]
        %v492 = vld [vmem:[%s2 + $0x2c] sm:$0xf]
        %v493 = vld [vmem:[%s2 + $0x30] sm:$0xff]
        %v494 = vld [vmem:[%s2 + $0x38] sm:$0xf]
        %v495 = vld [vmem:[%s2 + $0x3c] sm:$0xff]
        %v496 = vld [vmem:[%s2 + $0x44] sm:$0xf]
        %v497 = vld [vmem:[%s2 + $0x48] sm:$0xff]
        %v498 = vld [vmem:[%s2 + $0x50] sm:$0xf]
        %v499 = vld [vmem:[%s2 + $0x54] sm:$0xff]
        %v500 = vld [vmem:[%s2 + $0x5c] sm:$0xf]
        %v501 = vld [vmem:[%s2 + $0x60] sm:$0xff]
        %v502 = vld [vmem:[%s2 + $0x68] sm:$0xf]
        %v503 = vld [vmem:[%s2 + $0x6c] sm:$0xff]
        %v504 = vld [vmem:[%s2 + $0x74] sm:$0xf]
        %v505 = vld [vmem:[%s2 + $0x78] sm:$0xff]
        %v506 = vld [vmem:[%s2 + $0x80] sm:$0xf]
        %v507 = vld [vmem:[%s2 + $0x84] sm:$0xff]
        %v508 = vld [vmem:[%s2 + $0x8c] sm:$0xf]
        %v509 = vld [vmem:[%s2 + $0x90] sm:$0xff]
        %v510 = vld [vmem:[%s2 + $0x98] sm:$0xf]
        %v511 = vld [vmem:[%s2 + $0x9c] sm:$0xff]
        %v512 = vld [vmem:[%s2 + $0xa4] sm:$0xf]
        %v513 = vld [vmem:[%s2 + $0xa8] sm:$0xff]
        %v514 = vld [vmem:[%s2 + $0xb0] sm:$0xf]
        %v515 = vld [vmem:[%s2 + $0xb4] sm:$0xff]
        %v516 = vld [vmem:[%s2 + $0xbc] sm:$0xf]
        %v517 = vld [vmem:[%s3] sm:$0x7]
        %v519 = vlaneseq
        %v520 = vshrl.u32 %v519, 7
        %v521 = vsub.s32 0, %v520
        %v522 = vrot.slane %v517, %v521
        %v523 = vlaneseq
        %v524 = vshrl.u32 %v523, 7
        %v525 = vsub.s32 1, %v524
        %v526 = vrot.slane %v517, %v525
        %v527 = vlaneseq
        %v528 = vshrl.u32 %v527, 7
        %v529 = vsub.s32 2, %v528
        %v530 = vrot.slane %v517, %v529
        %v536 = vunpack.c.l.b16 %v481
        %v537 = vunpack.c.l.b16 %v482
        %v538 = vpack.c.b16 %v537, %v536
        %v572 = vunpack.c.l.b16 %v485
        %v573 = vunpack.c.h.b16 %v485
        %v574 = vunpack.c.l.b16 %v486
        %v575 = vunpack.c.l.b16 %v487
        %v576 = vunpack.c.h.b16 %v487
        %v577 = vunpack.c.l.b16 %v488
        %v578 = vunpack.c.l.b16 %v489
        %v579 = vunpack.c.h.b16 %v489
        %v580 = vunpack.c.l.b16 %v490
        %v581 = vunpack.c.l.b16 %v491
        %v582 = vunpack.c.h.b16 %v491
        %v583 = vunpack.c.l.b16 %v492
        %v584 = vunpack.c.l.b16 %v493
        %v585 = vunpack.c.h.b16 %v493
        %v586 = vunpack.c.l.b16 %v494
        %v587 = vunpack.c.l.b16 %v495
        %v588 = vunpack.c.h.b16 %v495
        %v589 = vunpack.c.l.b16 %v496
        %v590 = vunpack.c.l.b16 %v497
        %v591 = vunpack.c.h.b16 %v497
        %v592 = vunpack.c.l.b16 %v498
        %v593 = vunpack.c.l.b16 %v499
        %v594 = vunpack.c.h.b16 %v499
        %v595 = vunpack.c.l.b16 %v500
        %v596 = vunpack.c.l.b16 %v501
        %v597 = vunpack.c.h.b16 %v501
        %v598 = vunpack.c.l.b16 %v502
        %v599 = vunpack.c.l.b16 %v503
        %v600 = vunpack.c.h.b16 %v503
        %v601 = vunpack.c.l.b16 %v504
        %v602 = vunpack.c.l.b16 %v505
        %v603 = vunpack.c.h.b16 %v505
        %v604 = vunpack.c.l.b16 %v506
        %v605 = vunpack.c.l.b16 %v507
        %v606 = vunpack.c.h.b16 %v507
        %v607 = vunpack.c.l.b16 %v508
        %v608 = vunpack.c.l.b16 %v509
        %v609 = vunpack.c.h.b16 %v509
        %v610 = vunpack.c.l.b16 %v510
        %v611 = vunpack.c.l.b16 %v511
        %v612 = vunpack.c.h.b16 %v511
        %v613 = vunpack.c.l.b16 %v512
        %v614 = vunpack.c.l.b16 %v513
        %v615 = vunpack.c.h.b16 %v513
        %v616 = vunpack.c.l.b16 %v514
        %v617 = vunpack.c.l.b16 %v515
        %v618 = vunpack.c.h.b16 %v515
        %v619 = vunpack.c.l.b16 %v516
        %v620 = vpack.c.b16 %v575, %v572
        %v621 = vpack.c.b16 %v576, %v573
        %v622 = vpack.c.b16 %v577, %v574
        %v623 = vpack.c.b16 %v581, %v578
        %v624 = vpack.c.b16 %v582, %v579
        %v625 = vpack.c.b16 %v583, %v580
        %v626 = vpack.c.b16 %v587, %v584
        %v627 = vpack.c.b16 %v588, %v585
        %v628 = vpack.c.b16 %v589, %v586
        %v629 = vpack.c.b16 %v593, %v590
        %v630 = vpack.c.b16 %v594, %v591
        %v631 = vpack.c.b16 %v595, %v592
        %v632 = vpack.c.b16 %v599, %v596
        %v633 = vpack.c.b16 %v600, %v597
        %v634 = vpack.c.b16 %v601, %v598
        %v635 = vpack.c.b16 %v605, %v602
        %v636 = vpack.c.b16 %v606, %v603
        %v637 = vpack.c.b16 %v607, %v604
        %v638 = vpack.c.b16 %v611, %v608
        %v639 = vpack.c.b16 %v612, %v609
        %v640 = vpack.c.b16 %v613, %v610
        %v641 = vpack.c.b16 %v617, %v614
        %v642 = vpack.c.b16 %v618, %v615
        %v643 = vpack.c.b16 %v619, %v616
        %668 = vmatprep.subr.bf16.mxu0 %v621
        %669 = vmatpush1.bf16.msra.mxu0 %v620
        %670 = vmatprep.subr.bf16.mxu0 %v624
        %671 = vmatpush1.bf16.msra.mxu0 %v623
        %672 = vmatprep.subr.bf16.mxu0 %v627
        %673 = vmatpush1.bf16.msra.mxu0 %v626
        %674 = vmatprep.subr.bf16.mxu0 %v630
        %675 = vmatpush1.bf16.msra.mxu0 %v629
        %676 = vmatprep.subr.bf16.mxu0 %v633
        %677 = vmatpush1.bf16.msra.mxu0 %v632
        %678 = vmatprep.subr.bf16.mxu0 %v636
        %679 = vmatpush1.bf16.msra.mxu0 %v635
        %680 = vmatprep.subr.bf16.mxu0 %v639
        %681 = vmatpush1.bf16.msra.mxu0 %v638
        %682 = vmatprep.subr.bf16.mxu0 %v642
        %683 = vmatpush1.bf16.msra.mxu0 %v641
        %684 = vmatprep.subr.bf16.mxu0 0
        %685 = vmatpush1.bf16.msra.mxu0 0
        %686 = vmatprep.subr.bf16.mxu0 0
        %687 = vmatpush1.bf16.msra.mxu0 0
        %688 = vmatprep.subr.bf16.mxu0 0
        %689 = vmatpush1.bf16.msra.mxu0 0
        %690 = vmatprep.subr.bf16.mxu0 0
        %691 = vmatpush1.bf16.msra.mxu0 0
        %692 = vmatprep.subr.bf16.mxu0 0
        %693 = vmatpush1.bf16.msra.mxu0 0
        %694 = vmatprep.subr.bf16.mxu0 0
        %695 = vmatpush1.bf16.msra.mxu0 0
        %696 = vmatprep.subr.bf16.mxu0 0
        %697 = vmatpush1.bf16.msra.mxu0 0
        %698 = vmatprep.subr.bf16.mxu0 0
        %699 = vmatpush1.bf16.msra.mxu0 0
        %700 = vmatprep.mubr.bf16.mxu0 0
        %701 = vmatmul.mubr.bf16.gmra.mrb[0].mxu0 %v538
        %v702 = vpop.f32.mrb[0].mxu0
        %v703 = vadd.f32 %v522, %v702
        %v704 = vpop.f32.mrb[0].mxu0
        %v705 = vadd.f32 %v526, %v704
        %v706 = vpop.f32.mrb[0].mxu0
        %v707 = vadd.f32 %v522, %v706
        %v708 = vpop.f32.mrb[0].mxu0
        %v709 = vadd.f32 %v526, %v708
        %710 = vdwg.mxu0
        %711 = vmatprep.subr.bf16.mxu0 0
        %712 = vmatpush1.bf16.msra.mxu0 %v622
        %713 = vmatprep.subr.bf16.mxu0 0
        %714 = vmatpush1.bf16.msra.mxu0 %v625
        %715 = vmatprep.subr.bf16.mxu0 0
        %716 = vmatpush1.bf16.msra.mxu0 %v628
        %717 = vmatprep.subr.bf16.mxu0 0
        %718 = vmatpush1.bf16.msra.mxu0 %v631
        %719 = vmatprep.subr.bf16.mxu0 0
        %720 = vmatpush1.bf16.msra.mxu0 %v634
        %721 = vmatprep.subr.bf16.mxu0 0
        %722 = vmatpush1.bf16.msra.mxu0 %v637
        %723 = vmatprep.subr.bf16.mxu0 0
        %724 = vmatpush1.bf16.msra.mxu0 %v640
        %725 = vmatprep.subr.bf16.mxu0 0
        %726 = vmatpush1.bf16.msra.mxu0 %v643
        %727 = vmatprep.subr.bf16.mxu0 0
        %728 = vmatpush1.bf16.msra.mxu0 0
        %729 = vmatprep.subr.bf16.mxu0 0
        %730 = vmatpush1.bf16.msra.mxu0 0
        %731 = vmatprep.subr.bf16.mxu0 0
        %732 = vmatpush1.bf16.msra.mxu0 0
        %733 = vmatprep.subr.bf16.mxu0 0
        %734 = vmatpush1.bf16.msra.mxu0 0
        %735 = vmatprep.subr.bf16.mxu0 0
        %736 = vmatpush1.bf16.msra.mxu0 0
        %737 = vmatprep.subr.bf16.mxu0 0
        %738 = vmatpush1.bf16.msra.mxu0 0
        %739 = vmatprep.subr.bf16.mxu0 0
        %740 = vmatpush1.bf16.msra.mxu0 0
        %741 = vmatprep.subr.bf16.mxu0 0
        %742 = vmatpush1.bf16.msra.mxu0 0
        %743 = vmatprep.mubr.bf16.mxu0 0
        %744 = vmatmul.mubr.bf16.gmra.mrb[0].mxu0 %v538
        %v745 = vpop.f32.mrb[0].mxu0
        %v746 = vadd.f32 %v530, %v745
        %v747 = vpop.f32.mrb[0].mxu0
        %v748 = vpop.f32.mrb[0].mxu0
        %v749 = vadd.f32 %v530, %v748
        %v750 = vpop.f32.mrb[0].mxu0
        %751 = vdwg.mxu0
        %v752 = vld [vmem:[%s479] sm:$0x1]
        %v753 = vpack.c.bf16 %v707, %v703
        %v754 = vpack.c.bf16 %v709, %v705
        %v755 = vpack.c.bf16 %v749, %v746
        %v757 = vlaneseq
        %v758 = vshrl.u32 %v757, 7
        %v759 = vsub.s32 0, %v758
        %v760 = vrot.slane %v752, %v759
        %vm762 = vcmask 261120
        %v764 = vsel %vm762, %v753, 0
        %v767 = vsel %vm762, %v754, 0
        %769 = vmatprep.subr.bf16.mxu0 0
        %770 = vmatpush1.bf16.xpose.msra.mxu0 %v767
        %771 = vmatprep.subr.bf16.mxu0 0
        %772 = vmatpush1.bf16.xpose.msra.mxu0 0
        %773 = vmatprep.subr.bf16.mxu0 0
        %774 = vmatpush1.bf16.xpose.msra.mxu0 0
        %775 = vmatprep.subr.bf16.mxu0 0
        %776 = vmatpush1.bf16.xpose.msra.mxu0 0
        %777 = vmatprep.subr.bf16.mxu0 0
        %778 = vmatpush1.bf16.xpose.msra.mxu0 0
        %779 = vmatprep.subr.bf16.mxu0 0
        %780 = vmatpush1.bf16.xpose.msra.mxu0 0
        %781 = vmatprep.subr.bf16.mxu0 0
        %782 = vmatpush1.bf16.xpose.msra.mxu0 0
        %783 = vmatprep.subr.bf16.mxu0 0
        %784 = vmatpush1.bf16.xpose.msra.mxu0 0
        %785 = vmatprep.subr.bf16.mxu0 0
        %786 = vmatpush1.bf16.xpose.msra.mxu0 0
        %787 = vmatprep.subr.bf16.mxu0 0
        %788 = vmatpush1.bf16.xpose.msra.mxu0 0
        %789 = vmatprep.subr.bf16.mxu0 0
        %790 = vmatpush1.bf16.xpose.msra.mxu0 0
        %791 = vmatprep.subr.bf16.mxu0 0
        %792 = vmatpush1.bf16.xpose.msra.mxu0 0
        %793 = vmatprep.subr.bf16.mxu0 0
        %794 = vmatpush1.bf16.xpose.msra.mxu0 0
        %795 = vmatprep.subr.bf16.mxu0 0
        %796 = vmatpush1.bf16.xpose.msra.mxu0 0
        %797 = vmatprep.subr.bf16.mxu0 0
        %798 = vmatpush1.bf16.xpose.msra.mxu0 0
        %799 = vmatprep.subr.bf16.mxu0 0
        %800 = vmatpush1.bf16.xpose.msra.mxu0 0
        %801 = vmatprep.mubr.bf16.mxu0 0
        %802 = vmatmul.mubr.bf16.gmra.mrb[0].mxu0 %v764
        %v803 = vpop.f32.mrb[0].mxu0
        %v804 = vadd.f32 %v760, %v803
        %v805 = vpop.f32.mrb[0].mxu0
        %v806 = vpop.f32.mrb[0].mxu0
        %v807 = vadd.f32 %v760, %v806
        %v808 = vpop.f32.mrb[0].mxu0
        %809 = vdwg.mxu0
        %vm810 = vcmask 130048
        %v811 = vsel %vm810, %v804, -inf
        %812 = vmax.xlane.f32.xlu0 %v811
        %v813 = vpop.xlane.xlu0 %812
        %v814 = vsel %vm810, %v807, -inf
        %815 = vmax.xlane.f32.xlu0 %v814
        %v816 = vpop.xlane.xlu0 %815
        %v817 = vsub.f32 %v804, %v813
        %v818 = vsub.f32 %v807, %v816
        %v819 = vmul.f32 %v817, 1.442695
        %v820 = vpow.pop %v819
        %v821 = vmul.f32 %v818, 1.442695
        %v822 = vpow.pop %v821
        %v823 = vsel %vm810, %v820, 0.0
        %824 = vadd.xlane.f32.xlu0 %v823
        %v825 = vpop.xlane.xlu0 %824
        %v826 = vsel %vm810, %v822, 0.0
        %827 = vadd.xlane.f32.xlu0 %v826
        %v828 = vpop.xlane.xlu0 %827
        %v829 = vrcp.pop %v825
        %v830 = vrcp.pop %v828
        %v831 = vmul.f32 %v820, %v829
        %v832 = vmul.f32 %v822, %v830
        %v833 = vpack.c.bf16 %v832, %v831
        %v835 = vsel %vm810, %v833, 0
        %837 = vmatprep.subr.bf16.mxu0 0
        %838 = vmatpush1.bf16.msra.mxu0 %v755
        %839 = vmatprep.subr.bf16.mxu0 0
        %840 = vmatpush1.bf16.msra.mxu0 0
        %841 = vmatprep.subr.bf16.mxu0 0
        %842 = vmatpush1.bf16.msra.mxu0 0
        %843 = vmatprep.subr.bf16.mxu0 0
        %844 = vmatpush1.bf16.msra.mxu0 0
        %845 = vmatprep.subr.bf16.mxu0 0
        %846 = vmatpush1.bf16.msra.mxu0 0
        %847 = vmatprep.subr.bf16.mxu0 0
        %848 = vmatpush1.bf16.msra.mxu0 0
        %849 = vmatprep.subr.bf16.mxu0 0
        %850 = vmatpush1.bf16.msra.mxu0 0
        %851 = vmatprep.subr.bf16.mxu0 0
        %852 = vmatpush1.bf16.msra.mxu0 0
        %853 = vmatprep.subr.bf16.mxu0 0
        %854 = vmatpush1.bf16.msra.mxu0 0
        %855 = vmatprep.subr.bf16.mxu0 0
        %856 = vmatpush1.bf16.msra.mxu0 0
        %857 = vmatprep.subr.bf16.mxu0 0
        %858 = vmatpush1.bf16.msra.mxu0 0
        %859 = vmatprep.subr.bf16.mxu0 0
        %860 = vmatpush1.bf16.msra.mxu0 0
        %861 = vmatprep.subr.bf16.mxu0 0
        %862 = vmatpush1.bf16.msra.mxu0 0
        %863 = vmatprep.subr.bf16.mxu0 0
        %864 = vmatpush1.bf16.msra.mxu0 0
        %865 = vmatprep.subr.bf16.mxu0 0
        %866 = vmatpush1.bf16.msra.mxu0 0
        %867 = vmatprep.subr.bf16.mxu0 0
        %868 = vmatpush1.bf16.msra.mxu0 0
        %869 = vmatprep.mubr.bf16.mxu0 0
        %870 = vmatmul.mubr.bf16.gmra.mrb[0].mxu0 %v835
        %v871 = vpop.f32.mrb[0].mxu0
        %v872 = vadd.f32 0.0, %v871
        %v873 = vpop.f32.mrb[0].mxu0
        %v874 = vpop.f32.mrb[0].mxu0
        %v875 = vadd.f32 0.0, %v874
        %v876 = vpop.f32.mrb[0].mxu0
        %877 = vdwg.mxu0
        %879 = vrot.lane.b32.xlu0 %v753, 96
        %v880 = vpop.permute.xlu0 %879
        %882 = vrot.lane.b32.xlu0 %v754, 96
        %v883 = vpop.permute.xlu0 %882
        %v885 = vsel %vm762, %v880, 0
        %v888 = vsel %vm762, %v883, 0
        %890 = vmatprep.subr.bf16.mxu0 0
        %891 = vmatpush1.bf16.xpose.msra.mxu0 %v888
        %892 = vmatprep.subr.bf16.mxu0 0
        %893 = vmatpush1.bf16.xpose.msra.mxu0 0
        %894 = vmatprep.subr.bf16.mxu0 0
        %895 = vmatpush1.bf16.xpose.msra.mxu0 0
        %896 = vmatprep.subr.bf16.mxu0 0
        %897 = vmatpush1.bf16.xpose.msra.mxu0 0
        %898 = vmatprep.subr.bf16.mxu0 0
        %899 = vmatpush1.bf16.xpose.msra.mxu0 0
        %900 = vmatprep.subr.bf16.mxu0 0
        %901 = vmatpush1.bf16.xpose.msra.mxu0 0
        %902 = vmatprep.subr.bf16.mxu0 0
        %903 = vmatpush1.bf16.xpose.msra.mxu0 0
        %904 = vmatprep.subr.bf16.mxu0 0
        %905 = vmatpush1.bf16.xpose.msra.mxu0 0
        %906 = vmatprep.subr.bf16.mxu0 0
        %907 = vmatpush1.bf16.xpose.msra.mxu0 0
        %908 = vmatprep.subr.bf16.mxu0 0
        %909 = vmatpush1.bf16.xpose.msra.mxu0 0
        %910 = vmatprep.subr.bf16.mxu0 0
        %911 = vmatpush1.bf16.xpose.msra.mxu0 0
        %912 = vmatprep.subr.bf16.mxu0 0
        %913 = vmatpush1.bf16.xpose.msra.mxu0 0
        %914 = vmatprep.subr.bf16.mxu0 0
        %915 = vmatpush1.bf16.xpose.msra.mxu0 0
        %916 = vmatprep.subr.bf16.mxu0 0
        %917 = vmatpush1.bf16.xpose.msra.mxu0 0
        %918 = vmatprep.subr.bf16.mxu0 0
        %919 = vmatpush1.bf16.xpose.msra.mxu0 0
        %920 = vmatprep.subr.bf16.mxu0 0
        %921 = vmatpush1.bf16.xpose.msra.mxu0 0
        %922 = vmatprep.mubr.bf16.mxu0 0
        %923 = vmatmul.mubr.bf16.gmra.mrb[0].mxu0 %v885
        %v924 = vpop.f32.mrb[0].mxu0
        %v925 = vadd.f32 %v760, %v924
        %v926 = vpop.f32.mrb[0].mxu0
        %v927 = vpop.f32.mrb[0].mxu0
        %v928 = vadd.f32 %v760, %v927
        %v929 = vpop.f32.mrb[0].mxu0
        %930 = vdwg.mxu0
        %v931 = vsel %vm810, %v925, -inf
        %932 = vmax.xlane.f32.xlu0 %v931
        %v933 = vpop.xlane.xlu0 %932
        %v934 = vsel %vm810, %v928, -inf
        %935 = vmax.xlane.f32.xlu0 %v934
        %v936 = vpop.xlane.xlu0 %935
        %v937 = vsub.f32 %v925, %v933
        %v938 = vsub.f32 %v928, %v936
        %v939 = vmul.f32 %v937, 1.442695
        %v940 = vpow.pop %v939
        %v941 = vmul.f32 %v938, 1.442695
        %v942 = vpow.pop %v941
        %v943 = vsel %vm810, %v940, 0.0
        %944 = vadd.xlane.f32.xlu0 %v943
        %v945 = vpop.xlane.xlu0 %944
        %v946 = vsel %vm810, %v942, 0.0
        %947 = vadd.xlane.f32.xlu0 %v946
        %v948 = vpop.xlane.xlu0 %947
        %v949 = vrcp.pop %v945
        %v950 = vrcp.pop %v948
        %v951 = vmul.f32 %v940, %v949
        %v952 = vmul.f32 %v942, %v950
        %v953 = vpack.c.bf16 %v952, %v951
        %955 = vrot.lane.b32.xlu0 %v755, 96
        %v956 = vpop.permute.xlu0 %955
        %v959 = vsel %vm810, %v953, 0
        %961 = vmatprep.subr.bf16.mxu0 0
        %962 = vmatpush1.bf16.msra.mxu0 %v956
        %963 = vmatprep.subr.bf16.mxu0 0
        %964 = vmatpush1.bf16.msra.mxu0 0
        %965 = vmatprep.subr.bf16.mxu0 0
        %966 = vmatpush1.bf16.msra.mxu0 0
        %967 = vmatprep.subr.bf16.mxu0 0
        %968 = vmatpush1.bf16.msra.mxu0 0
        %969 = vmatprep.subr.bf16.mxu0 0
        %970 = vmatpush1.bf16.msra.mxu0 0
        %971 = vmatprep.subr.bf16.mxu0 0
        %972 = vmatpush1.bf16.msra.mxu0 0
        %973 = vmatprep.subr.bf16.mxu0 0
        %974 = vmatpush1.bf16.msra.mxu0 0
        %975 = vmatprep.subr.bf16.mxu0 0
        %976 = vmatpush1.bf16.msra.mxu0 0
        %977 = vmatprep.subr.bf16.mxu0 0
        %978 = vmatpush1.bf16.msra.mxu0 0
        %979 = vmatprep.subr.bf16.mxu0 0
        %980 = vmatpush1.bf16.msra.mxu0 0
        %981 = vmatprep.subr.bf16.mxu0 0
        %982 = vmatpush1.bf16.msra.mxu0 0
        %983 = vmatprep.subr.bf16.mxu0 0
        %984 = vmatpush1.bf16.msra.mxu0 0
        %985 = vmatprep.subr.bf16.mxu0 0
        %986 = vmatpush1.bf16.msra.mxu0 0
        %987 = vmatprep.subr.bf16.mxu0 0
        %988 = vmatpush1.bf16.msra.mxu0 0
        %989 = vmatprep.subr.bf16.mxu0 0
        %990 = vmatpush1.bf16.msra.mxu0 0
        %991 = vmatprep.subr.bf16.mxu0 0
        %992 = vmatpush1.bf16.msra.mxu0 0
        %993 = vmatprep.mubr.bf16.mxu0 0
        %994 = vmatmul.mubr.bf16.gmra.mrb[0].mxu0 %v959
        %v995 = vpop.f32.mrb[0].mxu0
        %v996 = vadd.f32 0.0, %v995
        %v997 = vpop.f32.mrb[0].mxu0
        %v998 = vpop.f32.mrb[0].mxu0
        %v999 = vadd.f32 0.0, %v998
        %v1000 = vpop.f32.mrb[0].mxu0
        %1001 = vdwg.mxu0
        %1002 = vrot.lane.b32.xlu0 %v753, 64
        %v1003 = vpop.permute.xlu0 %1002
        %1004 = vrot.lane.b32.xlu0 %v754, 64
        %v1005 = vpop.permute.xlu0 %1004
        %v1007 = vsel %vm762, %v1003, 0
        %v1010 = vsel %vm762, %v1005, 0
        %1012 = vmatprep.subr.bf16.mxu0 0
        %1013 = vmatpush1.bf16.xpose.msra.mxu0 %v1010
        %1014 = vmatprep.subr.bf16.mxu0 0
        %1015 = vmatpush1.bf16.xpose.msra.mxu0 0
        %1016 = vmatprep.subr.bf16.mxu0 0
        %1017 = vmatpush1.bf16.xpose.msra.mxu0 0
        %1018 = vmatprep.subr.bf16.mxu0 0
        %1019 = vmatpush1.bf16.xpose.msra.mxu0 0
        %1020 = vmatprep.subr.bf16.mxu0 0
        %1021 = vmatpush1.bf16.xpose.msra.mxu0 0
        %1022 = vmatprep.subr.bf16.mxu0 0
        %1023 = vmatpush1.bf16.xpose.msra.mxu0 0
        %1024 = vmatprep.subr.bf16.mxu0 0
        %1025 = vmatpush1.bf16.xpose.msra.mxu0 0
        %1026 = vmatprep.subr.bf16.mxu0 0
        %1027 = vmatpush1.bf16.xpose.msra.mxu0 0
        %1028 = vmatprep.subr.bf16.mxu0 0
        %1029 = vmatpush1.bf16.xpose.msra.mxu0 0
        %1030 = vmatprep.subr.bf16.mxu0 0
        %1031 = vmatpush1.bf16.xpose.msra.mxu0 0
        %1032 = vmatprep.subr.bf16.mxu0 0
        %1033 = vmatpush1.bf16.xpose.msra.mxu0 0
        %1034 = vmatprep.subr.bf16.mxu0 0
        %1035 = vmatpush1.bf16.xpose.msra.mxu0 0
        %1036 = vmatprep.subr.bf16.mxu0 0
        %1037 = vmatpush1.bf16.xpose.msra.mxu0 0
        %1038 = vmatprep.subr.bf16.mxu0 0
        %1039 = vmatpush1.bf16.xpose.msra.mxu0 0
        %1040 = vmatprep.subr.bf16.mxu0 0
        %1041 = vmatpush1.bf16.xpose.msra.mxu0 0
        %1042 = vmatprep.subr.bf16.mxu0 0
        %1043 = vmatpush1.bf16.xpose.msra.mxu0 0
        %1044 = vmatprep.mubr.bf16.mxu0 0
        %1045 = vmatmul.mubr.bf16.gmra.mrb[0].mxu0 %v1007
        %v1046 = vpop.f32.mrb[0].mxu0
        %v1047 = vadd.f32 %v760, %v1046
        %v1048 = vpop.f32.mrb[0].mxu0
        %v1049 = vpop.f32.mrb[0].mxu0
        %v1050 = vadd.f32 %v760, %v1049
        %v1051 = vpop.f32.mrb[0].mxu0
        %1052 = vdwg.mxu0
        %v1053 = vsel %vm810, %v1047, -inf
        %1054 = vmax.xlane.f32.xlu0 %v1053
        %v1055 = vpop.xlane.xlu0 %1054
        %v1056 = vsel %vm810, %v1050, -inf
        %1057 = vmax.xlane.f32.xlu0 %v1056
        %v1058 = vpop.xlane.xlu0 %1057
        %v1059 = vsub.f32 %v1047, %v1055
        %v1060 = vsub.f32 %v1050, %v1058
        %v1061 = vmul.f32 %v1059, 1.442695
        %v1062 = vpow.pop %v1061
        %v1063 = vmul.f32 %v1060, 1.442695
        %v1064 = vpow.pop %v1063
        %v1065 = vsel %vm810, %v1062, 0.0
        %1066 = vadd.xlane.f32.xlu0 %v1065
        %v1067 = vpop.xlane.xlu0 %1066
        %v1068 = vsel %vm810, %v1064, 0.0
        %1069 = vadd.xlane.f32.xlu0 %v1068
        %v1070 = vpop.xlane.xlu0 %1069
        %v1071 = vrcp.pop %v1067
        %v1072 = vrcp.pop %v1070
        %v1073 = vmul.f32 %v1062, %v1071
        %v1074 = vmul.f32 %v1064, %v1072
        %v1075 = vpack.c.bf16 %v1074, %v1073
        %1076 = vrot.lane.b32.xlu0 %v755, 64
        %v1077 = vpop.permute.xlu0 %1076
        %v1080 = vsel %vm810, %v1075, 0
        %1082 = vmatprep.subr.bf16.mxu0 0
        %1083 = vmatpush1.bf16.msra.mxu0 %v1077
        %1084 = vmatprep.subr.bf16.mxu0 0
        %1085 = vmatpush1.bf16.msra.mxu0 0
        %1086 = vmatprep.subr.bf16.mxu0 0
        %1087 = vmatpush1.bf16.msra.mxu0 0
        %1088 = vmatprep.subr.bf16.mxu0 0
        %1089 = vmatpush1.bf16.msra.mxu0 0
        %1090 = vmatprep.subr.bf16.mxu0 0
        %1091 = vmatpush1.bf16.msra.mxu0 0
        %1092 = vmatprep.subr.bf16.mxu0 0
        %1093 = vmatpush1.bf16.msra.mxu0 0
        %1094 = vmatprep.subr.bf16.mxu0 0
        %1095 = vmatpush1.bf16.msra.mxu0 0
        %1096 = vmatprep.subr.bf16.mxu0 0
        %1097 = vmatpush1.bf16.msra.mxu0 0
        %1098 = vmatprep.subr.bf16.mxu0 0
        %1099 = vmatpush1.bf16.msra.mxu0 0
        %1100 = vmatprep.subr.bf16.mxu0 0
        %1101 = vmatpush1.bf16.msra.mxu0 0
        %1102 = vmatprep.subr.bf16.mxu0 0
        %1103 = vmatpush1.bf16.msra.mxu0 0
        %1104 = vmatprep.subr.bf16.mxu0 0
        %1105 = vmatpush1.bf16.msra.mxu0 0
        %1106 = vmatprep.subr.bf16.mxu0 0
        %1107 = vmatpush1.bf16.msra.mxu0 0
        %1108 = vmatprep.subr.bf16.mxu0 0
        %1109 = vmatpush1.bf16.msra.mxu0 0
        %1110 = vmatprep.subr.bf16.mxu0 0
        %1111 = vmatpush1.bf16.msra.mxu0 0
        %1112 = vmatprep.subr.bf16.mxu0 0
        %1113 = vmatpush1.bf16.msra.mxu0 0
        %1114 = vmatprep.mubr.bf16.mxu0 0
        %1115 = vmatmul.mubr.bf16.gmra.mrb[0].mxu0 %v1080
        %v1116 = vpop.f32.mrb[0].mxu0
        %v1117 = vadd.f32 0.0, %v1116
        %v1118 = vpop.f32.mrb[0].mxu0
        %v1119 = vpop.f32.mrb[0].mxu0
        %v1120 = vadd.f32 0.0, %v1119
        %v1121 = vpop.f32.mrb[0].mxu0
        %1122 = vdwg.mxu0
        %1123 = vrot.lane.b32.xlu0 %v753, 32
        %v1124 = vpop.permute.xlu0 %1123
        %1125 = vrot.lane.b32.xlu0 %v754, 32
        %v1126 = vpop.permute.xlu0 %1125
        %v1128 = vsel %vm762, %v1124, 0
        %v1131 = vsel %vm762, %v1126, 0
        %1133 = vmatprep.subr.bf16.mxu0 0
        %1134 = vmatpush1.bf16.xpose.msra.mxu0 %v1131
        %1135 = vmatprep.subr.bf16.mxu0 0
        %1136 = vmatpush1.bf16.xpose.msra.mxu0 0
        %1137 = vmatprep.subr.bf16.mxu0 0
        %1138 = vmatpush1.bf16.xpose.msra.mxu0 0
        %1139 = vmatprep.subr.bf16.mxu0 0
        %1140 = vmatpush1.bf16.xpose.msra.mxu0 0
        %1141 = vmatprep.subr.bf16.mxu0 0
        %1142 = vmatpush1.bf16.xpose.msra.mxu0 0
        %1143 = vmatprep.subr.bf16.mxu0 0
        %1144 = vmatpush1.bf16.xpose.msra.mxu0 0
        %1145 = vmatprep.subr.bf16.mxu0 0
        %1146 = vmatpush1.bf16.xpose.msra.mxu0 0
        %1147 = vmatprep.subr.bf16.mxu0 0
        %1148 = vmatpush1.bf16.xpose.msra.mxu0 0
        %1149 = vmatprep.subr.bf16.mxu0 0
        %1150 = vmatpush1.bf16.xpose.msra.mxu0 0
        %1151 = vmatprep.subr.bf16.mxu0 0
        %1152 = vmatpush1.bf16.xpose.msra.mxu0 0
        %1153 = vmatprep.subr.bf16.mxu0 0
        %1154 = vmatpush1.bf16.xpose.msra.mxu0 0
        %1155 = vmatprep.subr.bf16.mxu0 0
        %1156 = vmatpush1.bf16.xpose.msra.mxu0 0
        %1157 = vmatprep.subr.bf16.mxu0 0
        %1158 = vmatpush1.bf16.xpose.msra.mxu0 0
        %1159 = vmatprep.subr.bf16.mxu0 0
        %1160 = vmatpush1.bf16.xpose.msra.mxu0 0
        %1161 = vmatprep.subr.bf16.mxu0 0
        %1162 = vmatpush1.bf16.xpose.msra.mxu0 0
        %1163 = vmatprep.subr.bf16.mxu0 0
        %1164 = vmatpush1.bf16.xpose.msra.mxu0 0
        %1165 = vmatprep.mubr.bf16.mxu0 0
        %1166 = vmatmul.mubr.bf16.gmra.mrb[0].mxu0 %v1128
        %v1167 = vpop.f32.mrb[0].mxu0
        %v1168 = vadd.f32 %v760, %v1167
        %v1169 = vpop.f32.mrb[0].mxu0
        %v1170 = vpop.f32.mrb[0].mxu0
        %v1171 = vadd.f32 %v760, %v1170
        %v1172 = vpop.f32.mrb[0].mxu0
        %1173 = vdwg.mxu0
        %v1174 = vsel %vm810, %v1168, -inf
        %1175 = vmax.xlane.f32.xlu0 %v1174
        %v1176 = vpop.xlane.xlu0 %1175
        %v1177 = vsel %vm810, %v1171, -inf
        %1178 = vmax.xlane.f32.xlu0 %v1177
        %v1179 = vpop.xlane.xlu0 %1178
        %v1180 = vsub.f32 %v1168, %v1176
        %v1181 = vsub.f32 %v1171, %v1179
        %v1182 = vmul.f32 %v1180, 1.442695
        %v1183 = vpow.pop %v1182
        %v1184 = vmul.f32 %v1181, 1.442695
        %v1185 = vpow.pop %v1184
        %v1186 = vsel %vm810, %v1183, 0.0
        %1187 = vadd.xlane.f32.xlu0 %v1186
        %v1188 = vpop.xlane.xlu0 %1187
        %v1189 = vsel %vm810, %v1185, 0.0
        %1190 = vadd.xlane.f32.xlu0 %v1189
        %v1191 = vpop.xlane.xlu0 %1190
        %v1192 = vrcp.pop %v1188
        %v1193 = vrcp.pop %v1191
        %v1194 = vmul.f32 %v1183, %v1192
        %v1195 = vmul.f32 %v1185, %v1193
        %v1196 = vpack.c.bf16 %v1195, %v1194
        %1197 = vrot.lane.b32.xlu0 %v755, 32
        %v1198 = vpop.permute.xlu0 %1197
        %v1201 = vsel %vm810, %v1196, 0
        %1203 = vmatprep.subr.bf16.mxu0 0
        %1204 = vmatpush1.bf16.msra.mxu0 %v1198
        %1205 = vmatprep.subr.bf16.mxu0 0
        %1206 = vmatpush1.bf16.msra.mxu0 0
        %1207 = vmatprep.subr.bf16.mxu0 0
        %1208 = vmatpush1.bf16.msra.mxu0 0
        %1209 = vmatprep.subr.bf16.mxu0 0
        %1210 = vmatpush1.bf16.msra.mxu0 0
        %1211 = vmatprep.subr.bf16.mxu0 0
        %1212 = vmatpush1.bf16.msra.mxu0 0
        %1213 = vmatprep.subr.bf16.mxu0 0
        %1214 = vmatpush1.bf16.msra.mxu0 0
        %1215 = vmatprep.subr.bf16.mxu0 0
        %1216 = vmatpush1.bf16.msra.mxu0 0
        %1217 = vmatprep.subr.bf16.mxu0 0
        %1218 = vmatpush1.bf16.msra.mxu0 0
        %1219 = vmatprep.subr.bf16.mxu0 0
        %1220 = vmatpush1.bf16.msra.mxu0 0
        %1221 = vmatprep.subr.bf16.mxu0 0
        %1222 = vmatpush1.bf16.msra.mxu0 0
        %1223 = vmatprep.subr.bf16.mxu0 0
        %1224 = vmatpush1.bf16.msra.mxu0 0
        %1225 = vmatprep.subr.bf16.mxu0 0
        %1226 = vmatpush1.bf16.msra.mxu0 0
        %1227 = vmatprep.subr.bf16.mxu0 0
        %1228 = vmatpush1.bf16.msra.mxu0 0
        %1229 = vmatprep.subr.bf16.mxu0 0
        %1230 = vmatpush1.bf16.msra.mxu0 0
        %1231 = vmatprep.subr.bf16.mxu0 0
        %1232 = vmatpush1.bf16.msra.mxu0 0
        %1233 = vmatprep.subr.bf16.mxu0 0
        %1234 = vmatpush1.bf16.msra.mxu0 0
        %1235 = vmatprep.mubr.bf16.mxu0 0
        %1236 = vmatmul.mubr.bf16.gmra.mrb[0].mxu0 %v1201
        %v1237 = vpop.f32.mrb[0].mxu0
        %v1238 = vadd.f32 0.0, %v1237
        %v1239 = vpop.f32.mrb[0].mxu0
        %v1240 = vpop.f32.mrb[0].mxu0
        %v1241 = vadd.f32 0.0, %v1240
        %v1242 = vpop.f32.mrb[0].mxu0
        %1243 = vdwg.mxu0
        %1246 = vrot.lane.b32.xlu0 %v996, 32
        %v1247 = vpop.permute.xlu0 %1246
        %1248 = vrot.lane.b32.xlu0 %v999, 32
        %v1249 = vpop.permute.xlu0 %1248
        %1254 = vrot.lane.b32.xlu0 %v1117, 64
        %v1255 = vpop.permute.xlu0 %1254
        %1256 = vrot.lane.b32.xlu0 %v1120, 64
        %v1257 = vpop.permute.xlu0 %1256
        %1262 = vrot.lane.b32.xlu0 %v1238, 96
        %v1263 = vpop.permute.xlu0 %1262
        %1264 = vrot.lane.b32.xlu0 %v1241, 96
        %v1265 = vpop.permute.xlu0 %1264
        %v1268 = vsel %vm762, %v872, %v1247
        %v1269 = vsel %vm762, %v875, %v1249
        %vm1270 = vcmask 523264
        %v1271 = vsel %vm1270, %v1268, %v1255
        %v1272 = vsel %vm1270, %v1269, %v1257
        %vm1273 = vcmask 785408
        %v1274 = vsel %vm1273, %v1271, %v1263
        %v1275 = vsel %vm1273, %v1272, %v1265
        %v1276 = vpack.c.bf16 %v1275, %v1274
        %v1277 = vld [vmem:[%s4] sm:$0xf]
        %v1278 = vld [vmem:[%s4 + $0x4] sm:$0xf]
        %v1279 = vld [vmem:[%s4 + $0x8] sm:$0xf]
        %v1280 = vld [vmem:[%s4 + $0xc] sm:$0xf]
        %v1281 = vld [vmem:[%s4 + $0x10] sm:$0xf]
        %v1282 = vld [vmem:[%s4 + $0x14] sm:$0xf]
        %v1283 = vld [vmem:[%s4 + $0x18] sm:$0xf]
        %v1284 = vld [vmem:[%s4 + $0x1c] sm:$0xf]
        %v1285 = vld [vmem:[%s4 + $0x20] sm:$0xf]
        %v1286 = vld [vmem:[%s4 + $0x24] sm:$0xf]
        %v1287 = vld [vmem:[%s4 + $0x28] sm:$0xf]
        %v1288 = vld [vmem:[%s4 + $0x2c] sm:$0xf]
        %v1289 = vld [vmem:[%s4 + $0x30] sm:$0xf]
        %v1290 = vld [vmem:[%s4 + $0x34] sm:$0xf]
        %v1291 = vld [vmem:[%s4 + $0x38] sm:$0xf]
        %v1292 = vld [vmem:[%s4 + $0x3c] sm:$0xf]
        %v1293 = vld [vmem:[%s5] sm:$0x1]
        %v1295 = vlaneseq
        %v1296 = vshrl.u32 %v1295, 7
        %v1297 = vsub.s32 0, %v1296
        %v1298 = vrot.slane %v1293, %v1297
        %v1316 = vunpack.c.l.b16 %v1277
        %v1317 = vunpack.c.l.b16 %v1278
        %v1318 = vunpack.c.l.b16 %v1279
        %v1319 = vunpack.c.l.b16 %v1280
        %v1320 = vunpack.c.l.b16 %v1281
        %v1321 = vunpack.c.l.b16 %v1282
        %v1322 = vunpack.c.l.b16 %v1283
        %v1323 = vunpack.c.l.b16 %v1284
        %v1324 = vunpack.c.l.b16 %v1285
        %v1325 = vunpack.c.l.b16 %v1286
        %v1326 = vunpack.c.l.b16 %v1287
        %v1327 = vunpack.c.l.b16 %v1288
        %v1328 = vunpack.c.l.b16 %v1289
        %v1329 = vunpack.c.l.b16 %v1290
        %v1330 = vunpack.c.l.b16 %v1291
        %v1331 = vunpack.c.l.b16 %v1292
        %v1332 = vpack.c.b16 %v1317, %v1316
        %v1333 = vpack.c.b16 %v1319, %v1318
        %v1334 = vpack.c.b16 %v1321, %v1320
        %v1335 = vpack.c.b16 %v1323, %v1322
        %v1336 = vpack.c.b16 %v1325, %v1324
        %v1337 = vpack.c.b16 %v1327, %v1326
        %v1338 = vpack.c.b16 %v1329, %v1328
        %v1339 = vpack.c.b16 %v1331, %v1330
        %1348 = vmatprep.subr.bf16.mxu0 0
        %1349 = vmatpush1.bf16.msra.mxu0 %v1332
        %1350 = vmatprep.subr.bf16.mxu0 0
        %1351 = vmatpush1.bf16.msra.mxu0 %v1333
        %1352 = vmatprep.subr.bf16.mxu0 0
        %1353 = vmatpush1.bf16.msra.mxu0 %v1334
        %1354 = vmatprep.subr.bf16.mxu0 0
        %1355 = vmatpush1.bf16.msra.mxu0 %v1335
        %1356 = vmatprep.subr.bf16.mxu0 0
        %1357 = vmatpush1.bf16.msra.mxu0 %v1336
        %1358 = vmatprep.subr.bf16.mxu0 0
        %1359 = vmatpush1.bf16.msra.mxu0 %v1337
        %1360 = vmatprep.subr.bf16.mxu0 0
        %1361 = vmatpush1.bf16.msra.mxu0 %v1338
        %1362 = vmatprep.subr.bf16.mxu0 0
        %1363 = vmatpush1.bf16.msra.mxu0 %v1339
        %1364 = vmatprep.subr.bf16.mxu0 0
        %1365 = vmatpush1.bf16.msra.mxu0 0
        %1366 = vmatprep.subr.bf16.mxu0 0
        %1367 = vmatpush1.bf16.msra.mxu0 0
        %1368 = vmatprep.subr.bf16.mxu0 0
        %1369 = vmatpush1.bf16.msra.mxu0 0
        %1370 = vmatprep.subr.bf16.mxu0 0
        %1371 = vmatpush1.bf16.msra.mxu0 0
        %1372 = vmatprep.subr.bf16.mxu0 0
        %1373 = vmatpush1.bf16.msra.mxu0 0
        %1374 = vmatprep.subr.bf16.mxu0 0
        %1375 = vmatpush1.bf16.msra.mxu0 0
        %1376 = vmatprep.subr.bf16.mxu0 0
        %1377 = vmatpush1.bf16.msra.mxu0 0
        %1378 = vmatprep.subr.bf16.mxu0 0
        %1379 = vmatpush1.bf16.msra.mxu0 0
        %1380 = vmatprep.mubr.bf16.mxu0 0
        %1381 = vmatmul.mubr.bf16.gmra.mrb[0].mxu0 %v1276
        %v1382 = vpop.f32.mrb[0].mxu0
        %v1383 = vadd.f32 %v1298, %v1382
        %v1384 = vpop.f32.mrb[0].mxu0
        %v1385 = vpop.f32.mrb[0].mxu0
        %v1386 = vadd.f32 %v1298, %v1385
        %v1387 = vpop.f32.mrb[0].mxu0
        %1388 = vdwg.mxu0
        %v1389 = vadd.f32 %v1383, %v483
        %v1390 = vadd.f32 %v1386, %v484
        %1391 = vadd.xlane.f32.xlu0 %v1389
        %v1392 = vpop.xlane.xlu0 %1391
        %1393 = vadd.xlane.f32.xlu0 %v1390
        %v1394 = vpop.xlane.xlu0 %1393
        %v1395 = vrcp.pop 128.0
        %v1396 = vmul.f32 %v1392, %v1395
        %v1397 = vmul.f32 %v1394, %v1395
        %v1398 = vsub.f32 %v1389, %v1396
        %v1399 = vsub.f32 %v1390, %v1397
        %v1400 = vmul.f32 %v1398, %v1398
        %v1401 = vmul.f32 %v1399, %v1399
        %1402 = vadd.xlane.f32.xlu0 %v1400
        %v1403 = vpop.xlane.xlu0 %1402
        %1404 = vadd.xlane.f32.xlu0 %v1401
        %v1405 = vpop.xlane.xlu0 %1404
        %v1406 = vmul.f32 %v1403, %v1395
        %v1407 = vmul.f32 %v1405, %v1395
        %v1408 = vld [vmem:[%s6] sm:$0x1]
        %v1410 = vlaneseq
        %v1411 = vshrl.u32 %v1410, 7
        %v1412 = vsub.s32 0, %v1411
        %v1413 = vrot.slane %v1408, %v1412
        %v1415 = vmul.f32 %v1413, %v1398
        %v1416 = vmul.f32 %v1413, %v1399
        %v1417 = vadd.f32 %v1406, 1e-12
        %v1418 = vadd.f32 %v1407, 1e-12
        %v1419 = vrsqrt.pop %v1417
        %v1420 = vrsqrt.pop %v1418
        %v1421 = vmul.f32 %v1415, %v1419
        %v1422 = vmul.f32 %v1416, %v1420
        %v1423 = vld [vmem:[%s7] sm:$0x1]
        %v1425 = vlaneseq
        %v1426 = vshrl.u32 %v1425, 7
        %v1427 = vsub.s32 0, %v1426
        %v1428 = vrot.slane %v1423, %v1427
        %v1430 = vadd.f32 %v1421, %v1428
        %v1431 = vadd.f32 %v1422, %v1428
        %v1432 = vpack.c.bf16 %v1431, %v1430
        %v1433 = vld [vmem:[%s8] sm:$0xff]
        %v1434 = vld [vmem:[%s8 + $0x8] sm:$0xff]
        %v1435 = vld [vmem:[%s8 + $0x10] sm:$0xff]
        %v1436 = vld [vmem:[%s8 + $0x18] sm:$0xff]
        %v1437 = vld [vmem:[%s8 + $0x20] sm:$0xff]
        %v1438 = vld [vmem:[%s8 + $0x28] sm:$0xff]
        %v1439 = vld [vmem:[%s8 + $0x30] sm:$0xff]
        %v1440 = vld [vmem:[%s8 + $0x38] sm:$0xff]
        %v1441 = vld [vmem:[%s8 + $0x40] sm:$0xff]
        %v1442 = vld [vmem:[%s8 + $0x48] sm:$0xff]
        %v1443 = vld [vmem:[%s8 + $0x50] sm:$0xff]
        %v1444 = vld [vmem:[%s8 + $0x58] sm:$0xff]
        %v1445 = vld [vmem:[%s8 + $0x60] sm:$0xff]
        %v1446 = vld [vmem:[%s8 + $0x68] sm:$0xff]
        %v1447 = vld [vmem:[%s8 + $0x70] sm:$0xff]
        %v1448 = vld [vmem:[%s8 + $0x78] sm:$0xff]
        %v1449 = vld [vmem:[%s9] sm:$0x3]
        %v1451 = vlaneseq
        %v1452 = vshrl.u32 %v1451, 7
        %v1453 = vsub.s32 0, %v1452
        %v1454 = vrot.slane %v1449, %v1453
        %v1455 = vlaneseq
        %v1456 = vshrl.u32 %v1455, 7
        %v1457 = vsub.s32 1, %v1456
        %v1458 = vrot.slane %v1449, %v1457
        %v1477 = vunpack.c.l.b16 %v1433
        %v1478 = vunpack.c.h.b16 %v1433
        %v1479 = vunpack.c.l.b16 %v1434
        %v1480 = vunpack.c.h.b16 %v1434
        %v1481 = vunpack.c.l.b16 %v1435
        %v1482 = vunpack.c.h.b16 %v1435
        %v1483 = vunpack.c.l.b16 %v1436
        %v1484 = vunpack.c.h.b16 %v1436
        %v1485 = vunpack.c.l.b16 %v1437
        %v1486 = vunpack.c.h.b16 %v1437
        %v1487 = vunpack.c.l.b16 %v1438
        %v1488 = vunpack.c.h.b16 %v1438
        %v1489 = vunpack.c.l.b16 %v1439
        %v1490 = vunpack.c.h.b16 %v1439
        %v1491 = vunpack.c.l.b16 %v1440
        %v1492 = vunpack.c.h.b16 %v1440
        %v1493 = vunpack.c.l.b16 %v1441
        %v1494 = vunpack.c.h.b16 %v1441
        %v1495 = vunpack.c.l.b16 %v1442
        %v1496 = vunpack.c.h.b16 %v1442
        %v1497 = vunpack.c.l.b16 %v1443
        %v1498 = vunpack.c.h.b16 %v1443
        %v1499 = vunpack.c.l.b16 %v1444
        %v1500 = vunpack.c.h.b16 %v1444
        %v1501 = vunpack.c.l.b16 %v1445
        %v1502 = vunpack.c.h.b16 %v1445
        %v1503 = vunpack.c.l.b16 %v1446
        %v1504 = vunpack.c.h.b16 %v1446
        %v1505 = vunpack.c.l.b16 %v1447
        %v1506 = vunpack.c.h.b16 %v1447
        %v1507 = vunpack.c.l.b16 %v1448
        %v1508 = vunpack.c.h.b16 %v1448
        %v1509 = vpack.c.b16 %v1479, %v1477
        %v1510 = vpack.c.b16 %v1480, %v1478
        %v1511 = vpack.c.b16 %v1483, %v1481
        %v1512 = vpack.c.b16 %v1484, %v1482
        %v1513 = vpack.c.b16 %v1487, %v1485
        %v1514 = vpack.c.b16 %v1488, %v1486
        %v1515 = vpack.c.b16 %v1491, %v1489
        %v1516 = vpack.c.b16 %v1492, %v1490
        %v1517 = vpack.c.b16 %v1495, %v1493
        %v1518 = vpack.c.b16 %v1496, %v1494
        %v1519 = vpack.c.b16 %v1499, %v1497
        %v1520 = vpack.c.b16 %v1500, %v1498
        %v1521 = vpack.c.b16 %v1503, %v1501
        %v1522 = vpack.c.b16 %v1504, %v1502
        %v1523 = vpack.c.b16 %v1507, %v1505
        %v1524 = vpack.c.b16 %v1508, %v1506
        %1541 = vmatprep.subr.bf16.mxu0 %v1510
        %1542 = vmatpush1.bf16.msra.mxu0 %v1509
        %1543 = vmatprep.subr.bf16.mxu0 %v1512
        %1544 = vmatpush1.bf16.msra.mxu0 %v1511
        %1545 = vmatprep.subr.bf16.mxu0 %v1514
        %1546 = vmatpush1.bf16.msra.mxu0 %v1513
        %1547 = vmatprep.subr.bf16.mxu0 %v1516
        %1548 = vmatpush1.bf16.msra.mxu0 %v1515
        %1549 = vmatprep.subr.bf16.mxu0 %v1518
        %1550 = vmatpush1.bf16.msra.mxu0 %v1517
        %1551 = vmatprep.subr.bf16.mxu0 %v1520
        %1552 = vmatpush1.bf16.msra.mxu0 %v1519
        %1553 = vmatprep.subr.bf16.mxu0 %v1522
        %1554 = vmatpush1.bf16.msra.mxu0 %v1521
        %1555 = vmatprep.subr.bf16.mxu0 %v1524
        %1556 = vmatpush1.bf16.msra.mxu0 %v1523
        %1557 = vmatprep.subr.bf16.mxu0 0
        %1558 = vmatpush1.bf16.msra.mxu0 0
        %1559 = vmatprep.subr.bf16.mxu0 0
        %1560 = vmatpush1.bf16.msra.mxu0 0
        %1561 = vmatprep.subr.bf16.mxu0 0
        %1562 = vmatpush1.bf16.msra.mxu0 0
        %1563 = vmatprep.subr.bf16.mxu0 0
        %1564 = vmatpush1.bf16.msra.mxu0 0
        %1565 = vmatprep.subr.bf16.mxu0 0
        %1566 = vmatpush1.bf16.msra.mxu0 0
        %1567 = vmatprep.subr.bf16.mxu0 0
        %1568 = vmatpush1.bf16.msra.mxu0 0
        %1569 = vmatprep.subr.bf16.mxu0 0
        %1570 = vmatpush1.bf16.msra.mxu0 0
        %1571 = vmatprep.subr.bf16.mxu0 0
        %1572 = vmatpush1.bf16.msra.mxu0 0
        %1573 = vmatprep.mubr.bf16.mxu0 0
        %1574 = vmatmul.mubr.bf16.gmra.mrb[0].mxu0 %v1432
        %v1575 = vpop.f32.mrb[0].mxu0
        %v1576 = vadd.f32 %v1454, %v1575
        %v1577 = vpop.f32.mrb[0].mxu0
        %v1578 = vadd.f32 %v1458, %v1577
        %v1579 = vpop.f32.mrb[0].mxu0
        %v1580 = vadd.f32 %v1454, %v1579
        %v1581 = vpop.f32.mrb[0].mxu0
        %v1582 = vadd.f32 %v1458, %v1581
        %1583 = vdwg.mxu0
        %v1584 = vmax.f32 %v1576, 0.0
        %v1585 = vmax.f32 %v1578, 0.0
        %v1586 = vmax.f32 %v1580, 0.0
        %v1587 = vmax.f32 %v1582, 0.0
        %v1588 = vpack.c.bf16 %v1586, %v1584
        %v1589 = vpack.c.bf16 %v1587, %v1585
        %v1590 = vld [vmem:[%s10] sm:$0xf]
        %v1591 = vld [vmem:[%s10 + $0x4] sm:$0xf]
        %v1592 = vld [vmem:[%s10 + $0x8] sm:$0xf]
        %v1593 = vld [vmem:[%s10 + $0xc] sm:$0xf]
        %v1594 = vld [vmem:[%s10 + $0x10] sm:$0xf]
        %v1595 = vld [vmem:[%s10 + $0x14] sm:$0xf]
        %v1596 = vld [vmem:[%s10 + $0x18] sm:$0xf]
        %v1597 = vld [vmem:[%s10 + $0x1c] sm:$0xf]
        %v1598 = vld [vmem:[%s10 + $0x20] sm:$0xf]
        %v1599 = vld [vmem:[%s10 + $0x24] sm:$0xf]
        %v1600 = vld [vmem:[%s10 + $0x28] sm:$0xf]
        %v1601 = vld [vmem:[%s10 + $0x2c] sm:$0xf]
        %v1602 = vld [vmem:[%s10 + $0x30] sm:$0xf]
        %v1603 = vld [vmem:[%s10 + $0x34] sm:$0xf]
        %v1604 = vld [vmem:[%s10 + $0x38] sm:$0xf]
        %v1605 = vld [vmem:[%s10 + $0x3c] sm:$0xf]
        %v1606 = vld [vmem:[%s10 + $0x40] sm:$0xf]
        %v1607 = vld [vmem:[%s10 + $0x44] sm:$0xf]
        %v1608 = vld [vmem:[%s10 + $0x48] sm:$0xf]
        %v1609 = vld [vmem:[%s10 + $0x4c] sm:$0xf]
        %v1610 = vld [vmem:[%s10 + $0x50] sm:$0xf]
        %v1611 = vld [vmem:[%s10 + $0x54] sm:$0xf]
        %v1612 = vld [vmem:[%s10 + $0x58] sm:$0xf]
        %v1613 = vld [vmem:[%s10 + $0x5c] sm:$0xf]
        %v1614 = vld [vmem:[%s10 + $0x60] sm:$0xf]
        %v1615 = vld [vmem:[%s10 + $0x64] sm:$0xf]
        %v1616 = vld [vmem:[%s10 + $0x68] sm:$0xf]
        %v1617 = vld [vmem:[%s10 + $0x6c] sm:$0xf]
        %v1618 = vld [vmem:[%s10 + $0x70] sm:$0xf]
        %v1619 = vld [vmem:[%s10 + $0x74] sm:$0xf]
        %v1620 = vld [vmem:[%s10 + $0x78] sm:$0xf]
        %v1621 = vld [vmem:[%s10 + $0x7c] sm:$0xf]
        %v1622 = vld [vmem:[%s11] sm:$0x1]
        %v1624 = vlaneseq
        %v1625 = vshrl.u32 %v1624, 7
        %v1626 = vsub.s32 0, %v1625
        %v1627 = vrot.slane %v1622, %v1626
        %v1661 = vunpack.c.l.b16 %v1590
        %v1662 = vunpack.c.l.b16 %v1591
        %v1663 = vunpack.c.l.b16 %v1592
        %v1664 = vunpack.c.l.b16 %v1593
        %v1665 = vunpack.c.l.b16 %v1594
        %v1666 = vunpack.c.l.b16 %v1595
        %v1667 = vunpack.c.l.b16 %v1596
        %v1668 = vunpack.c.l.b16 %v1597
        %v1669 = vunpack.c.l.b16 %v1598
        %v1670 = vunpack.c.l.b16 %v1599
        %v1671 = vunpack.c.l.b16 %v1600
        %v1672 = vunpack.c.l.b16 %v1601
        %v1673 = vunpack.c.l.b16 %v1602
        %v1674 = vunpack.c.l.b16 %v1603
        %v1675 = vunpack.c.l.b16 %v1604
        %v1676 = vunpack.c.l.b16 %v1605
        %v1677 = vunpack.c.l.b16 %v1606
        %v1678 = vunpack.c.l.b16 %v1607
        %v1679 = vunpack.c.l.b16 %v1608
        %v1680 = vunpack.c.l.b16 %v1609
        %v1681 = vunpack.c.l.b16 %v1610
        %v1682 = vunpack.c.l.b16 %v1611
        %v1683 = vunpack.c.l.b16 %v1612
        %v1684 = vunpack.c.l.b16 %v1613
        %v1685 = vunpack.c.l.b16 %v1614
        %v1686 = vunpack.c.l.b16 %v1615
        %v1687 = vunpack.c.l.b16 %v1616
        %v1688 = vunpack.c.l.b16 %v1617
        %v1689 = vunpack.c.l.b16 %v1618
        %v1690 = vunpack.c.l.b16 %v1619
        %v1691 = vunpack.c.l.b16 %v1620
        %v1692 = vunpack.c.l.b16 %v1621
        %v1693 = vpack.c.b16 %v1662, %v1661
        %v1694 = vpack.c.b16 %v1664, %v1663
        %v1695 = vpack.c.b16 %v1666, %v1665
        %v1696 = vpack.c.b16 %v1668, %v1667
        %v1697 = vpack.c.b16 %v1670, %v1669
        %v1698 = vpack.c.b16 %v1672, %v1671
        %v1699 = vpack.c.b16 %v1674, %v1673
        %v1700 = vpack.c.b16 %v1676, %v1675
        %v1701 = vpack.c.b16 %v1678, %v1677
        %v1702 = vpack.c.b16 %v1680, %v1679
        %v1703 = vpack.c.b16 %v1682, %v1681
        %v1704 = vpack.c.b16 %v1684, %v1683
        %v1705 = vpack.c.b16 %v1686, %v1685
        %v1706 = vpack.c.b16 %v1688, %v1687
        %v1707 = vpack.c.b16 %v1690, %v1689
        %v1708 = vpack.c.b16 %v1692, %v1691
        %1725 = vmatprep.subr.bf16.mxu0 0
        %1726 = vmatpush1.bf16.msra.mxu0 %v1693
        %1727 = vmatprep.subr.bf16.mxu0 0
        %1728 = vmatpush1.bf16.msra.mxu0 %v1694
        %1729 = vmatprep.subr.bf16.mxu0 0
        %1730 = vmatpush1.bf16.msra.mxu0 %v1695
        %1731 = vmatprep.subr.bf16.mxu0 0
        %1732 = vmatpush1.bf16.msra.mxu0 %v1696
        %1733 = vmatprep.subr.bf16.mxu0 0
        %1734 = vmatpush1.bf16.msra.mxu0 %v1697
        %1735 = vmatprep.subr.bf16.mxu0 0
        %1736 = vmatpush1.bf16.msra.mxu0 %v1698
        %1737 = vmatprep.subr.bf16.mxu0 0
        %1738 = vmatpush1.bf16.msra.mxu0 %v1699
        %1739 = vmatprep.subr.bf16.mxu0 0
        %1740 = vmatpush1.bf16.msra.mxu0 %v1700
        %1741 = vmatprep.subr.bf16.mxu0 0
        %1742 = vmatpush1.bf16.msra.mxu0 %v1701
        %1743 = vmatprep.subr.bf16.mxu0 0
        %1744 = vmatpush1.bf16.msra.mxu0 %v1702
        %1745 = vmatprep.subr.bf16.mxu0 0
        %1746 = vmatpush1.bf16.msra.mxu0 %v1703
        %1747 = vmatprep.subr.bf16.mxu0 0
        %1748 = vmatpush1.bf16.msra.mxu0 %v1704
        %1749 = vmatprep.subr.bf16.mxu0 0
        %1750 = vmatpush1.bf16.msra.mxu0 %v1705
        %1751 = vmatprep.subr.bf16.mxu0 0
        %1752 = vmatpush1.bf16.msra.mxu0 %v1706
        %1753 = vmatprep.subr.bf16.mxu0 0
        %1754 = vmatpush1.bf16.msra.mxu0 %v1707
        %1755 = vmatprep.subr.bf16.mxu0 0
        %1756 = vmatpush1.bf16.msra.mxu0 %v1708
        %1757 = vmatprep.mubr.bf16.mxu0 %v1589
        %1758 = vmatmul.mubr.bf16.gmra.mrb[0].mxu0 %v1588
        %v1759 = vpop.f32.mrb[0].mxu0
        %v1760 = vadd.f32 %v1627, %v1759
        %v1761 = vpop.f32.mrb[0].mxu0
        %v1762 = vpop.f32.mrb[0].mxu0
        %v1763 = vadd.f32 %v1627, %v1762
        %v1764 = vpop.f32.mrb[0].mxu0
        %1765 = vdwg.mxu0
        %v1766 = vadd.f32 %v1760, %v1430
        %v1767 = vadd.f32 %v1763, %v1431
        %1768 = vadd.xlane.f32.xlu0 %v1766
        %v1769 = vpop.xlane.xlu0 %1768
        %1770 = vadd.xlane.f32.xlu0 %v1767
        %v1771 = vpop.xlane.xlu0 %1770
        %v1772 = vmul.f32 %v1769, %v1395
        %v1773 = vmul.f32 %v1771, %v1395
        %v1774 = vsub.f32 %v1766, %v1772
        %v1775 = vsub.f32 %v1767, %v1773
        %v1776 = vmul.f32 %v1774, %v1774
        %v1777 = vmul.f32 %v1775, %v1775
        %1778 = vadd.xlane.f32.xlu0 %v1776
        %v1779 = vpop.xlane.xlu0 %1778
        %1780 = vadd.xlane.f32.xlu0 %v1777
        %v1781 = vpop.xlane.xlu0 %1780
        %v1782 = vmul.f32 %v1779, %v1395
        %v1783 = vmul.f32 %v1781, %v1395
        %v1784 = vld [vmem:[%s12] sm:$0x1]
        %v1786 = vlaneseq
        %v1787 = vshrl.u32 %v1786, 7
        %v1788 = vsub.s32 0, %v1787
        %v1789 = vrot.slane %v1784, %v1788
        %v1791 = vmul.f32 %v1789, %v1774
        %v1792 = vmul.f32 %v1789, %v1775
        %v1793 = vadd.f32 %v1782, 1e-12
        %v1794 = vadd.f32 %v1783, 1e-12
        %v1795 = vrsqrt.pop %v1793
        %v1796 = vrsqrt.pop %v1794
        %v1797 = vmul.f32 %v1791, %v1795
        %v1798 = vmul.f32 %v1792, %v1796
        %v1799 = vld [vmem:[%s13] sm:$0x1]
        %v1801 = vlaneseq
        %v1802 = vshrl.u32 %v1801, 7
        %v1803 = vsub.s32 0, %v1802
        %v1804 = vrot.slane %v1799, %v1803
        %v1806 = vadd.f32 %v1797, %v1804
        %v1807 = vadd.f32 %v1798, %v1804
        %1808 = vst [vmem:[%s471] sm:$0xff] %v1806
        %1809 = vst [vmem:[%s471 + $0x8] sm:$0xff] %v1807
        %s1810 = sand.u32 %s340, 1
        %s1811 = scalar_lea.sflag [#allocation3], %s1810
        %s1812 = sand.u32 %s340, 1
        %s1813 = smul.addr %s1812, 16
        %s1814 = scalar_lea.vmem [#allocation2], %s1813
        // Predicated region
        $region77: #{encoder_forward.3} parent=75 // pred_check
          %p1815 = pneg %p350
        $region78: #{encoder_forward.3} parent=75 // pred_check_branch
          %1817 = sbr.rel (%p1815) target = $region80
        $region79: #{encoder_forward.3} parent=75 // pred_region
          %s1819 = ssub.s32 256, 256
          %1820 = vsyncadd %s1811, %s1819
          %s1821 = smul.addr %s28, 2
          %s1822 = smul.addr %s1821, 128
          %s1823 = scalar_lea.hbm %s14, %s1822
          %s1824 = sshll.u32 %s1814, 4
          %s1825 = int_to_ptr.vmem [resolvable:$true] %s1824
          %1830 = dma.vmem_to_hbm [thread:$0]  %s1825, 256, %s1823, %s1811, 128, 128, 8
        $region80: #{encoder_forward.3} parent=75 // pred_fallthru
          _
      $region76: #{encoder_forward.3} parent=5 // pred_fallthru
        _
      %p1831 = scmp.le.s32.totalorder 2, %s23
      // Predicated region
      $region81: #{encoder_forward.3} parent=5 // pred_check
        %p1832 = pneg %p1831
      $region82: #{encoder_forward.3} parent=5 // pred_check_branch
        %1834 = sbr.rel (%p1832) target = $region84
      $region83: #{encoder_forward.3} parent=5 // pred_region
        %s1835 = ssub.s32 %s23, 2
        // Predicated region
        $region85: #{encoder_forward.3} parent=83 // pred_check
          %p1836 = pneg %p356
        $region86: #{encoder_forward.3} parent=83 // pred_check_branch
          %1838 = sbr.rel (%p1836) target = $region88
        $region87: #{encoder_forward.3} parent=83 // pred_region
          %s1839 = sand.u32 %s341, 1
          %s1840 = scalar_lea.sflag [#allocation3], %s1839
          %s1841 = sand.u32 %s341, 1
          %s1842 = smul.addr %s1841, 16
          %s1843 = scalar_lea.vmem [#allocation2], %s1842
          %1844 = dma.done %s1840, 256
        $region88: #{encoder_forward.3} parent=83 // pred_fallthru
          _
      $region84: #{encoder_forward.3} parent=5 // pred_fallthru
        _
    $region6: #{encoder_forward.3} parent=1 // loop_footer
      %s27 = sadd.s32 1, %s23
    $region7: #{encoder_forward.3} parent=1 // loop_footer_branch
      %22 = sbr.rel target = $region3
    $region8: #{encoder_forward.3} parent=1 // loop_exit
      _
    %1845 = vsyncpa [#allocation3], 1
    %s1846 = scalar_lea.sflag [#allocation3], 1
    %1847 = vsyncpa %s1846, 1

</llo_original>
